<compile_context>
chip_gen: v7x
topology: tpu7x:2x2x1
jax: 0.10.0
libtpu: 0.0.40
codegen_flags: <defaults>
</compile_context>

<pallas_src>
import jax
import jax.numpy as jnp
from jax import lax
from jax.experimental import pallas as pl
from jax.experimental.pallas import tpu as pltpu

LANE = 128


def _round_up(n, m=LANE):
    return ((n + m - 1) // m) * m


def _pad_axis(a, axis, target):
    pad = target - a.shape[axis]
    if pad == 0:
        return a
    widths = [(0, 0)] * a.ndim
    widths[axis] = (0, pad)
    return jnp.pad(a, widths)


def _pick_row_block(H, W, cout_p):
    """Grid-level row-block height TH.

    Targets matmul M = TH*W >= 512 (good for v6e/v7x 2x256x256 MXUs, still fine
    on v5e's 128x128 MXU), capped so the double-buffered f32 output block stays
    small (VMEM budget, matters most on v7x's 64 MiB).
    """
    divs = [t for t in range(1, H + 1) if H % t == 0]
    cand = None
    for t in divs:
        if t * W >= 512:
            cand = t
            break
    if cand is None:
        cand = divs[-1]
    while cand > 1 and cand * W * cout_p * 4 > (4 << 20):
        cand = max(t for t in divs if t < cand)
    return cand


def _vmem_limit_bytes(TH, W, cin_p, p, cout_p):
    """Derive the scoped-VMEM limit from actual block + temp byte counts."""
    blocks = (TH * W * cin_p * 2          # x block (bf16)
              + 2 * W * cin_p * 2         # two 1-row halo blocks (bf16)
              + TH * W * cout_p * 4)      # out block (f32)
    weights = (cin_p * p + 3 * 3 * p * p + p * cout_p) * 2 + (2 * p + cout_p) * 4
    temps = 6 * (TH + 2) * W * p * 4 + 4 * TH * W * cout_p * 4   # generous
    want = 2 * (blocks + weights) + temps + (8 << 20)
    cap = 100 << 20                       # safe ceiling on v5e/v6e (128 MiB phys)
    try:
        cap = int(pltpu.get_tpu_info().vmem_capacity_bytes * 0.85)   # v7x: 64 MiB
    except Exception:
        pass
    return int(max(32 << 20, min(want, cap)))


def _bottleneck_kernel(x_ref, xt_ref, xb_ref, w1_ref, w2_ref, w3_ref,
                       b1_ref, b2_ref, b3_ref, out_ref):
    # x_ref  : (1, TH, W, Cin)  bf16  row block of one batch element (NHWC)
    # xt_ref : (1, 1,  W, Cin)  bf16  row above the block (clamped at r == 0)
    # xb_ref : (1, 1,  W, Cin)  bf16  row below the block (clamped at r == R-1)
    # w1_ref : (Cin, P)         bf16  1x1 conv, bn1 scale folded in
    # w2_ref : (3, 3*P, P)      bf16  3x3 conv, rows ordered (kx, cin), bn2 folded
    # w3_ref : (P, Cout)        bf16  1x1 conv, bn3 scale folded in
    # b*_ref : (1, C)           f32   folded BN biases
    # out_ref: (1, TH, W, Cout) f32
    _, TH, W, Cin = x_ref.shape
    P = w1_ref.shape[1]
    Cout = w3_ref.shape[1]
    r = pl.program_id(1)
    R = pl.num_programs(1)

    # ---- conv1 (1x1) + bn1 + relu on TH + 2 rows -----------------------------
    # The two halo rows are recomputed per block; halo rows falling outside the
    # image (grid edges) are zeroed, matching conv2's zero padding of conv1's
    # output feature map.
    x_c = x_ref[0]                                            # (TH, W, Cin) bf16
    x_all = jnp.concatenate([xt_ref[0], x_c, xb_ref[0]], axis=0)
    h1 = jnp.dot(x_all.reshape((TH + 2) * W, Cin), w1_ref[...],
                 preferred_element_type=jnp.float32)
    h1 = jnp.maximum(h1 + b1_ref[...], 0.0).reshape(TH + 2, W, P)   # f32 epilogue
    h1_top = jnp.where(r > 0, h1[0:1], 0.0)
    h1_bot = jnp.where(r < R - 1, h1[TH + 1:TH + 2], 0.0)
    h1 = jnp.concatenate([h1_top, h1[1:TH + 1], h1_bot], axis=0)    # (TH+2, W, P)

    # ---- conv2 (3x3) taps: in-register column shifts (offset-0, lane-dense) --
    # Roll-equivalent shifts built from a zero column + value slices keep the W
    # axis 8-aligned everywhere (no W+2 scratch, no masked sublane stores); a
    # single f32 -> bf16 cast covers all taps.
    zcol = jnp.zeros((TH + 2, 1, P), jnp.float32)
    left = jnp.concatenate([zcol, h1[:, :W - 1, :]], axis=1)        # input col w-1
    right = jnp.concatenate([h1[:, 1:, :], zcol], axis=1)           # input col w+1
    taps_all = jnp.concatenate([left, h1, right], axis=-1).astype(jnp.bfloat16)
    # (TH+2, W, 3P) bf16; lane index = kx*P + cin, matching w2_ref's row order.

    # ---- conv2: 3 fat-K matmuls (one per ky) + bn2 + relu --------------------
    acc = jnp.zeros((TH * W, P), jnp.float32)
    for ky in range(3):                                             # static unroll
        taps = taps_all[ky:ky + TH].reshape(TH * W, 3 * P)
        acc = acc + jnp.dot(taps, w2_ref[ky], preferred_element_type=jnp.float32)
    h2 = jnp.maximum(acc + b2_ref[...], 0.0)                        # f32 epilogue

    # ---- conv3 (1x1) + bn3 + identity residual + relu ------------------------
    h3 = jnp.dot(h2.astype(jnp.bfloat16), w3_ref[...],
                 preferred_element_type=jnp.float32)
    res = x_c.reshape(TH * W, Cin).astype(jnp.float32)     # Cin == Cout (padded)
    out = jnp.maximum(h3 + b3_ref[...] + res, 0.0)
    out_ref[...] = out.reshape(1, TH, W, Cout).astype(out_ref.dtype)


def bottleneck_forward(x_nchw, params):
    """Pallas forward. x_nchw: (N, Cin, H, W) float32; Cin must equal 4*planes."""
    (w1, w2, w3, s1, b1, s2, b2, s3, b3) = params
    N, Cin, H, W = x_nchw.shape
    planes = w1.shape[1]
    Cout = w3.shape[1]
    assert Cin == Cout, "identity residual requires inplanes == planes * 4"
    assert W >= 2

    # fold BN scales into the conv weights (inference mode), once at trace time
    w1f = w1 * s1.reshape(1, -1)                      # (Cin, planes)
    w2f = w2 * s2.reshape(1, 1, 1, -1)                # (3, 3, planes, planes) HWIO
    w3f = w3 * s3.reshape(1, -1)                      # (planes, Cout)

    # pad channel dims to 128-lane multiples (padded channels stay exactly 0)
    Cin_p, P, Cout_p = _round_up(Cin), _round_up(planes), _round_up(Cout)
    w1p = _pad_axis(_pad_axis(w1f, 0, Cin_p), 1, P).astype(jnp.bfloat16)
    w2p = _pad_axis(_pad_axis(w2f, 2, P), 3, P)
    w2p = w2p.reshape(3, 3 * P, P).astype(jnp.bfloat16)   # row index = kx*P + cin
    w3p = _pad_axis(_pad_axis(w3f, 0, P), 1, Cout_p).astype(jnp.bfloat16)
    b1p = _pad_axis(b1.reshape(1, -1), 1, P).astype(jnp.float32)
    b2p = _pad_axis(b2.reshape(1, -1), 1, P).astype(jnp.float32)
    b3p = _pad_axis(b3.reshape(1, -1), 1, Cout_p).astype(jnp.float32)

    # bf16 NHWC activations in HBM (halves input-side DMA traffic); all matmul
    # accumulation and elementwise epilogues stay f32 in-kernel.
    x = jnp.transpose(x_nchw, (0, 2, 3, 1))
    x = _pad_axis(x, 3, Cin_p).astype(jnp.bfloat16)

    TH = _pick_row_block(H, W, Cout_p)
    R = H // TH

    def fixed(arr):
        nd = arr.ndim
        return pl.BlockSpec(arr.shape, lambda n, r, _nd=nd: (0,) * _nd)

    out_nhwc = pl.pallas_call(
        _bottleneck_kernel,
        out_shape=jax.ShapeDtypeStruct((N, H, W, Cout_p), jnp.float32),
        grid_spec=pltpu.PrefetchScalarGridSpec(
            num_scalar_prefetch=0,
            grid=(N, R),
            in_specs=[
                pl.BlockSpec((1, TH, W, Cin_p), lambda n, r: (n, r, 0, 0)),
                # one-row top / bottom halos; index clamped in-bounds here and
                # zeroed in-kernel at the image edges
                pl.BlockSpec((1, 1, W, Cin_p),
                             lambda n, r: (n, jnp.maximum(r * TH - 1, 0), 0, 0)),
                pl.BlockSpec((1, 1, W, Cin_p),
                             lambda n, r: (n, jnp.minimum(r * TH + TH, H - 1), 0, 0)),
                fixed(w1p), fixed(w2p), fixed(w3p),
                fixed(b1p), fixed(b2p), fixed(b3p),
            ],
            out_specs=pl.BlockSpec((1, TH, W, Cout_p), lambda n, r: (n, r, 0, 0)),
        ),
        compiler_params=pltpu.CompilerParams(
            # batch and row blocks are fully independent (no cross-step state)
            dimension_semantics=("parallel", "parallel"),
            vmem_limit_bytes=_vmem_limit_bytes(TH, W, Cin_p, P, Cout_p)),
    )(x, x, x, w1p, w2p, w3p, b1p, b2p, b3p)

    out = out_nhwc[..., :Cout]                         # drop padded channels
    return jnp.transpose(out, (0, 3, 1, 2))            # back to NCHW


def bottleneck_ref(x_nchw, params):
    """Pure-JAX f32 reference (same math as the PyTorch module, inference BN)."""
    (w1, w2, w3, s1, b1, s2, b2, s3, b3) = params
    x = jnp.transpose(x_nchw, (0, 2, 3, 1)).astype(jnp.float32)
    dn = ('NHWC', 'HWIO', 'NHWC')

    def bn(h, s, b):
        return h * s.reshape(1, 1, 1, -1) + b.reshape(1, 1, 1, -1)

    h = lax.conv_general_dilated(x, w1.reshape(1, 1, *w1.shape), (1, 1), 'VALID',
                                 dimension_numbers=dn)
    h = jax.nn.relu(bn(h, s1, b1))
    h = lax.conv_general_dilated(h, w2, (1, 1), 'SAME', dimension_numbers=dn)
    h = jax.nn.relu(bn(h, s2, b2))
    h = lax.conv_general_dilated(h, w3.reshape(1, 1, *w3.shape), (1, 1), 'VALID',
                                 dimension_numbers=dn)
    h = bn(h, s3, b3)
    out = jax.nn.relu(h + x)
    return jnp.transpose(out, (0, 3, 1, 2))


if __name__ == "__main__":
    # Small shapes consistent with the module: inplanes = planes * expansion(4)
    N, inplanes, H, W = 2, 16, 16, 16
    planes = 4
    Cout = planes * 4  # == inplanes, so the identity residual add is valid

    key = jax.random.PRNGKey(0)
    keys = jax.random.split(key, 16)

    def bn_params(kw, kb, km, kv, C, eps=1e-5):
        gamma = 1.0 + 0.1 * jax.random.normal(kw, (C,), jnp.float32)
        beta = 0.1 * jax.random.normal(kb, (C,), jnp.float32)
        mean = 0.1 * jax.random.normal(km, (C,), jnp.float32)
        var = 0.9 + 0.2 * jax.random.uniform(kv, (C,), jnp.float32)
        scale = gamma / jnp.sqrt(var + eps)
        bias = beta - mean * scale
        return scale.reshape(1, C), bias.reshape(1, C)

    # Conv weights (PyTorch OIHW re-laid-out to matmul-friendly / HWIO forms).
    w1 = 0.2 * jax.random.normal(keys[0], (inplanes, planes), jnp.float32)      # 1x1
    w2 = 0.2 * jax.random.normal(keys[1], (3, 3, planes, planes), jnp.float32)  # 3x3 HWIO
    w3 = 0.2 * jax.random.normal(keys[2], (planes, Cout), jnp.float32)          # 1x1
    s1, b1 = bn_params(keys[3], keys[4], keys[5], keys[6], planes)
    s2, b2 = bn_params(keys[7], keys[8], keys[9], keys[10], planes)
    s3, b3 = bn_params(keys[11], keys[12], keys[13], keys[14], Cout)
    params = (w1, w2, w3, s1, b1, s2, b2, s3, b3)

    x = jax.random.normal(keys[15], (N, inplanes, H, W), jnp.float32)  # NCHW input

    fwd = jax.jit(bottleneck_forward)
    out = jax.block_until_ready(fwd(x, params))
    ref = bottleneck_ref(x, params)
    max_err = float(jnp.max(jnp.abs(out - ref)))
    # kernel uses bf16 matmul operands / bf16 HBM activations (f32 accumulation
    # and epilogues) vs. an all-f32 reference
    assert jnp.allclose(out, ref, atol=5e-2, rtol=5e-2), f"max_err={max_err}"

    print("KERNEL_OK")
</pallas_src>

<mosaic_0001>
module attributes {stable_mosaic.version = 11 : i64} {
  func.func @_bottleneck_kernel(%arg0: i32, %arg1: i32, %arg2: memref<1x16x16x128xbf16, #tpu.memory_space<vmem>>, %arg3: memref<1x1x16x128xbf16, #tpu.memory_space<vmem>>, %arg4: memref<1x1x16x128xbf16, #tpu.memory_space<vmem>>, %arg5: memref<128x128xbf16, #tpu.memory_space<vmem>>, %arg6: memref<3x384x128xbf16, #tpu.memory_space<vmem>>, %arg7: memref<128x128xbf16, #tpu.memory_space<vmem>>, %arg8: memref<1x128xf32, #tpu.memory_space<vmem>>, %arg9: memref<1x128xf32, #tpu.memory_space<vmem>>, %arg10: memref<1x128xf32, #tpu.memory_space<vmem>>, %arg11: memref<1x16x16x128xf32, #tpu.memory_space<vmem>>) attributes {dimension_semantics = [#tpu.dimension_semantics<parallel>, #tpu.dimension_semantics<parallel>], iteration_bounds = array<i64: 2, 1>, scalar_prefetch = 0 : i64, scratch_operands = 0 : i64, tpu.core_type = #tpu.core_type<tc>, window_params = [{transform_indices = @transform_0, window_bounds = array<i64: 1, 16, 16, 128>}, {transform_indices = @transform_1, window_bounds = array<i64: 1, 1, 16, 128>}, {transform_indices = @transform_2, window_bounds = array<i64: 1, 1, 16, 128>}, {pipeline_mode = #tpu.pipeline_mode<synchronous>, transform_indices = @transform_3, window_bounds = array<i64: 128, 128>}, {pipeline_mode = #tpu.pipeline_mode<synchronous>, transform_indices = @transform_4, window_bounds = array<i64: 3, 384, 128>}, {pipeline_mode = #tpu.pipeline_mode<synchronous>, transform_indices = @transform_5, window_bounds = array<i64: 128, 128>}, {pipeline_mode = #tpu.pipeline_mode<synchronous>, transform_indices = @transform_6, window_bounds = array<i64: 1, 128>}, {pipeline_mode = #tpu.pipeline_mode<synchronous>, transform_indices = @transform_7, window_bounds = array<i64: 1, 128>}, {pipeline_mode = #tpu.pipeline_mode<synchronous>, transform_indices = @transform_8, window_bounds = array<i64: 1, 128>}, {transform_indices = @transform_9, window_bounds = array<i64: 1, 16, 16, 128>}]} {
    %c0 = arith.constant 0 : index
    %c0_0 = arith.constant 0 : index
    %c0_1 = arith.constant 0 : index
    %c0_2 = arith.constant 0 : index
    %0 = vector.load %arg2[%c0, %c0_0, %c0_1, %c0_2] : memref<1x16x16x128xbf16, #tpu.memory_space<vmem>>, vector<1x16x16x128xbf16>
    %1 = vector.shape_cast %0 : vector<1x16x16x128xbf16> to vector<16x16x128xbf16>
    %c0_3 = arith.constant 0 : index
    %c0_4 = arith.constant 0 : index
    %c0_5 = arith.constant 0 : index
    %c0_6 = arith.constant 0 : index
    %2 = vector.load %arg3[%c0_3, %c0_4, %c0_5, %c0_6] : memref<1x1x16x128xbf16, #tpu.memory_space<vmem>>, vector<1x1x16x128xbf16>
    %3 = vector.shape_cast %2 : vector<1x1x16x128xbf16> to vector<1x16x128xbf16>
    %c0_7 = arith.constant 0 : index
    %c0_8 = arith.constant 0 : index
    %c0_9 = arith.constant 0 : index
    %c0_10 = arith.constant 0 : index
    %4 = vector.load %arg4[%c0_7, %c0_8, %c0_9, %c0_10] : memref<1x1x16x128xbf16, #tpu.memory_space<vmem>>, vector<1x1x16x128xbf16>
    %5 = vector.shape_cast %4 : vector<1x1x16x128xbf16> to vector<1x16x128xbf16>
    %6 = tpu.concatenate %3, %1, %5 in 0 : vector<1x16x128xbf16>, vector<16x16x128xbf16>, vector<1x16x128xbf16> -> vector<18x16x128xbf16>
    %7 = vector.shape_cast %6 : vector<18x16x128xbf16> to vector<288x128xbf16>
    %c0_11 = arith.constant 0 : index
    %c0_12 = arith.constant 0 : index
    %8 = vector.load %arg5[%c0_11, %c0_12] : memref<128x128xbf16, #tpu.memory_space<vmem>>, vector<128x128xbf16>
    %cst = arith.constant dense<0.000000e+00> : vector<288x128xf32>
    %9 = tpu.matmul %7, %8, %cst {dimension_numbers = #tpu.dot_dimension_numbers<[1], [0], [0], [1], [0, 0, 1, 1], [], []>} : vector<288x128xbf16>, vector<128x128xbf16>, vector<288x128xf32> -> vector<288x128xf32>
    %c0_13 = arith.constant 0 : index
    %c0_14 = arith.constant 0 : index
    %10 = vector.load %arg8[%c0_13, %c0_14] : memref<1x128xf32, #tpu.memory_space<vmem>>, vector<1x128xf32>
    %11 = vector.broadcast %10 : vector<1x128xf32> to vector<288x128xf32>
    %12 = arith.addf %9, %11 : vector<288x128xf32>
    %cst_15 = arith.constant 0.000000e+00 : f32
    %13 = vector.broadcast %cst_15 : f32 to vector<288x128xf32>
    %14 = arith.maximumf %12, %13 : vector<288x128xf32>
    %15 = vector.shape_cast %14 : vector<288x128xf32> to vector<18x16x128xf32>
    %c0_i32 = arith.constant 0 : i32
    %16 = arith.cmpi sgt, %arg1, %c0_i32 : i32
    %17 = vector.extract_strided_slice %15 {offsets = [0, 0, 0], sizes = [1, 16, 128], strides = [1, 1, 1]} : vector<18x16x128xf32> to vector<1x16x128xf32>
    %cst_16 = arith.constant 0.000000e+00 : f32
    %18 = vector.broadcast %cst_16 : f32 to vector<1x16x128xf32>
    %19 = arith.select %16, %17, %18 : vector<1x16x128xf32>
    %c0_i32_17 = arith.constant 0 : i32
    %20 = arith.cmpi slt, %arg1, %c0_i32_17 : i32
    %21 = vector.extract_strided_slice %15 {offsets = [17, 0, 0], sizes = [1, 16, 128], strides = [1, 1, 1]} : vector<18x16x128xf32> to vector<1x16x128xf32>
    %cst_18 = arith.constant 0.000000e+00 : f32
    %22 = vector.broadcast %cst_18 : f32 to vector<1x16x128xf32>
    %23 = arith.select %20, %21, %22 : vector<1x16x128xf32>
    %24 = vector.extract_strided_slice %15 {offsets = [1, 0, 0], sizes = [16, 16, 128], strides = [1, 1, 1]} : vector<18x16x128xf32> to vector<16x16x128xf32>
    %25 = tpu.concatenate %19, %24, %23 in 0 : vector<1x16x128xf32>, vector<16x16x128xf32>, vector<1x16x128xf32> -> vector<18x16x128xf32>
    %cst_19 = arith.constant 0.000000e+00 : f32
    %26 = vector.broadcast %cst_19 : f32 to vector<18x1x128xf32>
    %27 = vector.extract_strided_slice %25 {offsets = [0, 0, 0], sizes = [18, 15, 128], strides = [1, 1, 1]} : vector<18x16x128xf32> to vector<18x15x128xf32>
    %28 = tpu.concatenate %26, %27 in 1 : vector<18x1x128xf32>, vector<18x15x128xf32> -> vector<18x16x128xf32>
    %29 = vector.extract_strided_slice %25 {offsets = [0, 1, 0], sizes = [18, 15, 128], strides = [1, 1, 1]} : vector<18x16x128xf32> to vector<18x15x128xf32>
    %30 = tpu.concatenate %29, %26 in 1 : vector<18x15x128xf32>, vector<18x1x128xf32> -> vector<18x16x128xf32>
    %31 = tpu.concatenate %28, %25, %30 in 2 : vector<18x16x128xf32>, vector<18x16x128xf32>, vector<18x16x128xf32> -> vector<18x16x384xf32>
    %32 = arith.truncf %31 : vector<18x16x384xf32> to vector<18x16x384xbf16>
    %cst_20 = arith.constant 0.000000e+00 : f32
    %33 = vector.broadcast %cst_20 : f32 to vector<256x128xf32>
    %34 = vector.extract_strided_slice %32 {offsets = [0, 0, 0], sizes = [16, 16, 384], strides = [1, 1, 1]} : vector<18x16x384xbf16> to vector<16x16x384xbf16>
    %35 = vector.shape_cast %34 : vector<16x16x384xbf16> to vector<256x384xbf16>
    %c0_21 = arith.constant 0 : index
    %c0_22 = arith.constant 0 : index
    %c0_23 = arith.constant 0 : index
    %36 = vector.load %arg6[%c0_21, %c0_22, %c0_23] : memref<3x384x128xbf16, #tpu.memory_space<vmem>>, vector<1x384x128xbf16>
    %37 = vector.shape_cast %36 : vector<1x384x128xbf16> to vector<384x128xbf16>
    %cst_24 = arith.constant dense<0.000000e+00> : vector<256x128xf32>
    %38 = tpu.matmul %35, %37, %cst_24 {dimension_numbers = #tpu.dot_dimension_numbers<[1], [0], [0], [1], [0, 0, 1, 1], [], []>} : vector<256x384xbf16>, vector<384x128xbf16>, vector<256x128xf32> -> vector<256x128xf32>
    %39 = arith.addf %33, %38 : vector<256x128xf32>
    %40 = vector.extract_strided_slice %32 {offsets = [1, 0, 0], sizes = [16, 16, 384], strides = [1, 1, 1]} : vector<18x16x384xbf16> to vector<16x16x384xbf16>
    %41 = vector.shape_cast %40 : vector<16x16x384xbf16> to vector<256x384xbf16>
    %c1 = arith.constant 1 : index
    %c0_25 = arith.constant 0 : index
    %c0_26 = arith.constant 0 : index
    %42 = vector.load %arg6[%c1, %c0_25, %c0_26] : memref<3x384x128xbf16, #tpu.memory_space<vmem>>, vector<1x384x128xbf16>
    %43 = vector.shape_cast %42 : vector<1x384x128xbf16> to vector<384x128xbf16>
    %cst_27 = arith.constant dense<0.000000e+00> : vector<256x128xf32>
    %44 = tpu.matmul %41, %43, %cst_27 {dimension_numbers = #tpu.dot_dimension_numbers<[1], [0], [0], [1], [0, 0, 1, 1], [], []>} : vector<256x384xbf16>, vector<384x128xbf16>, vector<256x128xf32> -> vector<256x128xf32>
    %45 = arith.addf %39, %44 : vector<256x128xf32>
    %46 = vector.extract_strided_slice %32 {offsets = [2, 0, 0], sizes = [16, 16, 384], strides = [1, 1, 1]} : vector<18x16x384xbf16> to vector<16x16x384xbf16>
    %47 = vector.shape_cast %46 : vector<16x16x384xbf16> to vector<256x384xbf16>
    %c2 = arith.constant 2 : index
    %c0_28 = arith.constant 0 : index
    %c0_29 = arith.constant 0 : index
    %48 = vector.load %arg6[%c2, %c0_28, %c0_29] : memref<3x384x128xbf16, #tpu.memory_space<vmem>>, vector<1x384x128xbf16>
    %49 = vector.shape_cast %48 : vector<1x384x128xbf16> to vector<384x128xbf16>
    %cst_30 = arith.constant dense<0.000000e+00> : vector<256x128xf32>
    %50 = tpu.matmul %47, %49, %cst_30 {dimension_numbers = #tpu.dot_dimension_numbers<[1], [0], [0], [1], [0, 0, 1, 1], [], []>} : vector<256x384xbf16>, vector<384x128xbf16>, vector<256x128xf32> -> vector<256x128xf32>
    %51 = arith.addf %45, %50 : vector<256x128xf32>
    %c0_31 = arith.constant 0 : index
    %c0_32 = arith.constant 0 : index
    %52 = vector.load %arg9[%c0_31, %c0_32] : memref<1x128xf32, #tpu.memory_space<vmem>>, vector<1x128xf32>
    %53 = vector.broadcast %52 : vector<1x128xf32> to vector<256x128xf32>
    %54 = arith.addf %51, %53 : vector<256x128xf32>
    %cst_33 = arith.constant 0.000000e+00 : f32
    %55 = vector.broadcast %cst_33 : f32 to vector<256x128xf32>
    %56 = arith.maximumf %54, %55 : vector<256x128xf32>
    %57 = arith.truncf %56 : vector<256x128xf32> to vector<256x128xbf16>
    %c0_34 = arith.constant 0 : index
    %c0_35 = arith.constant 0 : index
    %58 = vector.load %arg7[%c0_34, %c0_35] : memref<128x128xbf16, #tpu.memory_space<vmem>>, vector<128x128xbf16>
    %cst_36 = arith.constant dense<0.000000e+00> : vector<256x128xf32>
    %59 = tpu.matmul %57, %58, %cst_36 {dimension_numbers = #tpu.dot_dimension_numbers<[1], [0], [0], [1], [0, 0, 1, 1], [], []>} : vector<256x128xbf16>, vector<128x128xbf16>, vector<256x128xf32> -> vector<256x128xf32>
    %60 = vector.shape_cast %1 : vector<16x16x128xbf16> to vector<256x128xbf16>
    %61 = arith.extf %60 : vector<256x128xbf16> to vector<256x128xf32>
    %c0_37 = arith.constant 0 : index
    %c0_38 = arith.constant 0 : index
    %62 = vector.load %arg10[%c0_37, %c0_38] : memref<1x128xf32, #tpu.memory_space<vmem>>, vector<1x128xf32>
    %63 = vector.broadcast %62 : vector<1x128xf32> to vector<256x128xf32>
    %64 = arith.addf %59, %63 : vector<256x128xf32>
    %65 = arith.addf %64, %61 : vector<256x128xf32>
    %cst_39 = arith.constant 0.000000e+00 : f32
    %66 = vector.broadcast %cst_39 : f32 to vector<256x128xf32>
    %67 = arith.maximumf %65, %66 : vector<256x128xf32>
    %68 = vector.shape_cast %67 : vector<256x128xf32> to vector<1x16x16x128xf32>
    %c0_40 = arith.constant 0 : index
    %c0_41 = arith.constant 0 : index
    %c0_42 = arith.constant 0 : index
    %c0_43 = arith.constant 0 : index
    %69 = vector.load %arg11[%c0_40, %c0_41, %c0_42, %c0_43] : memref<1x16x16x128xf32, #tpu.memory_space<vmem>>, vector<1x16x16x128xf32>
    tpu.vector_store %arg11[%c0_40, %c0_41, %c0_42, %c0_43], %68 {strides = array<i32>} : memref<1x16x16x128xf32, #tpu.memory_space<vmem>>, vector<1x16x16x128xf32>,
    return
  }
  func.func @transform_0(%arg0: i32, %arg1: i32) -> (i32, i32, i32, i32) {
    %c0_i32 = arith.constant 0 : i32
    %c0_i32_0 = arith.constant 0 : i32
    %c0_i32_1 = arith.constant 0 : i32
    return %arg0, %arg1, %c0_i32, %c0_i32_0 : i32, i32, i32, i32
  }
  func.func @transform_1(%arg0: i32, %arg1: i32) -> (i32, i32, i32, i32) {
    %c16_i32 = arith.constant 16 : i32
    %0 = arith.muli %arg1, %c16_i32 : i32
    %c1_i32 = arith.constant 1 : i32
    %1 = arith.subi %0, %c1_i32 : i32
    %c0_i32 = arith.constant 0 : i32
    %2 = arith.maxsi %1, %c0_i32 : i32
    %c0_i32_0 = arith.constant 0 : i32
    %c0_i32_1 = arith.constant 0 : i32
    %c0_i32_2 = arith.constant 0 : i32
    return %arg0, %2, %c0_i32_0, %c0_i32_1 : i32, i32, i32, i32
  }
  func.func @transform_2(%arg0: i32, %arg1: i32) -> (i32, i32, i32, i32) {
    %c16_i32 = arith.constant 16 : i32
    %0 = arith.muli %arg1, %c16_i32 : i32
    %c16_i32_0 = arith.constant 16 : i32
    %1 = arith.addi %0, %c16_i32_0 : i32
    %c15_i32 = arith.constant 15 : i32
    %2 = arith.minsi %1, %c15_i32 : i32
    %c0_i32 = arith.constant 0 : i32
    %c0_i32_1 = arith.constant 0 : i32
    %c0_i32_2 = arith.constant 0 : i32
    return %arg0, %2, %c0_i32, %c0_i32_1 : i32, i32, i32, i32
  }
  func.func @transform_3(%arg0: i32, %arg1: i32) -> (i32, i32) {
    %c0_i32 = arith.constant 0 : i32
    %c0_i32_0 = arith.constant 0 : i32
    %c0_i32_1 = arith.constant 0 : i32
    return %c0_i32, %c0_i32_0 : i32, i32
  }
  func.func @transform_4(%arg0: i32, %arg1: i32) -> (i32, i32, i32) {
    %c0_i32 = arith.constant 0 : i32
    %c0_i32_0 = arith.constant 0 : i32
    %c0_i32_1 = arith.constant 0 : i32
    %c0_i32_2 = arith.constant 0 : i32
    return %c0_i32, %c0_i32_0, %c0_i32_1 : i32, i32, i32
  }
  func.func @transform_5(%arg0: i32, %arg1: i32) -> (i32, i32) {
    %c0_i32 = arith.constant 0 : i32
    %c0_i32_0 = arith.constant 0 : i32
    %c0_i32_1 = arith.constant 0 : i32
    return %c0_i32, %c0_i32_0 : i32, i32
  }
  func.func @transform_6(%arg0: i32, %arg1: i32) -> (i32, i32) {
    %c0_i32 = arith.constant 0 : i32
    %c0_i32_0 = arith.constant 0 : i32
    %c0_i32_1 = arith.constant 0 : i32
    return %c0_i32, %c0_i32_0 : i32, i32
  }
  func.func @transform_7(%arg0: i32, %arg1: i32) -> (i32, i32) {
    %c0_i32 = arith.constant 0 : i32
    %c0_i32_0 = arith.constant 0 : i32
    %c0_i32_1 = arith.constant 0 : i32
    return %c0_i32, %c0_i32_0 : i32, i32
  }
  func.func @transform_8(%arg0: i32, %arg1: i32) -> (i32, i32) {
    %c0_i32 = arith.constant 0 : i32
    %c0_i32_0 = arith.constant 0 : i32
    %c0_i32_1 = arith.constant 0 : i32
    return %c0_i32, %c0_i32_0 : i32, i32
  }
  func.func @transform_9(%arg0: i32, %arg1: i32) -> (i32, i32, i32, i32) {
    %c0_i32 = arith.constant 0 : i32
    %c0_i32_0 = arith.constant 0 : i32
    %c0_i32_1 = arith.constant 0 : i32
    return %arg0, %arg1, %c0_i32, %c0_i32_0 : i32, i32, i32, i32
  }
}

</mosaic_0001>

<llo_original>
// kernel: bottleneck_forward.1
$region0: #{bottleneck_forward.1}
  #allocation0 [shape = 'u32[]', space=smem, size = 0x4, offset = 0x4, fixed_abs, tag = 'smem constant byte address 0x4 - core index']
  #allocation1 [shape = 'u32[144,128]{1,0:T(1,128)}', space=vmem, size = 0x12000, scoped, tag = 'internal scratch']
  %s0 = inlined_call_operand.vmem [shape: bf16[2,16,16,128], index: 0, kind: input, shape index: {}, may-alias: {0,1,2}]
  %s1 = inlined_call_operand.vmem [shape: bf16[2,16,16,128], index: 1, kind: input, shape index: {}, may-alias: {0,1,2}]
  %s2 = inlined_call_operand.vmem [shape: bf16[2,16,16,128], index: 2, kind: input, shape index: {}, may-alias: {0,1,2}]
  %s3 = inlined_call_operand.vmem [shape: bf16[128,128], index: 3, kind: input, shape index: {}]
  %s4 = inlined_call_operand.vmem [shape: bf16[3,384,128], index: 4, kind: input, shape index: {}]
  %s5 = inlined_call_operand.vmem [shape: bf16[128,128], index: 5, kind: input, shape index: {}]
  %s6 = inlined_call_operand.vmem [shape: f32[1,128], index: 6, kind: input, shape index: {}]
  %s7 = inlined_call_operand.vmem [shape: f32[1,128], index: 7, kind: input, shape index: {}]
  %s8 = inlined_call_operand.vmem [shape: f32[1,128], index: 8, kind: input, shape index: {}]
  %s9 = inlined_call_operand.vmem [shape: f32[2,16,16,128], index: 9, kind: output, shape index: {}]
  %s10 = sld [smem:[#allocation0]]
  $region69: #{bottleneck_forward.1} parent=0
    _
  %s12 = ssub.s32 1, %s10
  %s13 = scalar_select 0, %s12, %s10
  loop: start=0, step=1, limit=4
  $region2: #{bottleneck_forward.1} parent=0 // loop_pre_header
    _
  $region3: #{bottleneck_forward.1} parent=0 // loop_header
    %s15 = sphi 0, %s19
    %p16 = scmp.ge.s32.totalorder %s15, 4
    %s22 = sphi 0, %s34
    %s23 = sphi 0, %s30
    %s24 = sphi 0, %s22
    %s25 = sphi 0, %s23
    %s26 = sphi 0, %s24
    %s27 = sphi 0, %s25
    %s39 = sphi 0, %s41
    %s42 = sphi 0, %s39
    %s43 = sphi 0, %s42
    %s59 = sphi 0, %s43
    %s75 = sphi 0, %s77
    %s78 = sphi 0, %s75
    %s79 = sphi 0, %s78
    %s95 = sphi 0, %s79
    %s111 = sphi 0, %s113
    %s114 = sphi 0, %s111
    %s115 = sphi 0, %s114
    %s131 = sphi 0, %s115
    %s135 = sphi 0, %s135
    %s137 = sphi 0, %s135
    %s138 = sphi 0, %s137
    %s152 = sphi 0, %s138
    %s156 = sphi 0, %s156
    %s158 = sphi 0, %s156
    %s159 = sphi 0, %s158
    %s173 = sphi 0, %s159
    %s177 = sphi 0, %s177
    %s179 = sphi 0, %s177
    %s180 = sphi 0, %s179
    %s194 = sphi 0, %s180
    %s198 = sphi 0, %s198
    %s200 = sphi 0, %s198
    %s201 = sphi 0, %s200
    %s215 = sphi 0, %s201
    %s219 = sphi 0, %s219
    %s221 = sphi 0, %s219
    %s222 = sphi 0, %s221
    %s236 = sphi 0, %s222
    %s240 = sphi 0, %s240
    %s242 = sphi 0, %s240
    %s243 = sphi 0, %s242
    %s257 = sphi 0, %s243
    %s265 = sphi 0, %s267
    %s268 = sphi 0, %s265
    %s269 = sphi 0, %s268
    %s285 = sphi 0, %s269
  $region4: #{bottleneck_forward.1} parent=0 // loop_header_branch
    %18 = sbr.rel (%p16) target = $region8
  $region5: #{bottleneck_forward.1} parent=0 // loop_body
    %s20 = ssub.s32 %s15, 1
    %s21 = ssub.s32 %s15, 2
    %s28 = sadd.s32 1, %s23
    %p29 = scmp.ge.s32.totalorder %s28, 1
    %s30 = scalar_select %p29, 0, %s28
    %s31 = sadd.s32 1, %s22
    %s32 = scalar_select %p29, %s31, %s22
    %p33 = scmp.ge.s32.totalorder %s32, 2
    %s34 = scalar_select %p33, 0, %s32
    %s35 = ssub.s32 %s22, %s34
    %s36 = ssub.s32 %s23, %s30
    %s37 = sor.u32 %s35, %s36
    %p38 = scmp.eq.s32.totalorder %s37, 0
    %s40 = sadd.s32 %s39, 1
    %s41 = scalar_select %p38, %s39, %s40
    %p44 = pneg %p38
    %p45 = scmp.eq.s32.totalorder %s15, 1
    %p46 = por %p44, %p45
    %p47 = scmp.ne.s32.totalorder %s39, %s42
    %p48 = scmp.eq.s32.totalorder %s15, 0
    %p49 = por %p47, %p48
    %p50 = scmp.ne.s32.totalorder %s39, %s42
    %p51 = scmp.eq.s32.totalorder %s20, 1
    %p52 = por %p50, %p51
    %p53 = scmp.ne.s32.totalorder %s42, %s43
    %p54 = scmp.eq.s32.totalorder %s20, 0
    %p55 = por %p53, %p54
    %p56 = scmp.ne.s32.totalorder %s42, %s43
    %p57 = scmp.eq.s32.totalorder %s21, 1
    %p58 = por %p56, %p57
    %p60 = scmp.ne.s32.totalorder %s43, %s59
    %p61 = scmp.eq.s32.totalorder %s21, 0
    %p62 = por %p60, %p61
    %s63 = smul.u32 %s23, 16
    %s64 = ssub.s32 %s63, 1
    %p65 = scmp.gt.s32.totalorder %s64, 0
    %s66 = scalar_select %p65, %s64, 0
    %s67 = smul.u32 %s30, 16
    %s68 = ssub.s32 %s67, 1
    %p69 = scmp.gt.s32.totalorder %s68, 0
    %s70 = scalar_select %p69, %s68, 0
    %s71 = ssub.s32 %s22, %s34
    %s72 = ssub.s32 %s66, %s70
    %s73 = sor.u32 %s71, %s72
    %p74 = scmp.eq.s32.totalorder %s73, 0
    %s76 = sadd.s32 %s75, 1
    %s77 = scalar_select %p74, %s75, %s76
    %p80 = pneg %p74
    %p81 = scmp.eq.s32.totalorder %s15, 1
    %p82 = por %p80, %p81
    %p83 = scmp.ne.s32.totalorder %s75, %s78
    %p84 = scmp.eq.s32.totalorder %s15, 0
    %p85 = por %p83, %p84
    %p86 = scmp.ne.s32.totalorder %s75, %s78
    %p87 = scmp.eq.s32.totalorder %s20, 1
    %p88 = por %p86, %p87
    %p89 = scmp.ne.s32.totalorder %s78, %s79
    %p90 = scmp.eq.s32.totalorder %s20, 0
    %p91 = por %p89, %p90
    %p92 = scmp.ne.s32.totalorder %s78, %s79
    %p93 = scmp.eq.s32.totalorder %s21, 1
    %p94 = por %p92, %p93
    %p96 = scmp.ne.s32.totalorder %s79, %s95
    %p97 = scmp.eq.s32.totalorder %s21, 0
    %p98 = por %p96, %p97
    %s99 = smul.u32 %s23, 16
    %s100 = sadd.s32 %s99, 16
    %p101 = scmp.lt.s32.totalorder %s100, 15
    %s102 = scalar_select %p101, %s100, 15
    %s103 = smul.u32 %s30, 16
    %s104 = sadd.s32 %s103, 16
    %p105 = scmp.lt.s32.totalorder %s104, 15
    %s106 = scalar_select %p105, %s104, 15
    %s107 = ssub.s32 %s22, %s34
    %s108 = ssub.s32 %s102, %s106
    %s109 = sor.u32 %s107, %s108
    %p110 = scmp.eq.s32.totalorder %s109, 0
    %s112 = sadd.s32 %s111, 1
    %s113 = scalar_select %p110, %s111, %s112
    %p116 = pneg %p110
    %p117 = scmp.eq.s32.totalorder %s15, 1
    %p118 = por %p116, %p117
    %p119 = scmp.ne.s32.totalorder %s111, %s114
    %p120 = scmp.eq.s32.totalorder %s15, 0
    %p121 = por %p119, %p120
    %p122 = scmp.ne.s32.totalorder %s111, %s114
    %p123 = scmp.eq.s32.totalorder %s20, 1
    %p124 = por %p122, %p123
    %p125 = scmp.ne.s32.totalorder %s114, %s115
    %p126 = scmp.eq.s32.totalorder %s20, 0
    %p127 = por %p125, %p126
    %p128 = scmp.ne.s32.totalorder %s114, %s115
    %p129 = scmp.eq.s32.totalorder %s21, 1
    %p130 = por %p128, %p129
    %p132 = scmp.ne.s32.totalorder %s115, %s131
    %p133 = scmp.eq.s32.totalorder %s21, 0
    %p134 = por %p132, %p133
    %s136 = sadd.s32 %s135, 1
    %p139 = scmp.eq.s32.totalorder %s15, 1
    %p140 = scmp.ne.s32.totalorder %s135, %s137
    %p141 = scmp.eq.s32.totalorder %s15, 0
    %p142 = por %p140, %p141
    %p143 = scmp.ne.s32.totalorder %s135, %s137
    %p144 = scmp.eq.s32.totalorder %s20, 1
    %p145 = por %p143, %p144
    %p146 = scmp.ne.s32.totalorder %s137, %s138
    %p147 = scmp.eq.s32.totalorder %s20, 0
    %p148 = por %p146, %p147
    %p149 = scmp.ne.s32.totalorder %s137, %s138
    %p150 = scmp.eq.s32.totalorder %s21, 1
    %p151 = por %p149, %p150
    %p153 = scmp.ne.s32.totalorder %s138, %s152
    %p154 = scmp.eq.s32.totalorder %s21, 0
    %p155 = por %p153, %p154
    %s157 = sadd.s32 %s156, 1
    %p160 = scmp.eq.s32.totalorder %s15, 1
    %p161 = scmp.ne.s32.totalorder %s156, %s158
    %p162 = scmp.eq.s32.totalorder %s15, 0
    %p163 = por %p161, %p162
    %p164 = scmp.ne.s32.totalorder %s156, %s158
    %p165 = scmp.eq.s32.totalorder %s20, 1
    %p166 = por %p164, %p165
    %p167 = scmp.ne.s32.totalorder %s158, %s159
    %p168 = scmp.eq.s32.totalorder %s20, 0
    %p169 = por %p167, %p168
    %p170 = scmp.ne.s32.totalorder %s158, %s159
    %p171 = scmp.eq.s32.totalorder %s21, 1
    %p172 = por %p170, %p171
    %p174 = scmp.ne.s32.totalorder %s159, %s173
    %p175 = scmp.eq.s32.totalorder %s21, 0
    %p176 = por %p174, %p175
    %s178 = sadd.s32 %s177, 1
    %p181 = scmp.eq.s32.totalorder %s15, 1
    %p182 = scmp.ne.s32.totalorder %s177, %s179
    %p183 = scmp.eq.s32.totalorder %s15, 0
    %p184 = por %p182, %p183
    %p185 = scmp.ne.s32.totalorder %s177, %s179
    %p186 = scmp.eq.s32.totalorder %s20, 1
    %p187 = por %p185, %p186
    %p188 = scmp.ne.s32.totalorder %s179, %s180
    %p189 = scmp.eq.s32.totalorder %s20, 0
    %p190 = por %p188, %p189
    %p191 = scmp.ne.s32.totalorder %s179, %s180
    %p192 = scmp.eq.s32.totalorder %s21, 1
    %p193 = por %p191, %p192
    %p195 = scmp.ne.s32.totalorder %s180, %s194
    %p196 = scmp.eq.s32.totalorder %s21, 0
    %p197 = por %p195, %p196
    %s199 = sadd.s32 %s198, 1
    %p202 = scmp.eq.s32.totalorder %s15, 1
    %p203 = scmp.ne.s32.totalorder %s198, %s200
    %p204 = scmp.eq.s32.totalorder %s15, 0
    %p205 = por %p203, %p204
    %p206 = scmp.ne.s32.totalorder %s198, %s200
    %p207 = scmp.eq.s32.totalorder %s20, 1
    %p208 = por %p206, %p207
    %p209 = scmp.ne.s32.totalorder %s200, %s201
    %p210 = scmp.eq.s32.totalorder %s20, 0
    %p211 = por %p209, %p210
    %p212 = scmp.ne.s32.totalorder %s200, %s201
    %p213 = scmp.eq.s32.totalorder %s21, 1
    %p214 = por %p212, %p213
    %p216 = scmp.ne.s32.totalorder %s201, %s215
    %p217 = scmp.eq.s32.totalorder %s21, 0
    %p218 = por %p216, %p217
    %s220 = sadd.s32 %s219, 1
    %p223 = scmp.eq.s32.totalorder %s15, 1
    %p224 = scmp.ne.s32.totalorder %s219, %s221
    %p225 = scmp.eq.s32.totalorder %s15, 0
    %p226 = por %p224, %p225
    %p227 = scmp.ne.s32.totalorder %s219, %s221
    %p228 = scmp.eq.s32.totalorder %s20, 1
    %p229 = por %p227, %p228
    %p230 = scmp.ne.s32.totalorder %s221, %s222
    %p231 = scmp.eq.s32.totalorder %s20, 0
    %p232 = por %p230, %p231
    %p233 = scmp.ne.s32.totalorder %s221, %s222
    %p234 = scmp.eq.s32.totalorder %s21, 1
    %p235 = por %p233, %p234
    %p237 = scmp.ne.s32.totalorder %s222, %s236
    %p238 = scmp.eq.s32.totalorder %s21, 0
    %p239 = por %p237, %p238
    %s241 = sadd.s32 %s240, 1
    %p244 = scmp.eq.s32.totalorder %s15, 1
    %p245 = scmp.ne.s32.totalorder %s240, %s242
    %p246 = scmp.eq.s32.totalorder %s15, 0
    %p247 = por %p245, %p246
    %p248 = scmp.ne.s32.totalorder %s240, %s242
    %p249 = scmp.eq.s32.totalorder %s20, 1
    %p250 = por %p248, %p249
    %p251 = scmp.ne.s32.totalorder %s242, %s243
    %p252 = scmp.eq.s32.totalorder %s20, 0
    %p253 = por %p251, %p252
    %p254 = scmp.ne.s32.totalorder %s242, %s243
    %p255 = scmp.eq.s32.totalorder %s21, 1
    %p256 = por %p254, %p255
    %p258 = scmp.ne.s32.totalorder %s243, %s257
    %p259 = scmp.eq.s32.totalorder %s21, 0
    %p260 = por %p258, %p259
    %s261 = ssub.s32 %s22, %s34
    %s262 = ssub.s32 %s23, %s30
    %s263 = sor.u32 %s261, %s262
    %p264 = scmp.eq.s32.totalorder %s263, 0
    %s266 = sadd.s32 %s265, 1
    %s267 = scalar_select %p264, %s265, %s266
    %p270 = pneg %p264
    %p271 = scmp.eq.s32.totalorder %s15, 1
    %p272 = por %p270, %p271
    %p273 = scmp.ne.s32.totalorder %s265, %s268
    %p274 = scmp.eq.s32.totalorder %s15, 0
    %p275 = por %p273, %p274
    %p276 = scmp.ne.s32.totalorder %s265, %s268
    %p277 = scmp.eq.s32.totalorder %s20, 1
    %p278 = por %p276, %p277
    %p279 = scmp.ne.s32.totalorder %s268, %s269
    %p280 = scmp.eq.s32.totalorder %s20, 0
    %p281 = por %p279, %p280
    %p282 = scmp.ne.s32.totalorder %s268, %s269
    %p283 = scmp.eq.s32.totalorder %s21, 1
    %p284 = por %p282, %p283
    %p286 = scmp.ne.s32.totalorder %s269, %s285
    %p287 = scmp.eq.s32.totalorder %s21, 0
    %p288 = por %p286, %p287
    %p289 = scmp.le.s32.totalorder 1, %s15
    %p290 = scmp.lt.s32.totalorder %s15, 3
    %p291 = pnand %p289, %p290
    %p292 = pneg %p291
    // Predicated region
    $region9: #{bottleneck_forward.1} parent=5 // pred_check
      _
    $region10: #{bottleneck_forward.1} parent=5 // pred_check_branch
      %294 = sbr.rel (%p291) target = $region12
    $region11: #{bottleneck_forward.1} parent=5 // pred_region
      %s295 = ssub.s32 %s15, 1
      // Predicated region
      $region13: #{bottleneck_forward.1} parent=11 // pred_check
        %p296 = pneg %p148
      $region14: #{bottleneck_forward.1} parent=11 // pred_check_branch
        %298 = sbr.rel (%p296) target = $region16
      $region15: #{bottleneck_forward.1} parent=11 // pred_region
        _
      $region16: #{bottleneck_forward.1} parent=11 // pred_fallthru
        _
      // Predicated region
      $region17: #{bottleneck_forward.1} parent=11 // pred_check
        %p299 = pneg %p169
      $region18: #{bottleneck_forward.1} parent=11 // pred_check_branch
        %301 = sbr.rel (%p299) target = $region20
      $region19: #{bottleneck_forward.1} parent=11 // pred_region
        _
      $region20: #{bottleneck_forward.1} parent=11 // pred_fallthru
        _
      // Predicated region
      $region21: #{bottleneck_forward.1} parent=11 // pred_check
        %p302 = pneg %p190
      $region22: #{bottleneck_forward.1} parent=11 // pred_check_branch
        %304 = sbr.rel (%p302) target = $region24
      $region23: #{bottleneck_forward.1} parent=11 // pred_region
        _
      $region24: #{bottleneck_forward.1} parent=11 // pred_fallthru
        _
      // Predicated region
      $region25: #{bottleneck_forward.1} parent=11 // pred_check
        %p305 = pneg %p211
      $region26: #{bottleneck_forward.1} parent=11 // pred_check_branch
        %307 = sbr.rel (%p305) target = $region28
      $region27: #{bottleneck_forward.1} parent=11 // pred_region
        _
      $region28: #{bottleneck_forward.1} parent=11 // pred_fallthru
        _
      // Predicated region
      $region29: #{bottleneck_forward.1} parent=11 // pred_check
        %p308 = pneg %p232
      $region30: #{bottleneck_forward.1} parent=11 // pred_check_branch
        %310 = sbr.rel (%p308) target = $region32
      $region31: #{bottleneck_forward.1} parent=11 // pred_region
        _
      $region32: #{bottleneck_forward.1} parent=11 // pred_fallthru
        _
      // Predicated region
      $region33: #{bottleneck_forward.1} parent=11 // pred_check
        %p311 = pneg %p253
      $region34: #{bottleneck_forward.1} parent=11 // pred_check_branch
        %313 = sbr.rel (%p311) target = $region36
      $region35: #{bottleneck_forward.1} parent=11 // pred_region
        _
      $region36: #{bottleneck_forward.1} parent=11 // pred_fallthru
        _
    $region12: #{bottleneck_forward.1} parent=5 // pred_fallthru
      _
    %p314 = scmp.lt.s32.totalorder %s15, 2
    // Predicated region
    $region37: #{bottleneck_forward.1} parent=5 // pred_check
      %p315 = pneg %p314
    $region38: #{bottleneck_forward.1} parent=5 // pred_check_branch
      %317 = sbr.rel (%p315) target = $region40
    $region39: #{bottleneck_forward.1} parent=5 // pred_region
      // Predicated region
      $region41: #{bottleneck_forward.1} parent=39 // pred_check
        %p318 = pneg %p49
      $region42: #{bottleneck_forward.1} parent=39 // pred_check_branch
        %320 = sbr.rel (%p318) target = $region44
      $region43: #{bottleneck_forward.1} parent=39 // pred_region
        %s321 = smul.u32 16, %s23
        %p322 = scmp.lt.s32.totalorder %s22, 1
        %s323 = scalar_select %p322, %s22, 1
        %p324 = scmp.lt.s32.totalorder %s321, 15
        %s325 = scalar_select %p324, %s321, 15
        %s326 = smul.addr %s325, 2
        %s327 = smul.addr %s323, 32
        %s328 = sadd.s32 %s326, %s327
        %s329 = smul.addr %s328, 4
        %s330 = scalar_lea.vmem %s0, %s329
        %s331 = smul.u32 16, %s23
      $region44: #{bottleneck_forward.1} parent=39 // pred_fallthru
        _
      // Predicated region
      $region45: #{bottleneck_forward.1} parent=39 // pred_check
        %p332 = pneg %p85
      $region46: #{bottleneck_forward.1} parent=39 // pred_check_branch
        %334 = sbr.rel (%p332) target = $region48
      $region47: #{bottleneck_forward.1} parent=39 // pred_region
        %s335 = smul.u32 %s23, 16
        %s336 = ssub.s32 %s335, 1
        %p337 = scmp.gt.s32.totalorder %s336, 0
        %s338 = scalar_select %p337, %s336, 0
        %p339 = scmp.lt.s32.totalorder %s22, 1
        %s340 = scalar_select %p339, %s22, 1
        %p341 = scmp.lt.s32.totalorder %s338, 15
        %s342 = scalar_select %p341, %s338, 15
        %s343 = smul.addr %s342, 2
        %s344 = smul.addr %s340, 32
        %s345 = sadd.s32 %s343, %s344
        %s346 = smul.addr %s345, 4
        %s347 = scalar_lea.vmem %s1, %s346
        %s348 = smul.u32 %s23, 16
        %s349 = ssub.s32 %s348, 1
        %p350 = scmp.gt.s32.totalorder %s349, 0
        %s351 = scalar_select %p350, %s349, 0
      $region48: #{bottleneck_forward.1} parent=39 // pred_fallthru
        _
      // Predicated region
      $region49: #{bottleneck_forward.1} parent=39 // pred_check
        %p352 = pneg %p121
      $region50: #{bottleneck_forward.1} parent=39 // pred_check_branch
        %354 = sbr.rel (%p352) target = $region52
      $region51: #{bottleneck_forward.1} parent=39 // pred_region
        %s355 = smul.u32 %s23, 16
        %s356 = sadd.s32 %s355, 16
        %p357 = scmp.lt.s32.totalorder %s356, 15
        %s358 = scalar_select %p357, %s356, 15
        %p359 = scmp.lt.s32.totalorder %s22, 1
        %s360 = scalar_select %p359, %s22, 1
        %p361 = scmp.lt.s32.totalorder %s358, 15
        %s362 = scalar_select %p361, %s358, 15
        %s363 = smul.addr %s362, 2
        %s364 = smul.addr %s360, 32
        %s365 = sadd.s32 %s363, %s364
        %s366 = smul.addr %s365, 4
        %s367 = scalar_lea.vmem %s2, %s366
        %s368 = smul.u32 %s23, 16
        %s369 = sadd.s32 %s368, 16
        %p370 = scmp.lt.s32.totalorder %s369, 15
        %s371 = scalar_select %p370, %s369, 15
      $region52: #{bottleneck_forward.1} parent=39 // pred_fallthru
        _
    $region40: #{bottleneck_forward.1} parent=5 // pred_fallthru
      _
    %p372 = scmp.le.s32.totalorder 1, %s15
    %p373 = scmp.lt.s32.totalorder %s15, 3
    %p374 = pnand %p372, %p373
    %p375 = pneg %p374
    // Predicated region
    $region53: #{bottleneck_forward.1} parent=5 // pred_check
      _
    $region54: #{bottleneck_forward.1} parent=5 // pred_check_branch
      %377 = sbr.rel (%p374) target = $region56
    $region55: #{bottleneck_forward.1} parent=5 // pred_region
      %s378 = ssub.s32 %s15, 1
      %s379 = smul.u32 16, %s25
      %p380 = scmp.lt.s32.totalorder %s24, 1
      %s381 = scalar_select %p380, %s24, 1
      %p382 = scmp.lt.s32.totalorder %s379, 15
      %s383 = scalar_select %p382, %s379, 15
      %s384 = smul.addr %s383, 2
      %s385 = smul.addr %s381, 32
      %s386 = sadd.s32 %s384, %s385
      %s387 = smul.addr %s386, 4
      %s388 = scalar_lea.vmem %s0, %s387
      %p389 = pneg %p55
      %p390 = pneg %p52
      %s391 = smul.u32 %s25, 16
      %s392 = ssub.s32 %s391, 1
      %p393 = scmp.gt.s32.totalorder %s392, 0
      %s394 = scalar_select %p393, %s392, 0
      %p395 = scmp.lt.s32.totalorder %s24, 1
      %s396 = scalar_select %p395, %s24, 1
      %p397 = scmp.lt.s32.totalorder %s394, 15
      %s398 = scalar_select %p397, %s394, 15
      %s399 = smul.addr %s398, 2
      %s400 = smul.addr %s396, 32
      %s401 = sadd.s32 %s399, %s400
      %s402 = smul.addr %s401, 4
      %s403 = scalar_lea.vmem %s1, %s402
      %p404 = pneg %p91
      %p405 = pneg %p88
      %s406 = smul.u32 %s25, 16
      %s407 = sadd.s32 %s406, 16
      %p408 = scmp.lt.s32.totalorder %s407, 15
      %s409 = scalar_select %p408, %s407, 15
      %p410 = scmp.lt.s32.totalorder %s24, 1
      %s411 = scalar_select %p410, %s24, 1
      %p412 = scmp.lt.s32.totalorder %s409, 15
      %s413 = scalar_select %p412, %s409, 15
      %s414 = smul.addr %s413, 2
      %s415 = smul.addr %s411, 32
      %s416 = sadd.s32 %s414, %s415
      %s417 = smul.addr %s416, 4
      %s418 = scalar_lea.vmem %s2, %s417
      %p419 = pneg %p127
      %p420 = pneg %p124
      %p421 = pneg %p148
      %p422 = pneg %p145
      %p423 = pneg %p169
      %p424 = pneg %p166
      %p425 = pneg %p190
      %p426 = pneg %p187
      %p427 = pneg %p211
      %p428 = pneg %p208
      %p429 = pneg %p232
      %p430 = pneg %p229
      %p431 = pneg %p253
      %p432 = pneg %p250
      %p433 = pneg %p281
      %p434 = pneg %p278
      %s435 = smul.u32 16, %s25
      %p436 = scmp.lt.s32.totalorder %s24, 1
      %s437 = scalar_select %p436, %s24, 1
      %p438 = scmp.lt.s32.totalorder %s435, 15
      %s439 = scalar_select %p438, %s435, 15
      %s440 = smul.addr %s439, 2
      %s441 = smul.addr %s437, 32
      %s442 = sadd.s32 %s440, %s441
      %s443 = smul.addr %s442, 8
      %s444 = scalar_lea.vmem %s9, %s443
      %s445 = smul.u32 16, %s25
      %p446 = scmp.lt.s32.totalorder %s24, 1
      %s447 = scalar_select %p446, %s24, 1
      %p448 = scmp.lt.s32.totalorder %s445, 15
      %s449 = scalar_select %p448, %s445, 15
      %s450 = smul.addr %s449, 2
      %s451 = smul.addr %s447, 32
      %s452 = sadd.s32 %s450, %s451
      %s453 = smul.addr %s452, 4
      %s454 = scalar_lea.vmem %s0, %s453
      %s455 = smul.u32 16, %s25
      %s456 = smul.u32 %s25, 16
      %s457 = ssub.s32 %s456, 1
      %p458 = scmp.gt.s32.totalorder %s457, 0
      %s459 = scalar_select %p458, %s457, 0
      %p460 = scmp.lt.s32.totalorder %s24, 1
      %s461 = scalar_select %p460, %s24, 1
      %p462 = scmp.lt.s32.totalorder %s459, 15
      %s463 = scalar_select %p462, %s459, 15
      %s464 = smul.addr %s463, 2
      %s465 = smul.addr %s461, 32
      %s466 = sadd.s32 %s464, %s465
      %s467 = smul.addr %s466, 4
      %s468 = scalar_lea.vmem %s1, %s467
      %s469 = smul.u32 %s25, 16
      %s470 = ssub.s32 %s469, 1
      %p471 = scmp.gt.s32.totalorder %s470, 0
      %s472 = scalar_select %p471, %s470, 0
      %s473 = smul.u32 %s25, 16
      %s474 = sadd.s32 %s473, 16
      %p475 = scmp.lt.s32.totalorder %s474, 15
      %s476 = scalar_select %p475, %s474, 15
      %p477 = scmp.lt.s32.totalorder %s24, 1
      %s478 = scalar_select %p477, %s24, 1
      %p479 = scmp.lt.s32.totalorder %s476, 15
      %s480 = scalar_select %p479, %s476, 15
      %s481 = smul.addr %s480, 2
      %s482 = smul.addr %s478, 32
      %s483 = sadd.s32 %s481, %s482
      %s484 = smul.addr %s483, 4
      %s485 = scalar_lea.vmem %s2, %s484
      %s486 = smul.u32 %s25, 16
      %s487 = sadd.s32 %s486, 16
      %p488 = scmp.lt.s32.totalorder %s487, 15
      %s489 = scalar_select %p488, %s487, 15
      %s490 = smul.u32 16, %s25
      %p491 = scmp.lt.s32.totalorder %s24, 1
      %s492 = scalar_select %p491, %s24, 1
      %p493 = scmp.lt.s32.totalorder %s490, 15
      %s494 = scalar_select %p493, %s490, 15
      %s495 = smul.addr %s494, 2
      %s496 = smul.addr %s492, 32
      %s497 = sadd.s32 %s495, %s496
      %s498 = smul.addr %s497, 8
      %s499 = scalar_lea.vmem %s9, %s498
      %s500 = smul.u32 16, %s25
      %v502 = vld [vmem:[%s454] sm:$0xf]
      %v503 = vld [vmem:[%s454 + $0x4] sm:$0xf]
      %v504 = vld [vmem:[%s454 + $0x8] sm:$0xf]
      %v505 = vld [vmem:[%s454 + $0xc] sm:$0xf]
      %v506 = vld [vmem:[%s454 + $0x10] sm:$0xf]
      %v507 = vld [vmem:[%s454 + $0x14] sm:$0xf]
      %v508 = vld [vmem:[%s454 + $0x18] sm:$0xf]
      %v509 = vld [vmem:[%s454 + $0x1c] sm:$0xf]
      %v510 = vld [vmem:[%s454 + $0x20] sm:$0xf]
      %v511 = vld [vmem:[%s454 + $0x24] sm:$0xf]
      %v512 = vld [vmem:[%s454 + $0x28] sm:$0xf]
      %v513 = vld [vmem:[%s454 + $0x2c] sm:$0xf]
      %v514 = vld [vmem:[%s454 + $0x30] sm:$0xf]
      %v515 = vld [vmem:[%s454 + $0x34] sm:$0xf]
      %v516 = vld [vmem:[%s454 + $0x38] sm:$0xf]
      %v517 = vld [vmem:[%s454 + $0x3c] sm:$0xf]
      %v518 = vld [vmem:[%s454 + $0x40] sm:$0xf]
      %v519 = vld [vmem:[%s454 + $0x44] sm:$0xf]
      %v520 = vld [vmem:[%s454 + $0x48] sm:$0xf]
      %v521 = vld [vmem:[%s454 + $0x4c] sm:$0xf]
      %v522 = vld [vmem:[%s454 + $0x50] sm:$0xf]
      %v523 = vld [vmem:[%s454 + $0x54] sm:$0xf]
      %v524 = vld [vmem:[%s454 + $0x58] sm:$0xf]
      %v525 = vld [vmem:[%s454 + $0x5c] sm:$0xf]
      %v526 = vld [vmem:[%s454 + $0x60] sm:$0xf]
      %v527 = vld [vmem:[%s454 + $0x64] sm:$0xf]
      %v528 = vld [vmem:[%s454 + $0x68] sm:$0xf]
      %v529 = vld [vmem:[%s454 + $0x6c] sm:$0xf]
      %v530 = vld [vmem:[%s454 + $0x70] sm:$0xf]
      %v531 = vld [vmem:[%s454 + $0x74] sm:$0xf]
      %v532 = vld [vmem:[%s454 + $0x78] sm:$0xf]
      %v533 = vld [vmem:[%s454 + $0x7c] sm:$0xf]
      %v534 = vld [vmem:[%s468] sm:$0xf]
      %v535 = vld [vmem:[%s468 + $0x4] sm:$0xf]
      %v536 = vld [vmem:[%s485] sm:$0xf]
      %v537 = vld [vmem:[%s485 + $0x4] sm:$0xf]
      %v538 = vld [vmem:[%s3] sm:$0xf]
      %v539 = vld [vmem:[%s3 + $0x4] sm:$0xf]
      %v540 = vld [vmem:[%s3 + $0x8] sm:$0xf]
      %v541 = vld [vmem:[%s3 + $0xc] sm:$0xf]
      %v542 = vld [vmem:[%s3 + $0x10] sm:$0xf]
      %v543 = vld [vmem:[%s3 + $0x14] sm:$0xf]
      %v544 = vld [vmem:[%s3 + $0x18] sm:$0xf]
      %v545 = vld [vmem:[%s3 + $0x1c] sm:$0xf]
      %v546 = vld [vmem:[%s3 + $0x20] sm:$0xf]
      %v547 = vld [vmem:[%s3 + $0x24] sm:$0xf]
      %v548 = vld [vmem:[%s3 + $0x28] sm:$0xf]
      %v549 = vld [vmem:[%s3 + $0x2c] sm:$0xf]
      %v550 = vld [vmem:[%s3 + $0x30] sm:$0xf]
      %v551 = vld [vmem:[%s3 + $0x34] sm:$0xf]
      %v552 = vld [vmem:[%s3 + $0x38] sm:$0xf]
      %v553 = vld [vmem:[%s3 + $0x3c] sm:$0xf]
      %v554 = vld [vmem:[%s6] sm:$0x1]
      %v556 = vlaneseq
      %v557 = vshrl.u32 %v556, 7
      %v558 = vsub.s32 0, %v557
      %v559 = vrot.slane %v554, %v558
      %v597 = vunpack.c.l.b16 %v534
      %v598 = vunpack.c.l.b16 %v535
      %v599 = vunpack.c.l.b16 %v502
      %v600 = vunpack.c.l.b16 %v503
      %v601 = vunpack.c.l.b16 %v504
      %v602 = vunpack.c.l.b16 %v505
      %v603 = vunpack.c.l.b16 %v506
      %v604 = vunpack.c.l.b16 %v507
      %v605 = vunpack.c.l.b16 %v508
      %v606 = vunpack.c.l.b16 %v509
      %v607 = vunpack.c.l.b16 %v510
      %v608 = vunpack.c.l.b16 %v511
      %v609 = vunpack.c.l.b16 %v512
      %v610 = vunpack.c.l.b16 %v513
      %v611 = vunpack.c.l.b16 %v514
      %v612 = vunpack.c.l.b16 %v515
      %v613 = vunpack.c.l.b16 %v516
      %v614 = vunpack.c.l.b16 %v517
      %v615 = vunpack.c.l.b16 %v518
      %v616 = vunpack.c.l.b16 %v519
      %v617 = vunpack.c.l.b16 %v520
      %v618 = vunpack.c.l.b16 %v521
      %v619 = vunpack.c.l.b16 %v522
      %v620 = vunpack.c.l.b16 %v523
      %v621 = vunpack.c.l.b16 %v524
      %v622 = vunpack.c.l.b16 %v525
      %v623 = vunpack.c.l.b16 %v526
      %v624 = vunpack.c.l.b16 %v527
      %v625 = vunpack.c.l.b16 %v528
      %v626 = vunpack.c.l.b16 %v529
      %v627 = vunpack.c.l.b16 %v530
      %v628 = vunpack.c.l.b16 %v531
      %v629 = vunpack.c.l.b16 %v532
      %v630 = vunpack.c.l.b16 %v533
      %v631 = vunpack.c.l.b16 %v536
      %v632 = vunpack.c.l.b16 %v537
      %v633 = vpack.c.b16 %v598, %v597
      %v634 = vpack.c.b16 %v600, %v599
      %v635 = vpack.c.b16 %v602, %v601
      %v636 = vpack.c.b16 %v604, %v603
      %v637 = vpack.c.b16 %v606, %v605
      %v638 = vpack.c.b16 %v608, %v607
      %v639 = vpack.c.b16 %v610, %v609
      %v640 = vpack.c.b16 %v612, %v611
      %v641 = vpack.c.b16 %v614, %v613
      %v642 = vpack.c.b16 %v616, %v615
      %v643 = vpack.c.b16 %v618, %v617
      %v644 = vpack.c.b16 %v620, %v619
      %v645 = vpack.c.b16 %v622, %v621
      %v646 = vpack.c.b16 %v624, %v623
      %v647 = vpack.c.b16 %v626, %v625
      %v648 = vpack.c.b16 %v628, %v627
      %v649 = vpack.c.b16 %v630, %v629
      %v650 = vpack.c.b16 %v632, %v631
      %v685 = vunpack.c.l.b16 %v538
      %v686 = vunpack.c.l.b16 %v539
      %v687 = vunpack.c.l.b16 %v540
      %v688 = vunpack.c.l.b16 %v541
      %v689 = vunpack.c.l.b16 %v542
      %v690 = vunpack.c.l.b16 %v543
      %v691 = vunpack.c.l.b16 %v544
      %v692 = vunpack.c.l.b16 %v545
      %v693 = vunpack.c.l.b16 %v546
      %v694 = vunpack.c.l.b16 %v547
      %v695 = vunpack.c.l.b16 %v548
      %v696 = vunpack.c.l.b16 %v549
      %v697 = vunpack.c.l.b16 %v550
      %v698 = vunpack.c.l.b16 %v551
      %v699 = vunpack.c.l.b16 %v552
      %v700 = vunpack.c.l.b16 %v553
      %v701 = vpack.c.b16 %v686, %v685
      %v702 = vpack.c.b16 %v688, %v687
      %v703 = vpack.c.b16 %v690, %v689
      %v704 = vpack.c.b16 %v692, %v691
      %v705 = vpack.c.b16 %v694, %v693
      %v706 = vpack.c.b16 %v696, %v695
      %v707 = vpack.c.b16 %v698, %v697
      %v708 = vpack.c.b16 %v700, %v699
      %717 = vmatprep.subr.bf16.mxu0 0
      %718 = vmatpush1.bf16.msra.mxu0 %v701
      %719 = vmatprep.subr.bf16.mxu0 0
      %720 = vmatpush1.bf16.msra.mxu0 %v702
      %721 = vmatprep.subr.bf16.mxu0 0
      %722 = vmatpush1.bf16.msra.mxu0 %v703
      %723 = vmatprep.subr.bf16.mxu0 0
      %724 = vmatpush1.bf16.msra.mxu0 %v704
      %725 = vmatprep.subr.bf16.mxu0 0
      %726 = vmatpush1.bf16.msra.mxu0 %v705
      %727 = vmatprep.subr.bf16.mxu0 0
      %728 = vmatpush1.bf16.msra.mxu0 %v706
      %729 = vmatprep.subr.bf16.mxu0 0
      %730 = vmatpush1.bf16.msra.mxu0 %v707
      %731 = vmatprep.subr.bf16.mxu0 0
      %732 = vmatpush1.bf16.msra.mxu0 %v708
      %733 = vmatprep.subr.bf16.mxu0 0
      %734 = vmatpush1.bf16.msra.mxu0 0
      %735 = vmatprep.subr.bf16.mxu0 0
      %736 = vmatpush1.bf16.msra.mxu0 0
      %737 = vmatprep.subr.bf16.mxu0 0
      %738 = vmatpush1.bf16.msra.mxu0 0
      %739 = vmatprep.subr.bf16.mxu0 0
      %740 = vmatpush1.bf16.msra.mxu0 0
      %741 = vmatprep.subr.bf16.mxu0 0
      %742 = vmatpush1.bf16.msra.mxu0 0
      %743 = vmatprep.subr.bf16.mxu0 0
      %744 = vmatpush1.bf16.msra.mxu0 0
      %745 = vmatprep.subr.bf16.mxu0 0
      %746 = vmatpush1.bf16.msra.mxu0 0
      %747 = vmatprep.subr.bf16.mxu0 0
      %748 = vmatpush1.bf16.msra.mxu0 0
      %749 = vmatprep.mubr.bf16.mxu0 0
      %750 = vmatmul.mubr.bf16.gmra.mrb[0].mxu0 %v633
      %v751 = vpop.f32.mrb[0].mxu0
      %v752 = vadd.f32 %v559, %v751
      %v753 = vpop.f32.mrb[0].mxu0
      %v754 = vpop.f32.mrb[0].mxu0
      %v755 = vadd.f32 %v559, %v754
      %v756 = vpop.f32.mrb[0].mxu0
      %757 = vmatprep.mubr.bf16.mxu0 0
      %758 = vmatmul.mubr.bf16.gmra.mrb[0].mxu0 %v634
      %v759 = vpop.f32.mrb[0].mxu0
      %v760 = vadd.f32 %v559, %v759
      %v761 = vpop.f32.mrb[0].mxu0
      %v762 = vpop.f32.mrb[0].mxu0
      %v763 = vadd.f32 %v559, %v762
      %v764 = vpop.f32.mrb[0].mxu0
      %765 = vmatprep.mubr.bf16.mxu0 0
      %766 = vmatmul.mubr.bf16.gmra.mrb[0].mxu0 %v635
      %v767 = vpop.f32.mrb[0].mxu0
      %v768 = vadd.f32 %v559, %v767
      %v769 = vpop.f32.mrb[0].mxu0
      %v770 = vpop.f32.mrb[0].mxu0
      %v771 = vadd.f32 %v559, %v770
      %v772 = vpop.f32.mrb[0].mxu0
      %773 = vmatprep.mubr.bf16.mxu0 0
      %774 = vmatmul.mubr.bf16.gmra.mrb[0].mxu0 %v636
      %v775 = vpop.f32.mrb[0].mxu0
      %v776 = vadd.f32 %v559, %v775
      %v777 = vpop.f32.mrb[0].mxu0
      %v778 = vpop.f32.mrb[0].mxu0
      %v779 = vadd.f32 %v559, %v778
      %v780 = vpop.f32.mrb[0].mxu0
      %781 = vmatprep.mubr.bf16.mxu0 0
      %782 = vmatmul.mubr.bf16.gmra.mrb[0].mxu0 %v637
      %v783 = vpop.f32.mrb[0].mxu0
      %v784 = vadd.f32 %v559, %v783
      %v785 = vpop.f32.mrb[0].mxu0
      %v786 = vpop.f32.mrb[0].mxu0
      %v787 = vadd.f32 %v559, %v786
      %v788 = vpop.f32.mrb[0].mxu0
      %789 = vmatprep.mubr.bf16.mxu0 0
      %790 = vmatmul.mubr.bf16.gmra.mrb[0].mxu0 %v638
      %v791 = vpop.f32.mrb[0].mxu0
      %v792 = vadd.f32 %v559, %v791
      %v793 = vpop.f32.mrb[0].mxu0
      %v794 = vpop.f32.mrb[0].mxu0
      %v795 = vadd.f32 %v559, %v794
      %v796 = vpop.f32.mrb[0].mxu0
      %797 = vmatprep.mubr.bf16.mxu0 0
      %798 = vmatmul.mubr.bf16.gmra.mrb[0].mxu0 %v639
      %v799 = vpop.f32.mrb[0].mxu0
      %v800 = vadd.f32 %v559, %v799
      %v801 = vpop.f32.mrb[0].mxu0
      %v802 = vpop.f32.mrb[0].mxu0
      %v803 = vadd.f32 %v559, %v802
      %v804 = vpop.f32.mrb[0].mxu0
      %805 = vmatprep.mubr.bf16.mxu0 0
      %806 = vmatmul.mubr.bf16.gmra.mrb[0].mxu0 %v640
      %v807 = vpop.f32.mrb[0].mxu0
      %v808 = vadd.f32 %v559, %v807
      %v809 = vpop.f32.mrb[0].mxu0
      %v810 = vpop.f32.mrb[0].mxu0
      %v811 = vadd.f32 %v559, %v810
      %v812 = vpop.f32.mrb[0].mxu0
      %813 = vmatprep.mubr.bf16.mxu0 0
      %814 = vmatmul.mubr.bf16.gmra.mrb[0].mxu0 %v641
      %v815 = vpop.f32.mrb[0].mxu0
      %v816 = vadd.f32 %v559, %v815
      %v817 = vpop.f32.mrb[0].mxu0
      %v818 = vpop.f32.mrb[0].mxu0
      %v819 = vadd.f32 %v559, %v818
      %v820 = vpop.f32.mrb[0].mxu0
      %821 = vmatprep.mubr.bf16.mxu0 0
      %822 = vmatmul.mubr.bf16.gmra.mrb[0].mxu0 %v642
      %v823 = vpop.f32.mrb[0].mxu0
      %v824 = vadd.f32 %v559, %v823
      %v825 = vpop.f32.mrb[0].mxu0
      %v826 = vpop.f32.mrb[0].mxu0
      %v827 = vadd.f32 %v559, %v826
      %v828 = vpop.f32.mrb[0].mxu0
      %829 = vmatprep.mubr.bf16.mxu0 0
      %830 = vmatmul.mubr.bf16.gmra.mrb[0].mxu0 %v643
      %v831 = vpop.f32.mrb[0].mxu0
      %v832 = vadd.f32 %v559, %v831
      %v833 = vpop.f32.mrb[0].mxu0
      %v834 = vpop.f32.mrb[0].mxu0
      %v835 = vadd.f32 %v559, %v834
      %v836 = vpop.f32.mrb[0].mxu0
      %837 = vmatprep.mubr.bf16.mxu0 0
      %838 = vmatmul.mubr.bf16.gmra.mrb[0].mxu0 %v644
      %v839 = vpop.f32.mrb[0].mxu0
      %v840 = vadd.f32 %v559, %v839
      %v841 = vpop.f32.mrb[0].mxu0
      %v842 = vpop.f32.mrb[0].mxu0
      %v843 = vadd.f32 %v559, %v842
      %v844 = vpop.f32.mrb[0].mxu0
      %845 = vmatprep.mubr.bf16.mxu0 0
      %846 = vmatmul.mubr.bf16.gmra.mrb[0].mxu0 %v645
      %v847 = vpop.f32.mrb[0].mxu0
      %v848 = vadd.f32 %v559, %v847
      %v849 = vpop.f32.mrb[0].mxu0
      %v850 = vpop.f32.mrb[0].mxu0
      %v851 = vadd.f32 %v559, %v850
      %v852 = vpop.f32.mrb[0].mxu0
      %853 = vmatprep.mubr.bf16.mxu0 0
      %854 = vmatmul.mubr.bf16.gmra.mrb[0].mxu0 %v646
      %v855 = vpop.f32.mrb[0].mxu0
      %v856 = vadd.f32 %v559, %v855
      %v857 = vpop.f32.mrb[0].mxu0
      %v858 = vpop.f32.mrb[0].mxu0
      %v859 = vadd.f32 %v559, %v858
      %v860 = vpop.f32.mrb[0].mxu0
      %861 = vmatprep.mubr.bf16.mxu0 0
      %862 = vmatmul.mubr.bf16.gmra.mrb[0].mxu0 %v647
      %v863 = vpop.f32.mrb[0].mxu0
      %v864 = vadd.f32 %v559, %v863
      %v865 = vpop.f32.mrb[0].mxu0
      %v866 = vpop.f32.mrb[0].mxu0
      %v867 = vadd.f32 %v559, %v866
      %v868 = vpop.f32.mrb[0].mxu0
      %869 = vmatprep.mubr.bf16.mxu0 0
      %870 = vmatmul.mubr.bf16.gmra.mrb[0].mxu0 %v648
      %v871 = vpop.f32.mrb[0].mxu0
      %v872 = vadd.f32 %v559, %v871
      %v873 = vpop.f32.mrb[0].mxu0
      %v874 = vpop.f32.mrb[0].mxu0
      %v875 = vadd.f32 %v559, %v874
      %v876 = vpop.f32.mrb[0].mxu0
      %877 = vmatprep.mubr.bf16.mxu0 0
      %878 = vmatmul.mubr.bf16.gmra.mrb[0].mxu0 %v649
      %v879 = vpop.f32.mrb[0].mxu0
      %v880 = vadd.f32 %v559, %v879
      %v881 = vpop.f32.mrb[0].mxu0
      %v882 = vpop.f32.mrb[0].mxu0
      %v883 = vadd.f32 %v559, %v882
      %v884 = vpop.f32.mrb[0].mxu0
      %885 = vmatprep.mubr.bf16.mxu0 0
      %886 = vmatmul.mubr.bf16.gmra.mrb[0].mxu0 %v650
      %v887 = vpop.f32.mrb[0].mxu0
      %v888 = vadd.f32 %v559, %v887
      %v889 = vpop.f32.mrb[0].mxu0
      %v890 = vpop.f32.mrb[0].mxu0
      %v891 = vadd.f32 %v559, %v890
      %v892 = vpop.f32.mrb[0].mxu0
      %893 = vdwg.mxu0
      %v894 = vmax.f32 %v752, 0.0
      %v895 = vmax.f32 %v755, 0.0
      %v896 = vmax.f32 %v760, 0.0
      %v897 = vmax.f32 %v763, 0.0
      %v898 = vmax.f32 %v768, 0.0
      %v899 = vmax.f32 %v771, 0.0
      %v900 = vmax.f32 %v776, 0.0
      %v901 = vmax.f32 %v779, 0.0
      %v902 = vmax.f32 %v784, 0.0
      %v903 = vmax.f32 %v787, 0.0
      %v904 = vmax.f32 %v792, 0.0
      %v905 = vmax.f32 %v795, 0.0
      %v906 = vmax.f32 %v800, 0.0
      %v907 = vmax.f32 %v803, 0.0
      %v908 = vmax.f32 %v808, 0.0
      %v909 = vmax.f32 %v811, 0.0
      %v910 = vmax.f32 %v816, 0.0
      %v911 = vmax.f32 %v819, 0.0
      %v912 = vmax.f32 %v824, 0.0
      %v913 = vmax.f32 %v827, 0.0
      %v914 = vmax.f32 %v832, 0.0
      %v915 = vmax.f32 %v835, 0.0
      %v916 = vmax.f32 %v840, 0.0
      %v917 = vmax.f32 %v843, 0.0
      %v918 = vmax.f32 %v848, 0.0
      %v919 = vmax.f32 %v851, 0.0
      %v920 = vmax.f32 %v856, 0.0
      %v921 = vmax.f32 %v859, 0.0
      %v922 = vmax.f32 %v864, 0.0
      %v923 = vmax.f32 %v867, 0.0
      %v924 = vmax.f32 %v872, 0.0
      %v925 = vmax.f32 %v875, 0.0
      %v926 = vmax.f32 %v880, 0.0
      %v927 = vmax.f32 %v883, 0.0
      %v928 = vmax.f32 %v888, 0.0
      %v929 = vmax.f32 %v891, 0.0
      %p930 = scmp.gt.s32.totalorder %s25, 0
      %s931 = scalar_select %p930, 1, 0
      %v932 = vstv %s931
      %vm933 = vcmp.eq.s32.totalorder %v932, 1
      %v934 = vsel %vm933, %v894, 0.0
      %v935 = vsel %vm933, %v895, 0.0
      %p936 = scmp.lt.s32.totalorder %s25, 0
      %s937 = scalar_select %p936, 1, 0
      %v938 = vstv %s937
      %vm939 = vcmp.eq.s32.totalorder %v938, 1
      %v940 = vsel %vm939, %v928, 0.0
      %v941 = vsel %vm939, %v929, 0.0
      %vm978 = vcmask 1040384
      %v979 = vrot.slane %v934, 7
      %v980 = vrot.slane %v935, 7
      %v981 = vsel %vm978, %v979, %v980
      %v982 = vrot.slane %v896, 7
      %v983 = vrot.slane %v897, 7
      %v984 = vsel %vm978, %v982, %v983
      %v985 = vrot.slane %v898, 7
      %v986 = vrot.slane %v899, 7
      %v987 = vsel %vm978, %v985, %v986
      %v988 = vrot.slane %v900, 7
      %v989 = vrot.slane %v901, 7
      %v990 = vsel %vm978, %v988, %v989
      %v991 = vrot.slane %v902, 7
      %v992 = vrot.slane %v903, 7
      %v993 = vsel %vm978, %v991, %v992
      %v994 = vrot.slane %v904, 7
      %v995 = vrot.slane %v905, 7
      %v996 = vsel %vm978, %v994, %v995
      %v997 = vrot.slane %v906, 7
      %v998 = vrot.slane %v907, 7
      %v999 = vsel %vm978, %v997, %v998
      %v1000 = vrot.slane %v908, 7
      %v1001 = vrot.slane %v909, 7
      %v1002 = vsel %vm978, %v1000, %v1001
      %v1003 = vrot.slane %v910, 7
      %v1004 = vrot.slane %v911, 7
      %v1005 = vsel %vm978, %v1003, %v1004
      %v1006 = vrot.slane %v912, 7
      %v1007 = vrot.slane %v913, 7
      %v1008 = vsel %vm978, %v1006, %v1007
      %v1009 = vrot.slane %v914, 7
      %v1010 = vrot.slane %v915, 7
      %v1011 = vsel %vm978, %v1009, %v1010
      %v1012 = vrot.slane %v916, 7
      %v1013 = vrot.slane %v917, 7
      %v1014 = vsel %vm978, %v1012, %v1013
      %v1015 = vrot.slane %v918, 7
      %v1016 = vrot.slane %v919, 7
      %v1017 = vsel %vm978, %v1015, %v1016
      %v1018 = vrot.slane %v920, 7
      %v1019 = vrot.slane %v921, 7
      %v1020 = vsel %vm978, %v1018, %v1019
      %v1021 = vrot.slane %v922, 7
      %v1022 = vrot.slane %v923, 7
      %v1023 = vsel %vm978, %v1021, %v1022
      %v1024 = vrot.slane %v924, 7
      %v1025 = vrot.slane %v925, 7
      %v1026 = vsel %vm978, %v1024, %v1025
      %v1027 = vrot.slane %v926, 7
      %v1028 = vrot.slane %v927, 7
      %v1029 = vsel %vm978, %v1027, %v1028
      %v1030 = vrot.slane %v940, 7
      %v1031 = vrot.slane %v941, 7
      %v1032 = vsel %vm978, %v1030, %v1031
      %v1069 = vsel %vm978, 0.0, %v979
      %v1070 = vsel %vm978, 0.0, %v982
      %v1071 = vsel %vm978, 0.0, %v985
      %v1072 = vsel %vm978, 0.0, %v988
      %v1073 = vsel %vm978, 0.0, %v991
      %v1074 = vsel %vm978, 0.0, %v994
      %v1075 = vsel %vm978, 0.0, %v997
      %v1076 = vsel %vm978, 0.0, %v1000
      %v1077 = vsel %vm978, 0.0, %v1003
      %v1078 = vsel %vm978, 0.0, %v1006
      %v1079 = vsel %vm978, 0.0, %v1009
      %v1080 = vsel %vm978, 0.0, %v1012
      %v1081 = vsel %vm978, 0.0, %v1015
      %v1082 = vsel %vm978, 0.0, %v1018
      %v1083 = vsel %vm978, 0.0, %v1021
      %v1084 = vsel %vm978, 0.0, %v1024
      %v1085 = vsel %vm978, 0.0, %v1027
      %v1086 = vsel %vm978, 0.0, %v1030
      %vm1087 = vcmask 1046528
      %v1088 = vrot.slane %v934, 1
      %v1089 = vrot.slane %v935, 1
      %v1090 = vsel %vm1087, %v1088, %v1089
      %v1091 = vrot.slane %v896, 1
      %v1092 = vrot.slane %v897, 1
      %v1093 = vsel %vm1087, %v1091, %v1092
      %v1094 = vrot.slane %v898, 1
      %v1095 = vrot.slane %v899, 1
      %v1096 = vsel %vm1087, %v1094, %v1095
      %v1097 = vrot.slane %v900, 1
      %v1098 = vrot.slane %v901, 1
      %v1099 = vsel %vm1087, %v1097, %v1098
      %v1100 = vrot.slane %v902, 1
      %v1101 = vrot.slane %v903, 1
      %v1102 = vsel %vm1087, %v1100, %v1101
      %v1103 = vrot.slane %v904, 1
      %v1104 = vrot.slane %v905, 1
      %v1105 = vsel %vm1087, %v1103, %v1104
      %v1106 = vrot.slane %v906, 1
      %v1107 = vrot.slane %v907, 1
      %v1108 = vsel %vm1087, %v1106, %v1107
      %v1109 = vrot.slane %v908, 1
      %v1110 = vrot.slane %v909, 1
      %v1111 = vsel %vm1087, %v1109, %v1110
      %v1112 = vrot.slane %v910, 1
      %v1113 = vrot.slane %v911, 1
      %v1114 = vsel %vm1087, %v1112, %v1113
      %v1115 = vrot.slane %v912, 1
      %v1116 = vrot.slane %v913, 1
      %v1117 = vsel %vm1087, %v1115, %v1116
      %v1118 = vrot.slane %v914, 1
      %v1119 = vrot.slane %v915, 1
      %v1120 = vsel %vm1087, %v1118, %v1119
      %v1121 = vrot.slane %v916, 1
      %v1122 = vrot.slane %v917, 1
      %v1123 = vsel %vm1087, %v1121, %v1122
      %v1124 = vrot.slane %v918, 1
      %v1125 = vrot.slane %v919, 1
      %v1126 = vsel %vm1087, %v1124, %v1125
      %v1127 = vrot.slane %v920, 1
      %v1128 = vrot.slane %v921, 1
      %v1129 = vsel %vm1087, %v1127, %v1128
      %v1130 = vrot.slane %v922, 1
      %v1131 = vrot.slane %v923, 1
      %v1132 = vsel %vm1087, %v1130, %v1131
      %v1133 = vrot.slane %v924, 1
      %v1134 = vrot.slane %v925, 1
      %v1135 = vsel %vm1087, %v1133, %v1134
      %v1136 = vrot.slane %v926, 1
      %v1137 = vrot.slane %v927, 1
      %v1138 = vsel %vm1087, %v1136, %v1137
      %v1139 = vrot.slane %v940, 1
      %v1140 = vrot.slane %v941, 1
      %v1141 = vsel %vm1087, %v1139, %v1140
      %v1178 = vsel %vm1087, %v1089, 0.0
      %v1179 = vsel %vm1087, %v1092, 0.0
      %v1180 = vsel %vm1087, %v1095, 0.0
      %v1181 = vsel %vm1087, %v1098, 0.0
      %v1182 = vsel %vm1087, %v1101, 0.0
      %v1183 = vsel %vm1087, %v1104, 0.0
      %v1184 = vsel %vm1087, %v1107, 0.0
      %v1185 = vsel %vm1087, %v1110, 0.0
      %v1186 = vsel %vm1087, %v1113, 0.0
      %v1187 = vsel %vm1087, %v1116, 0.0
      %v1188 = vsel %vm1087, %v1119, 0.0
      %v1189 = vsel %vm1087, %v1122, 0.0
      %v1190 = vsel %vm1087, %v1125, 0.0
      %v1191 = vsel %vm1087, %v1128, 0.0
      %v1192 = vsel %vm1087, %v1131, 0.0
      %v1193 = vsel %vm1087, %v1134, 0.0
      %v1194 = vsel %vm1087, %v1137, 0.0
      %v1195 = vsel %vm1087, %v1140, 0.0
      %v1196 = vpack.c.bf16 %v981, %v1069
      %v1197 = vpack.c.bf16 %v935, %v934
      %v1198 = vpack.c.bf16 %v1178, %v1090
      %v1199 = vpack.c.bf16 %v984, %v1070
      %v1200 = vpack.c.bf16 %v897, %v896
      %v1201 = vpack.c.bf16 %v1179, %v1093
      %v1202 = vpack.c.bf16 %v987, %v1071
      %v1203 = vpack.c.bf16 %v899, %v898
      %v1204 = vpack.c.bf16 %v1180, %v1096
      %v1205 = vpack.c.bf16 %v990, %v1072
      %v1206 = vpack.c.bf16 %v901, %v900
      %v1207 = vpack.c.bf16 %v1181, %v1099
      %v1208 = vpack.c.bf16 %v993, %v1073
      %v1209 = vpack.c.bf16 %v903, %v902
      %v1210 = vpack.c.bf16 %v1182, %v1102
      %v1211 = vpack.c.bf16 %v996, %v1074
      %v1212 = vpack.c.bf16 %v905, %v904
      %v1213 = vpack.c.bf16 %v1183, %v1105
      %v1214 = vpack.c.bf16 %v999, %v1075
      %v1215 = vpack.c.bf16 %v907, %v906
      %v1216 = vpack.c.bf16 %v1184, %v1108
      %v1217 = vpack.c.bf16 %v1002, %v1076
      %v1218 = vpack.c.bf16 %v909, %v908
      %v1219 = vpack.c.bf16 %v1185, %v1111
      %v1220 = vpack.c.bf16 %v1005, %v1077
      %v1221 = vpack.c.bf16 %v911, %v910
      %v1222 = vpack.c.bf16 %v1186, %v1114
      %v1223 = vpack.c.bf16 %v1008, %v1078
      %v1224 = vpack.c.bf16 %v913, %v912
      %v1225 = vpack.c.bf16 %v1187, %v1117
      %v1226 = vpack.c.bf16 %v1011, %v1079
      %v1227 = vpack.c.bf16 %v915, %v914
      %v1228 = vpack.c.bf16 %v1188, %v1120
      %v1229 = vpack.c.bf16 %v1014, %v1080
      %v1230 = vpack.c.bf16 %v917, %v916
      %v1231 = vpack.c.bf16 %v1189, %v1123
      %v1232 = vpack.c.bf16 %v1017, %v1081
      %v1233 = vpack.c.bf16 %v919, %v918
      %v1234 = vpack.c.bf16 %v1190, %v1126
      %v1235 = vpack.c.bf16 %v1020, %v1082
      %v1236 = vpack.c.bf16 %v921, %v920
      %v1237 = vpack.c.bf16 %v1191, %v1129
      %v1238 = vpack.c.bf16 %v1023, %v1083
      %v1239 = vpack.c.bf16 %v923, %v922
      %v1240 = vpack.c.bf16 %v1192, %v1132
      %v1241 = vpack.c.bf16 %v1026, %v1084
      %v1242 = vpack.c.bf16 %v925, %v924
      %v1243 = vpack.c.bf16 %v1193, %v1135
      %v1244 = vpack.c.bf16 %v1029, %v1085
      %v1245 = vpack.c.bf16 %v927, %v926
      %v1246 = vpack.c.bf16 %v1194, %v1138
      %v1247 = vpack.c.bf16 %v1032, %v1086
      %v1248 = vpack.c.bf16 %v941, %v940
      %v1249 = vpack.c.bf16 %v1195, %v1141
      %v1250 = vld [vmem:[%s4] sm:$0xf]
      %v1251 = vld [vmem:[%s4 + $0x4] sm:$0xf]
      %v1252 = vld [vmem:[%s4 + $0x8] sm:$0xf]
      %v1253 = vld [vmem:[%s4 + $0xc] sm:$0xf]
      %v1254 = vld [vmem:[%s4 + $0x10] sm:$0xf]
      %v1255 = vld [vmem:[%s4 + $0x14] sm:$0xf]
      %v1256 = vld [vmem:[%s4 + $0x18] sm:$0xf]
      %v1257 = vld [vmem:[%s4 + $0x1c] sm:$0xf]
      %v1258 = vld [vmem:[%s4 + $0x20] sm:$0xf]
      %v1259 = vld [vmem:[%s4 + $0x24] sm:$0xf]
      %v1260 = vld [vmem:[%s4 + $0x28] sm:$0xf]
      %v1261 = vld [vmem:[%s4 + $0x2c] sm:$0xf]
      %v1262 = vld [vmem:[%s4 + $0x30] sm:$0xf]
      %v1263 = vld [vmem:[%s4 + $0x34] sm:$0xf]
      %v1264 = vld [vmem:[%s4 + $0x38] sm:$0xf]
      %v1265 = vld [vmem:[%s4 + $0x3c] sm:$0xf]
      %v1266 = vld [vmem:[%s4 + $0x40] sm:$0xf]
      %v1267 = vld [vmem:[%s4 + $0x44] sm:$0xf]
      %v1268 = vld [vmem:[%s4 + $0x48] sm:$0xf]
      %v1269 = vld [vmem:[%s4 + $0x4c] sm:$0xf]
      %v1270 = vld [vmem:[%s4 + $0x50] sm:$0xf]
      %v1271 = vld [vmem:[%s4 + $0x54] sm:$0xf]
      %v1272 = vld [vmem:[%s4 + $0x58] sm:$0xf]
      %v1273 = vld [vmem:[%s4 + $0x5c] sm:$0xf]
      %v1274 = vld [vmem:[%s4 + $0x60] sm:$0xf]
      %v1275 = vld [vmem:[%s4 + $0x64] sm:$0xf]
      %v1276 = vld [vmem:[%s4 + $0x68] sm:$0xf]
      %v1277 = vld [vmem:[%s4 + $0x6c] sm:$0xf]
      %v1278 = vld [vmem:[%s4 + $0x70] sm:$0xf]
      %v1279 = vld [vmem:[%s4 + $0x74] sm:$0xf]
      %v1280 = vld [vmem:[%s4 + $0x78] sm:$0xf]
      %v1281 = vld [vmem:[%s4 + $0x7c] sm:$0xf]
      %v1282 = vld [vmem:[%s4 + $0x80] sm:$0xf]
      %v1283 = vld [vmem:[%s4 + $0x84] sm:$0xf]
      %v1284 = vld [vmem:[%s4 + $0x88] sm:$0xf]
      %v1285 = vld [vmem:[%s4 + $0x8c] sm:$0xf]
      %v1286 = vld [vmem:[%s4 + $0x90] sm:$0xf]
      %v1287 = vld [vmem:[%s4 + $0x94] sm:$0xf]
      %v1288 = vld [vmem:[%s4 + $0x98] sm:$0xf]
      %v1289 = vld [vmem:[%s4 + $0x9c] sm:$0xf]
      %v1290 = vld [vmem:[%s4 + $0xa0] sm:$0xf]
      %v1291 = vld [vmem:[%s4 + $0xa4] sm:$0xf]
      %v1292 = vld [vmem:[%s4 + $0xa8] sm:$0xf]
      %v1293 = vld [vmem:[%s4 + $0xac] sm:$0xf]
      %v1294 = vld [vmem:[%s4 + $0xb0] sm:$0xf]
      %v1295 = vld [vmem:[%s4 + $0xb4] sm:$0xf]
      %v1296 = vld [vmem:[%s4 + $0xb8] sm:$0xf]
      %v1297 = vld [vmem:[%s4 + $0xbc] sm:$0xf]
      %s1298 = scalar_lea.vmem %s4, 192
      %v1299 = vld [vmem:[%s1298] sm:$0xf]
      %v1300 = vld [vmem:[%s1298 + $0x4] sm:$0xf]
      %v1301 = vld [vmem:[%s1298 + $0x8] sm:$0xf]
      %v1302 = vld [vmem:[%s1298 + $0xc] sm:$0xf]
      %v1303 = vld [vmem:[%s1298 + $0x10] sm:$0xf]
      %v1304 = vld [vmem:[%s1298 + $0x14] sm:$0xf]
      %v1305 = vld [vmem:[%s1298 + $0x18] sm:$0xf]
      %v1306 = vld [vmem:[%s1298 + $0x1c] sm:$0xf]
      %v1307 = vld [vmem:[%s1298 + $0x20] sm:$0xf]
      %v1308 = vld [vmem:[%s1298 + $0x24] sm:$0xf]
      %v1309 = vld [vmem:[%s1298 + $0x28] sm:$0xf]
      %v1310 = vld [vmem:[%s1298 + $0x2c] sm:$0xf]
      %v1311 = vld [vmem:[%s1298 + $0x30] sm:$0xf]
      %v1312 = vld [vmem:[%s1298 + $0x34] sm:$0xf]
      %v1313 = vld [vmem:[%s1298 + $0x38] sm:$0xf]
      %v1314 = vld [vmem:[%s1298 + $0x3c] sm:$0xf]
      %v1315 = vld [vmem:[%s1298 + $0x40] sm:$0xf]
      %v1316 = vld [vmem:[%s1298 + $0x44] sm:$0xf]
      %v1317 = vld [vmem:[%s1298 + $0x48] sm:$0xf]
      %v1318 = vld [vmem:[%s1298 + $0x4c] sm:$0xf]
      %v1319 = vld [vmem:[%s1298 + $0x50] sm:$0xf]
      %v1320 = vld [vmem:[%s1298 + $0x54] sm:$0xf]
      %v1321 = vld [vmem:[%s1298 + $0x58] sm:$0xf]
      %v1322 = vld [vmem:[%s1298 + $0x5c] sm:$0xf]
      %v1323 = vld [vmem:[%s1298 + $0x60] sm:$0xf]
      %v1324 = vld [vmem:[%s1298 + $0x64] sm:$0xf]
      %v1325 = vld [vmem:[%s1298 + $0x68] sm:$0xf]
      %v1326 = vld [vmem:[%s1298 + $0x6c] sm:$0xf]
      %v1327 = vld [vmem:[%s1298 + $0x70] sm:$0xf]
      %v1328 = vld [vmem:[%s1298 + $0x74] sm:$0xf]
      %v1329 = vld [vmem:[%s1298 + $0x78] sm:$0xf]
      %v1330 = vld [vmem:[%s1298 + $0x7c] sm:$0xf]
      %v1331 = vld [vmem:[%s1298 + $0x80] sm:$0xf]
      %v1332 = vld [vmem:[%s1298 + $0x84] sm:$0xf]
      %v1333 = vld [vmem:[%s1298 + $0x88] sm:$0xf]
      %v1334 = vld [vmem:[%s1298 + $0x8c] sm:$0xf]
      %v1335 = vld [vmem:[%s1298 + $0x90] sm:$0xf]
      %v1336 = vld [vmem:[%s1298 + $0x94] sm:$0xf]
      %v1337 = vld [vmem:[%s1298 + $0x98] sm:$0xf]
      %v1338 = vld [vmem:[%s1298 + $0x9c] sm:$0xf]
      %v1339 = vld [vmem:[%s1298 + $0xa0] sm:$0xf]
      %v1340 = vld [vmem:[%s1298 + $0xa4] sm:$0xf]
      %v1341 = vld [vmem:[%s1298 + $0xa8] sm:$0xf]
      %v1342 = vld [vmem:[%s1298 + $0xac] sm:$0xf]
      %v1343 = vld [vmem:[%s1298 + $0xb0] sm:$0xf]
      %v1344 = vld [vmem:[%s1298 + $0xb4] sm:$0xf]
      %v1345 = vld [vmem:[%s1298 + $0xb8] sm:$0xf]
      %v1346 = vld [vmem:[%s1298 + $0xbc] sm:$0xf]
      %v1395 = vunpack.c.l.b16 %v1299
      %v1396 = vunpack.c.l.b16 %v1300
      %v1397 = vunpack.c.l.b16 %v1301
      %v1398 = vunpack.c.l.b16 %v1302
      %v1399 = vunpack.c.l.b16 %v1303
      %v1400 = vunpack.c.l.b16 %v1304
      %v1401 = vunpack.c.l.b16 %v1305
      %v1402 = vunpack.c.l.b16 %v1306
      %v1403 = vunpack.c.l.b16 %v1307
      %v1404 = vunpack.c.l.b16 %v1308
      %v1405 = vunpack.c.l.b16 %v1309
      %v1406 = vunpack.c.l.b16 %v1310
      %v1407 = vunpack.c.l.b16 %v1311
      %v1408 = vunpack.c.l.b16 %v1312
      %v1409 = vunpack.c.l.b16 %v1313
      %v1410 = vunpack.c.l.b16 %v1314
      %v1411 = vunpack.c.l.b16 %v1315
      %v1412 = vunpack.c.l.b16 %v1316
      %v1413 = vunpack.c.l.b16 %v1317
      %v1414 = vunpack.c.l.b16 %v1318
      %v1415 = vunpack.c.l.b16 %v1319
      %v1416 = vunpack.c.l.b16 %v1320
      %v1417 = vunpack.c.l.b16 %v1321
      %v1418 = vunpack.c.l.b16 %v1322
      %v1419 = vunpack.c.l.b16 %v1323
      %v1420 = vunpack.c.l.b16 %v1324
      %v1421 = vunpack.c.l.b16 %v1325
      %v1422 = vunpack.c.l.b16 %v1326
      %v1423 = vunpack.c.l.b16 %v1327
      %v1424 = vunpack.c.l.b16 %v1328
      %v1425 = vunpack.c.l.b16 %v1329
      %v1426 = vunpack.c.l.b16 %v1330
      %v1427 = vunpack.c.l.b16 %v1331
      %v1428 = vunpack.c.l.b16 %v1332
      %v1429 = vunpack.c.l.b16 %v1333
      %v1430 = vunpack.c.l.b16 %v1334
      %v1431 = vunpack.c.l.b16 %v1335
      %v1432 = vunpack.c.l.b16 %v1336
      %v1433 = vunpack.c.l.b16 %v1337
      %v1434 = vunpack.c.l.b16 %v1338
      %v1435 = vunpack.c.l.b16 %v1339
      %v1436 = vunpack.c.l.b16 %v1340
      %v1437 = vunpack.c.l.b16 %v1341
      %v1438 = vunpack.c.l.b16 %v1342
      %v1439 = vunpack.c.l.b16 %v1343
      %v1440 = vunpack.c.l.b16 %v1344
      %v1441 = vunpack.c.l.b16 %v1345
      %v1442 = vunpack.c.l.b16 %v1346
      %v1443 = vpack.c.b16 %v1396, %v1395
      %v1444 = vpack.c.b16 %v1398, %v1397
      %v1445 = vpack.c.b16 %v1400, %v1399
      %v1446 = vpack.c.b16 %v1402, %v1401
      %v1447 = vpack.c.b16 %v1404, %v1403
      %v1448 = vpack.c.b16 %v1406, %v1405
      %v1449 = vpack.c.b16 %v1408, %v1407
      %v1450 = vpack.c.b16 %v1410, %v1409
      %v1451 = vpack.c.b16 %v1412, %v1411
      %v1452 = vpack.c.b16 %v1414, %v1413
      %v1453 = vpack.c.b16 %v1416, %v1415
      %v1454 = vpack.c.b16 %v1418, %v1417
      %v1455 = vpack.c.b16 %v1420, %v1419
      %v1456 = vpack.c.b16 %v1422, %v1421
      %v1457 = vpack.c.b16 %v1424, %v1423
      %v1458 = vpack.c.b16 %v1426, %v1425
      %v1459 = vpack.c.b16 %v1428, %v1427
      %v1460 = vpack.c.b16 %v1430, %v1429
      %v1461 = vpack.c.b16 %v1432, %v1431
      %v1462 = vpack.c.b16 %v1434, %v1433
      %v1463 = vpack.c.b16 %v1436, %v1435
      %v1464 = vpack.c.b16 %v1438, %v1437
      %v1465 = vpack.c.b16 %v1440, %v1439
      %v1466 = vpack.c.b16 %v1442, %v1441
      %1491 = vmatprep.subr.bf16.mxu0 0
      %1492 = vmatpush1.bf16.msra.mxu0 %v1443
      %1493 = vmatprep.subr.bf16.mxu0 0
      %1494 = vmatpush1.bf16.msra.mxu0 %v1444
      %1495 = vmatprep.subr.bf16.mxu0 0
      %1496 = vmatpush1.bf16.msra.mxu0 %v1445
      %1497 = vmatprep.subr.bf16.mxu0 0
      %1498 = vmatpush1.bf16.msra.mxu0 %v1446
      %1499 = vmatprep.subr.bf16.mxu0 0
      %1500 = vmatpush1.bf16.msra.mxu0 %v1447
      %1501 = vmatprep.subr.bf16.mxu0 0
      %1502 = vmatpush1.bf16.msra.mxu0 %v1448
      %1503 = vmatprep.subr.bf16.mxu0 0
      %1504 = vmatpush1.bf16.msra.mxu0 %v1449
      %1505 = vmatprep.subr.bf16.mxu0 0
      %1506 = vmatpush1.bf16.msra.mxu0 %v1450
      %1507 = vmatprep.subr.bf16.mxu0 0
      %1508 = vmatpush1.bf16.msra.mxu0 %v1451
      %1509 = vmatprep.subr.bf16.mxu0 0
      %1510 = vmatpush1.bf16.msra.mxu0 %v1452
      %1511 = vmatprep.subr.bf16.mxu0 0
      %1512 = vmatpush1.bf16.msra.mxu0 %v1453
      %1513 = vmatprep.subr.bf16.mxu0 0
      %1514 = vmatpush1.bf16.msra.mxu0 %v1454
      %1515 = vmatprep.subr.bf16.mxu0 0
      %1516 = vmatpush1.bf16.msra.mxu0 %v1455
      %1517 = vmatprep.subr.bf16.mxu0 0
      %1518 = vmatpush1.bf16.msra.mxu0 %v1456
      %1519 = vmatprep.subr.bf16.mxu0 0
      %1520 = vmatpush1.bf16.msra.mxu0 %v1457
      %1521 = vmatprep.subr.bf16.mxu0 0
      %1522 = vmatpush1.bf16.msra.mxu0 %v1458
      %1523 = vmatprep.mubr.bf16.mxu0 %v1200
      %1524 = vmatmul.mubr.bf16.gmra.mrb[0].mxu0 %v1199
      %v1525 = vpop.f32.mrb[0].mxu0
      %v1526 = vadd.f32 0.0, %v1525
      %v1527 = vpop.f32.mrb[0].mxu0
      %v1528 = vpop.f32.mrb[0].mxu0
      %v1529 = vadd.f32 0.0, %v1528
      %v1530 = vpop.f32.mrb[0].mxu0
      %1531 = vmatprep.mubr.bf16.mxu0 %v1203
      %1532 = vmatmul.mubr.bf16.gmra.mrb[0].mxu0 %v1202
      %v1533 = vpop.f32.mrb[0].mxu0
      %v1534 = vadd.f32 0.0, %v1533
      %v1535 = vpop.f32.mrb[0].mxu0
      %v1536 = vpop.f32.mrb[0].mxu0
      %v1537 = vadd.f32 0.0, %v1536
      %v1538 = vpop.f32.mrb[0].mxu0
      %1539 = vmatprep.mubr.bf16.mxu0 %v1206
      %1540 = vmatmul.mubr.bf16.gmra.mrb[0].mxu0 %v1205
      %v1541 = vpop.f32.mrb[0].mxu0
      %v1542 = vadd.f32 0.0, %v1541
      %v1543 = vpop.f32.mrb[0].mxu0
      %v1544 = vpop.f32.mrb[0].mxu0
      %v1545 = vadd.f32 0.0, %v1544
      %v1546 = vpop.f32.mrb[0].mxu0
      %1547 = vmatprep.mubr.bf16.mxu0 %v1209
      %1548 = vmatmul.mubr.bf16.gmra.mrb[0].mxu0 %v1208
      %v1549 = vpop.f32.mrb[0].mxu0
      %v1550 = vadd.f32 0.0, %v1549
      %v1551 = vpop.f32.mrb[0].mxu0
      %v1552 = vpop.f32.mrb[0].mxu0
      %v1553 = vadd.f32 0.0, %v1552
      %v1554 = vpop.f32.mrb[0].mxu0
      %1555 = vmatprep.mubr.bf16.mxu0 %v1212
      %1556 = vmatmul.mubr.bf16.gmra.mrb[0].mxu0 %v1211
      %v1557 = vpop.f32.mrb[0].mxu0
      %v1558 = vadd.f32 0.0, %v1557
      %v1559 = vpop.f32.mrb[0].mxu0
      %v1560 = vpop.f32.mrb[0].mxu0
      %v1561 = vadd.f32 0.0, %v1560
      %v1562 = vpop.f32.mrb[0].mxu0
      %1563 = vmatprep.mubr.bf16.mxu0 %v1215
      %1564 = vmatmul.mubr.bf16.gmra.mrb[0].mxu0 %v1214
      %v1565 = vpop.f32.mrb[0].mxu0
      %v1566 = vadd.f32 0.0, %v1565
      %v1567 = vpop.f32.mrb[0].mxu0
      %v1568 = vpop.f32.mrb[0].mxu0
      %v1569 = vadd.f32 0.0, %v1568
      %v1570 = vpop.f32.mrb[0].mxu0
      %1571 = vmatprep.mubr.bf16.mxu0 %v1218
      %1572 = vmatmul.mubr.bf16.gmra.mrb[0].mxu0 %v1217
      %v1573 = vpop.f32.mrb[0].mxu0
      %v1574 = vadd.f32 0.0, %v1573
      %v1575 = vpop.f32.mrb[0].mxu0
      %v1576 = vpop.f32.mrb[0].mxu0
      %v1577 = vadd.f32 0.0, %v1576
      %v1578 = vpop.f32.mrb[0].mxu0
      %1579 = vmatprep.mubr.bf16.mxu0 %v1221
      %1580 = vmatmul.mubr.bf16.gmra.mrb[0].mxu0 %v1220
      %v1581 = vpop.f32.mrb[0].mxu0
      %v1582 = vadd.f32 0.0, %v1581
      %v1583 = vpop.f32.mrb[0].mxu0
      %v1584 = vpop.f32.mrb[0].mxu0
      %v1585 = vadd.f32 0.0, %v1584
      %v1586 = vpop.f32.mrb[0].mxu0
      %1587 = vmatprep.mubr.bf16.mxu0 %v1224
      %1588 = vmatmul.mubr.bf16.gmra.mrb[0].mxu0 %v1223
      %v1589 = vpop.f32.mrb[0].mxu0
      %v1590 = vadd.f32 0.0, %v1589
      %v1591 = vpop.f32.mrb[0].mxu0
      %v1592 = vpop.f32.mrb[0].mxu0
      %v1593 = vadd.f32 0.0, %v1592
      %v1594 = vpop.f32.mrb[0].mxu0
      %1595 = vmatprep.mubr.bf16.mxu0 %v1227
      %1596 = vmatmul.mubr.bf16.gmra.mrb[0].mxu0 %v1226
      %v1597 = vpop.f32.mrb[0].mxu0
      %v1598 = vadd.f32 0.0, %v1597
      %v1599 = vpop.f32.mrb[0].mxu0
      %v1600 = vpop.f32.mrb[0].mxu0
      %v1601 = vadd.f32 0.0, %v1600
      %v1602 = vpop.f32.mrb[0].mxu0
      %1603 = vmatprep.mubr.bf16.mxu0 %v1230
      %1604 = vmatmul.mubr.bf16.gmra.mrb[0].mxu0 %v1229
      %v1605 = vpop.f32.mrb[0].mxu0
      %v1606 = vadd.f32 0.0, %v1605
      %v1607 = vpop.f32.mrb[0].mxu0
      %v1608 = vpop.f32.mrb[0].mxu0
      %v1609 = vadd.f32 0.0, %v1608
      %v1610 = vpop.f32.mrb[0].mxu0
      %1611 = vmatprep.mubr.bf16.mxu0 %v1233
      %1612 = vmatmul.mubr.bf16.gmra.mrb[0].mxu0 %v1232
      %v1613 = vpop.f32.mrb[0].mxu0
      %v1614 = vadd.f32 0.0, %v1613
      %v1615 = vpop.f32.mrb[0].mxu0
      %v1616 = vpop.f32.mrb[0].mxu0
      %v1617 = vadd.f32 0.0, %v1616
      %v1618 = vpop.f32.mrb[0].mxu0
      %1619 = vmatprep.mubr.bf16.mxu0 %v1236
      %1620 = vmatmul.mubr.bf16.gmra.mrb[0].mxu0 %v1235
      %v1621 = vpop.f32.mrb[0].mxu0
      %v1622 = vadd.f32 0.0, %v1621
      %v1623 = vpop.f32.mrb[0].mxu0
      %v1624 = vpop.f32.mrb[0].mxu0
      %v1625 = vadd.f32 0.0, %v1624
      %v1626 = vpop.f32.mrb[0].mxu0
      %1627 = vmatprep.mubr.bf16.mxu0 %v1239
      %1628 = vmatmul.mubr.bf16.gmra.mrb[0].mxu0 %v1238
      %v1629 = vpop.f32.mrb[0].mxu0
      %v1630 = vadd.f32 0.0, %v1629
      %v1631 = vpop.f32.mrb[0].mxu0
      %v1632 = vpop.f32.mrb[0].mxu0
      %v1633 = vadd.f32 0.0, %v1632
      %v1634 = vpop.f32.mrb[0].mxu0
      %1635 = vmatprep.mubr.bf16.mxu0 %v1242
      %1636 = vmatmul.mubr.bf16.gmra.mrb[0].mxu0 %v1241
      %v1637 = vpop.f32.mrb[0].mxu0
      %v1638 = vadd.f32 0.0, %v1637
      %v1639 = vpop.f32.mrb[0].mxu0
      %v1640 = vpop.f32.mrb[0].mxu0
      %v1641 = vadd.f32 0.0, %v1640
      %v1642 = vpop.f32.mrb[0].mxu0
      %1643 = vmatprep.mubr.bf16.mxu0 %v1245
      %1644 = vmatmul.mubr.bf16.gmra.mrb[0].mxu0 %v1244
      %v1645 = vpop.f32.mrb[0].mxu0
      %v1646 = vadd.f32 0.0, %v1645
      %v1647 = vpop.f32.mrb[0].mxu0
      %v1648 = vpop.f32.mrb[0].mxu0
      %v1649 = vadd.f32 0.0, %v1648
      %v1650 = vpop.f32.mrb[0].mxu0
      %1651 = vdwg.mxu0
      %1652 = vmatprep.subr.bf16.mxu0 0
      %1653 = vmatpush1.bf16.msra.mxu0 %v1459
      %1654 = vmatprep.subr.bf16.mxu0 0
      %1655 = vmatpush1.bf16.msra.mxu0 %v1460
      %1656 = vmatprep.subr.bf16.mxu0 0
      %1657 = vmatpush1.bf16.msra.mxu0 %v1461
      %1658 = vmatprep.subr.bf16.mxu0 0
      %1659 = vmatpush1.bf16.msra.mxu0 %v1462
      %1660 = vmatprep.subr.bf16.mxu0 0
      %1661 = vmatpush1.bf16.msra.mxu0 %v1463
      %1662 = vmatprep.subr.bf16.mxu0 0
      %1663 = vmatpush1.bf16.msra.mxu0 %v1464
      %1664 = vmatprep.subr.bf16.mxu0 0
      %1665 = vmatpush1.bf16.msra.mxu0 %v1465
      %1666 = vmatprep.subr.bf16.mxu0 0
      %1667 = vmatpush1.bf16.msra.mxu0 %v1466
      %1668 = vmatprep.subr.bf16.mxu0 0
      %1669 = vmatpush1.bf16.msra.mxu0 0
      %1670 = vmatprep.subr.bf16.mxu0 0
      %1671 = vmatpush1.bf16.msra.mxu0 0
      %1672 = vmatprep.subr.bf16.mxu0 0
      %1673 = vmatpush1.bf16.msra.mxu0 0
      %1674 = vmatprep.subr.bf16.mxu0 0
      %1675 = vmatpush1.bf16.msra.mxu0 0
      %1676 = vmatprep.subr.bf16.mxu0 0
      %1677 = vmatpush1.bf16.msra.mxu0 0
      %1678 = vmatprep.subr.bf16.mxu0 0
      %1679 = vmatpush1.bf16.msra.mxu0 0
      %1680 = vmatprep.subr.bf16.mxu0 0
      %1681 = vmatpush1.bf16.msra.mxu0 0
      %1682 = vmatprep.subr.bf16.mxu0 0
      %1683 = vmatpush1.bf16.msra.mxu0 0
      %1684 = vmatprep.mubr.bf16.mxu0 0
      %1685 = vmatmul.mubr.bf16.gmra.mrb[0].mxu0 %v1201
      %v1686 = vpop.f32.mrb[0].mxu0
      %v1687 = vadd.f32 %v1526, %v1686
      %v1688 = vpop.f32.mrb[0].mxu0
      %v1689 = vpop.f32.mrb[0].mxu0
      %v1690 = vadd.f32 %v1529, %v1689
      %v1691 = vpop.f32.mrb[0].mxu0
      %1692 = vmatprep.mubr.bf16.mxu0 0
      %1693 = vmatmul.mubr.bf16.gmra.mrb[0].mxu0 %v1204
      %v1694 = vpop.f32.mrb[0].mxu0
      %v1695 = vadd.f32 %v1534, %v1694
      %v1696 = vpop.f32.mrb[0].mxu0
      %v1697 = vpop.f32.mrb[0].mxu0
      %v1698 = vadd.f32 %v1537, %v1697
      %v1699 = vpop.f32.mrb[0].mxu0
      %1700 = vmatprep.mubr.bf16.mxu0 0
      %1701 = vmatmul.mubr.bf16.gmra.mrb[0].mxu0 %v1207
      %v1702 = vpop.f32.mrb[0].mxu0
      %v1703 = vadd.f32 %v1542, %v1702
      %v1704 = vpop.f32.mrb[0].mxu0
      %v1705 = vpop.f32.mrb[0].mxu0
      %v1706 = vadd.f32 %v1545, %v1705
      %v1707 = vpop.f32.mrb[0].mxu0
      %1708 = vmatprep.mubr.bf16.mxu0 0
      %1709 = vmatmul.mubr.bf16.gmra.mrb[0].mxu0 %v1210
      %v1710 = vpop.f32.mrb[0].mxu0
      %v1711 = vadd.f32 %v1550, %v1710
      %v1712 = vpop.f32.mrb[0].mxu0
      %v1713 = vpop.f32.mrb[0].mxu0
      %v1714 = vadd.f32 %v1553, %v1713
      %v1715 = vpop.f32.mrb[0].mxu0
      %1716 = vmatprep.mubr.bf16.mxu0 0
      %1717 = vmatmul.mubr.bf16.gmra.mrb[0].mxu0 %v1213
      %v1718 = vpop.f32.mrb[0].mxu0
      %v1719 = vadd.f32 %v1558, %v1718
      %v1720 = vpop.f32.mrb[0].mxu0
      %v1721 = vpop.f32.mrb[0].mxu0
      %v1722 = vadd.f32 %v1561, %v1721
      %v1723 = vpop.f32.mrb[0].mxu0
      %1724 = vmatprep.mubr.bf16.mxu0 0
      %1725 = vmatmul.mubr.bf16.gmra.mrb[0].mxu0 %v1216
      %v1726 = vpop.f32.mrb[0].mxu0
      %v1727 = vadd.f32 %v1566, %v1726
      %v1728 = vpop.f32.mrb[0].mxu0
      %v1729 = vpop.f32.mrb[0].mxu0
      %v1730 = vadd.f32 %v1569, %v1729
      %v1731 = vpop.f32.mrb[0].mxu0
      %1732 = vmatprep.mubr.bf16.mxu0 0
      %1733 = vmatmul.mubr.bf16.gmra.mrb[0].mxu0 %v1219
      %v1734 = vpop.f32.mrb[0].mxu0
      %v1735 = vadd.f32 %v1574, %v1734
      %v1736 = vpop.f32.mrb[0].mxu0
      %v1737 = vpop.f32.mrb[0].mxu0
      %v1738 = vadd.f32 %v1577, %v1737
      %v1739 = vpop.f32.mrb[0].mxu0
      %1740 = vmatprep.mubr.bf16.mxu0 0
      %1741 = vmatmul.mubr.bf16.gmra.mrb[0].mxu0 %v1222
      %v1742 = vpop.f32.mrb[0].mxu0
      %v1743 = vadd.f32 %v1582, %v1742
      %v1744 = vpop.f32.mrb[0].mxu0
      %v1745 = vpop.f32.mrb[0].mxu0
      %v1746 = vadd.f32 %v1585, %v1745
      %v1747 = vpop.f32.mrb[0].mxu0
      %1748 = vmatprep.mubr.bf16.mxu0 0
      %1749 = vmatmul.mubr.bf16.gmra.mrb[0].mxu0 %v1225
      %v1750 = vpop.f32.mrb[0].mxu0
      %v1751 = vadd.f32 %v1590, %v1750
      %v1752 = vpop.f32.mrb[0].mxu0
      %v1753 = vpop.f32.mrb[0].mxu0
      %v1754 = vadd.f32 %v1593, %v1753
      %v1755 = vpop.f32.mrb[0].mxu0
      %1756 = vmatprep.mubr.bf16.mxu0 0
      %1757 = vmatmul.mubr.bf16.gmra.mrb[0].mxu0 %v1228
      %v1758 = vpop.f32.mrb[0].mxu0
      %v1759 = vadd.f32 %v1598, %v1758
      %v1760 = vpop.f32.mrb[0].mxu0
      %v1761 = vpop.f32.mrb[0].mxu0
      %v1762 = vadd.f32 %v1601, %v1761
      %v1763 = vpop.f32.mrb[0].mxu0
      %1764 = vmatprep.mubr.bf16.mxu0 0
      %1765 = vmatmul.mubr.bf16.gmra.mrb[0].mxu0 %v1231
      %v1766 = vpop.f32.mrb[0].mxu0
      %v1767 = vadd.f32 %v1606, %v1766
      %v1768 = vpop.f32.mrb[0].mxu0
      %v1769 = vpop.f32.mrb[0].mxu0
      %v1770 = vadd.f32 %v1609, %v1769
      %v1771 = vpop.f32.mrb[0].mxu0
      %1772 = vmatprep.mubr.bf16.mxu0 0
      %1773 = vmatmul.mubr.bf16.gmra.mrb[0].mxu0 %v1234
      %v1774 = vpop.f32.mrb[0].mxu0
      %v1775 = vadd.f32 %v1614, %v1774
      %v1776 = vpop.f32.mrb[0].mxu0
      %v1777 = vpop.f32.mrb[0].mxu0
      %v1778 = vadd.f32 %v1617, %v1777
      %v1779 = vpop.f32.mrb[0].mxu0
      %1780 = vmatprep.mubr.bf16.mxu0 0
      %1781 = vmatmul.mubr.bf16.gmra.mrb[0].mxu0 %v1237
      %v1782 = vpop.f32.mrb[0].mxu0
      %v1783 = vadd.f32 %v1622, %v1782
      %v1784 = vpop.f32.mrb[0].mxu0
      %v1785 = vpop.f32.mrb[0].mxu0
      %v1786 = vadd.f32 %v1625, %v1785
      %v1787 = vpop.f32.mrb[0].mxu0
      %1788 = vmatprep.mubr.bf16.mxu0 0
      %1789 = vmatmul.mubr.bf16.gmra.mrb[0].mxu0 %v1240
      %v1790 = vpop.f32.mrb[0].mxu0
      %v1791 = vadd.f32 %v1630, %v1790
      %v1792 = vpop.f32.mrb[0].mxu0
      %v1793 = vpop.f32.mrb[0].mxu0
      %v1794 = vadd.f32 %v1633, %v1793
      %v1795 = vpop.f32.mrb[0].mxu0
      %1796 = vmatprep.mubr.bf16.mxu0 0
      %1797 = vmatmul.mubr.bf16.gmra.mrb[0].mxu0 %v1243
      %v1798 = vpop.f32.mrb[0].mxu0
      %v1799 = vadd.f32 %v1638, %v1798
      %v1800 = vpop.f32.mrb[0].mxu0
      %v1801 = vpop.f32.mrb[0].mxu0
      %v1802 = vadd.f32 %v1641, %v1801
      %v1803 = vpop.f32.mrb[0].mxu0
      %1804 = vmatprep.mubr.bf16.mxu0 0
      %1805 = vmatmul.mubr.bf16.gmra.mrb[0].mxu0 %v1246
      %v1806 = vpop.f32.mrb[0].mxu0
      %v1807 = vadd.f32 %v1646, %v1806
      %v1808 = vpop.f32.mrb[0].mxu0
      %v1809 = vpop.f32.mrb[0].mxu0
      %v1810 = vadd.f32 %v1649, %v1809
      %v1811 = vpop.f32.mrb[0].mxu0
      %1812 = vdwg.mxu0
      %v1861 = vunpack.c.l.b16 %v1250
      %v1862 = vunpack.c.l.b16 %v1251
      %v1863 = vunpack.c.l.b16 %v1252
      %v1864 = vunpack.c.l.b16 %v1253
      %v1865 = vunpack.c.l.b16 %v1254
      %v1866 = vunpack.c.l.b16 %v1255
      %v1867 = vunpack.c.l.b16 %v1256
      %v1868 = vunpack.c.l.b16 %v1257
      %v1869 = vunpack.c.l.b16 %v1258
      %v1870 = vunpack.c.l.b16 %v1259
      %v1871 = vunpack.c.l.b16 %v1260
      %v1872 = vunpack.c.l.b16 %v1261
      %v1873 = vunpack.c.l.b16 %v1262
      %v1874 = vunpack.c.l.b16 %v1263
      %v1875 = vunpack.c.l.b16 %v1264
      %v1876 = vunpack.c.l.b16 %v1265
      %v1877 = vunpack.c.l.b16 %v1266
      %v1878 = vunpack.c.l.b16 %v1267
      %v1879 = vunpack.c.l.b16 %v1268
      %v1880 = vunpack.c.l.b16 %v1269
      %v1881 = vunpack.c.l.b16 %v1270
      %v1882 = vunpack.c.l.b16 %v1271
      %v1883 = vunpack.c.l.b16 %v1272
      %v1884 = vunpack.c.l.b16 %v1273
      %v1885 = vunpack.c.l.b16 %v1274
      %v1886 = vunpack.c.l.b16 %v1275
      %v1887 = vunpack.c.l.b16 %v1276
      %v1888 = vunpack.c.l.b16 %v1277
      %v1889 = vunpack.c.l.b16 %v1278
      %v1890 = vunpack.c.l.b16 %v1279
      %v1891 = vunpack.c.l.b16 %v1280
      %v1892 = vunpack.c.l.b16 %v1281
      %v1893 = vunpack.c.l.b16 %v1282
      %v1894 = vunpack.c.l.b16 %v1283
      %v1895 = vunpack.c.l.b16 %v1284
      %v1896 = vunpack.c.l.b16 %v1285
      %v1897 = vunpack.c.l.b16 %v1286
      %v1898 = vunpack.c.l.b16 %v1287
      %v1899 = vunpack.c.l.b16 %v1288
      %v1900 = vunpack.c.l.b16 %v1289
      %v1901 = vunpack.c.l.b16 %v1290
      %v1902 = vunpack.c.l.b16 %v1291
      %v1903 = vunpack.c.l.b16 %v1292
      %v1904 = vunpack.c.l.b16 %v1293
      %v1905 = vunpack.c.l.b16 %v1294
      %v1906 = vunpack.c.l.b16 %v1295
      %v1907 = vunpack.c.l.b16 %v1296
      %v1908 = vunpack.c.l.b16 %v1297
      %v1909 = vpack.c.b16 %v1862, %v1861
      %v1910 = vpack.c.b16 %v1864, %v1863
      %v1911 = vpack.c.b16 %v1866, %v1865
      %v1912 = vpack.c.b16 %v1868, %v1867
      %v1913 = vpack.c.b16 %v1870, %v1869
      %v1914 = vpack.c.b16 %v1872, %v1871
      %v1915 = vpack.c.b16 %v1874, %v1873
      %v1916 = vpack.c.b16 %v1876, %v1875
      %v1917 = vpack.c.b16 %v1878, %v1877
      %v1918 = vpack.c.b16 %v1880, %v1879
      %v1919 = vpack.c.b16 %v1882, %v1881
      %v1920 = vpack.c.b16 %v1884, %v1883
      %v1921 = vpack.c.b16 %v1886, %v1885
      %v1922 = vpack.c.b16 %v1888, %v1887
      %v1923 = vpack.c.b16 %v1890, %v1889
      %v1924 = vpack.c.b16 %v1892, %v1891
      %v1925 = vpack.c.b16 %v1894, %v1893
      %v1926 = vpack.c.b16 %v1896, %v1895
      %v1927 = vpack.c.b16 %v1898, %v1897
      %v1928 = vpack.c.b16 %v1900, %v1899
      %v1929 = vpack.c.b16 %v1902, %v1901
      %v1930 = vpack.c.b16 %v1904, %v1903
      %v1931 = vpack.c.b16 %v1906, %v1905
      %v1932 = vpack.c.b16 %v1908, %v1907
      %1957 = vmatprep.subr.bf16.mxu0 0
      %1958 = vmatpush1.bf16.msra.mxu0 %v1909
      %1959 = vmatprep.subr.bf16.mxu0 0
      %1960 = vmatpush1.bf16.msra.mxu0 %v1910
      %1961 = vmatprep.subr.bf16.mxu0 0
      %1962 = vmatpush1.bf16.msra.mxu0 %v1911
      %1963 = vmatprep.subr.bf16.mxu0 0
      %1964 = vmatpush1.bf16.msra.mxu0 %v1912
      %1965 = vmatprep.subr.bf16.mxu0 0
      %1966 = vmatpush1.bf16.msra.mxu0 %v1913
      %1967 = vmatprep.subr.bf16.mxu0 0
      %1968 = vmatpush1.bf16.msra.mxu0 %v1914
      %1969 = vmatprep.subr.bf16.mxu0 0
      %1970 = vmatpush1.bf16.msra.mxu0 %v1915
      %1971 = vmatprep.subr.bf16.mxu0 0
      %1972 = vmatpush1.bf16.msra.mxu0 %v1916
      %1973 = vmatprep.subr.bf16.mxu0 0
      %1974 = vmatpush1.bf16.msra.mxu0 %v1917
      %1975 = vmatprep.subr.bf16.mxu0 0
      %1976 = vmatpush1.bf16.msra.mxu0 %v1918
      %1977 = vmatprep.subr.bf16.mxu0 0
      %1978 = vmatpush1.bf16.msra.mxu0 %v1919
      %1979 = vmatprep.subr.bf16.mxu0 0
      %1980 = vmatpush1.bf16.msra.mxu0 %v1920
      %1981 = vmatprep.subr.bf16.mxu0 0
      %1982 = vmatpush1.bf16.msra.mxu0 %v1921
      %1983 = vmatprep.subr.bf16.mxu0 0
      %1984 = vmatpush1.bf16.msra.mxu0 %v1922
      %1985 = vmatprep.subr.bf16.mxu0 0
      %1986 = vmatpush1.bf16.msra.mxu0 %v1923
      %1987 = vmatprep.subr.bf16.mxu0 0
      %1988 = vmatpush1.bf16.msra.mxu0 %v1924
      %1989 = vmatprep.mubr.bf16.mxu0 %v1197
      %1990 = vmatmul.mubr.bf16.gmra.mrb[0].mxu0 %v1196
      %v1991 = vpop.f32.mrb[0].mxu0
      %v1992 = vadd.f32 %v1687, %v1991
      %v1993 = vpop.f32.mrb[0].mxu0
      %v1994 = vpop.f32.mrb[0].mxu0
      %v1995 = vadd.f32 %v1690, %v1994
      %v1996 = vpop.f32.mrb[0].mxu0
      %1997 = vmatprep.mubr.bf16.mxu0 %v1200
      %1998 = vmatmul.mubr.bf16.gmra.mrb[0].mxu0 %v1199
      %v1999 = vpop.f32.mrb[0].mxu0
      %v2000 = vadd.f32 %v1695, %v1999
      %v2001 = vpop.f32.mrb[0].mxu0
      %v2002 = vpop.f32.mrb[0].mxu0
      %v2003 = vadd.f32 %v1698, %v2002
      %v2004 = vpop.f32.mrb[0].mxu0
      %2005 = vmatprep.mubr.bf16.mxu0 %v1203
      %2006 = vmatmul.mubr.bf16.gmra.mrb[0].mxu0 %v1202
      %v2007 = vpop.f32.mrb[0].mxu0
      %v2008 = vadd.f32 %v1703, %v2007
      %v2009 = vpop.f32.mrb[0].mxu0
      %v2010 = vpop.f32.mrb[0].mxu0
      %v2011 = vadd.f32 %v1706, %v2010
      %v2012 = vpop.f32.mrb[0].mxu0
      %2013 = vmatprep.mubr.bf16.mxu0 %v1206
      %2014 = vmatmul.mubr.bf16.gmra.mrb[0].mxu0 %v1205
      %v2015 = vpop.f32.mrb[0].mxu0
      %v2016 = vadd.f32 %v1711, %v2015
      %v2017 = vpop.f32.mrb[0].mxu0
      %v2018 = vpop.f32.mrb[0].mxu0
      %v2019 = vadd.f32 %v1714, %v2018
      %v2020 = vpop.f32.mrb[0].mxu0
      %2021 = vmatprep.mubr.bf16.mxu0 %v1209
      %2022 = vmatmul.mubr.bf16.gmra.mrb[0].mxu0 %v1208
      %v2023 = vpop.f32.mrb[0].mxu0
      %v2024 = vadd.f32 %v1719, %v2023
      %v2025 = vpop.f32.mrb[0].mxu0
      %v2026 = vpop.f32.mrb[0].mxu0
      %v2027 = vadd.f32 %v1722, %v2026
      %v2028 = vpop.f32.mrb[0].mxu0
      %2029 = vmatprep.mubr.bf16.mxu0 %v1212
      %2030 = vmatmul.mubr.bf16.gmra.mrb[0].mxu0 %v1211
      %v2031 = vpop.f32.mrb[0].mxu0
      %v2032 = vadd.f32 %v1727, %v2031
      %v2033 = vpop.f32.mrb[0].mxu0
      %v2034 = vpop.f32.mrb[0].mxu0
      %v2035 = vadd.f32 %v1730, %v2034
      %v2036 = vpop.f32.mrb[0].mxu0
      %2037 = vmatprep.mubr.bf16.mxu0 %v1215
      %2038 = vmatmul.mubr.bf16.gmra.mrb[0].mxu0 %v1214
      %v2039 = vpop.f32.mrb[0].mxu0
      %v2040 = vadd.f32 %v1735, %v2039
      %v2041 = vpop.f32.mrb[0].mxu0
      %v2042 = vpop.f32.mrb[0].mxu0
      %v2043 = vadd.f32 %v1738, %v2042
      %v2044 = vpop.f32.mrb[0].mxu0
      %2045 = vmatprep.mubr.bf16.mxu0 %v1218
      %2046 = vmatmul.mubr.bf16.gmra.mrb[0].mxu0 %v1217
      %v2047 = vpop.f32.mrb[0].mxu0
      %v2048 = vadd.f32 %v1743, %v2047
      %v2049 = vpop.f32.mrb[0].mxu0
      %v2050 = vpop.f32.mrb[0].mxu0
      %v2051 = vadd.f32 %v1746, %v2050
      %v2052 = vpop.f32.mrb[0].mxu0
      %2053 = vmatprep.mubr.bf16.mxu0 %v1221
      %2054 = vmatmul.mubr.bf16.gmra.mrb[0].mxu0 %v1220
      %v2055 = vpop.f32.mrb[0].mxu0
      %v2056 = vadd.f32 %v1751, %v2055
      %v2057 = vpop.f32.mrb[0].mxu0
      %v2058 = vpop.f32.mrb[0].mxu0
      %v2059 = vadd.f32 %v1754, %v2058
      %v2060 = vpop.f32.mrb[0].mxu0
      %2061 = vmatprep.mubr.bf16.mxu0 %v1224
      %2062 = vmatmul.mubr.bf16.gmra.mrb[0].mxu0 %v1223
      %v2063 = vpop.f32.mrb[0].mxu0
      %v2064 = vadd.f32 %v1759, %v2063
      %v2065 = vpop.f32.mrb[0].mxu0
      %v2066 = vpop.f32.mrb[0].mxu0
      %v2067 = vadd.f32 %v1762, %v2066
      %v2068 = vpop.f32.mrb[0].mxu0
      %2069 = vmatprep.mubr.bf16.mxu0 %v1227
      %2070 = vmatmul.mubr.bf16.gmra.mrb[0].mxu0 %v1226
      %v2071 = vpop.f32.mrb[0].mxu0
      %v2072 = vadd.f32 %v1767, %v2071
      %v2073 = vpop.f32.mrb[0].mxu0
      %v2074 = vpop.f32.mrb[0].mxu0
      %v2075 = vadd.f32 %v1770, %v2074
      %v2076 = vpop.f32.mrb[0].mxu0
      %2077 = vmatprep.mubr.bf16.mxu0 %v1230
      %2078 = vmatmul.mubr.bf16.gmra.mrb[0].mxu0 %v1229
      %v2079 = vpop.f32.mrb[0].mxu0
      %v2080 = vadd.f32 %v1775, %v2079
      %v2081 = vpop.f32.mrb[0].mxu0
      %v2082 = vpop.f32.mrb[0].mxu0
      %v2083 = vadd.f32 %v1778, %v2082
      %v2084 = vpop.f32.mrb[0].mxu0
      %2085 = vmatprep.mubr.bf16.mxu0 %v1233
      %2086 = vmatmul.mubr.bf16.gmra.mrb[0].mxu0 %v1232
      %v2087 = vpop.f32.mrb[0].mxu0
      %v2088 = vadd.f32 %v1783, %v2087
      %v2089 = vpop.f32.mrb[0].mxu0
      %v2090 = vpop.f32.mrb[0].mxu0
      %v2091 = vadd.f32 %v1786, %v2090
      %v2092 = vpop.f32.mrb[0].mxu0
      %2093 = vmatprep.mubr.bf16.mxu0 %v1236
      %2094 = vmatmul.mubr.bf16.gmra.mrb[0].mxu0 %v1235
      %v2095 = vpop.f32.mrb[0].mxu0
      %v2096 = vadd.f32 %v1791, %v2095
      %v2097 = vpop.f32.mrb[0].mxu0
      %v2098 = vpop.f32.mrb[0].mxu0
      %v2099 = vadd.f32 %v1794, %v2098
      %v2100 = vpop.f32.mrb[0].mxu0
      %2101 = vmatprep.mubr.bf16.mxu0 %v1239
      %2102 = vmatmul.mubr.bf16.gmra.mrb[0].mxu0 %v1238
      %v2103 = vpop.f32.mrb[0].mxu0
      %v2104 = vadd.f32 %v1799, %v2103
      %v2105 = vpop.f32.mrb[0].mxu0
      %v2106 = vpop.f32.mrb[0].mxu0
      %v2107 = vadd.f32 %v1802, %v2106
      %v2108 = vpop.f32.mrb[0].mxu0
      %2109 = vmatprep.mubr.bf16.mxu0 %v1242
      %2110 = vmatmul.mubr.bf16.gmra.mrb[0].mxu0 %v1241
      %v2111 = vpop.f32.mrb[0].mxu0
      %v2112 = vadd.f32 %v1807, %v2111
      %v2113 = vpop.f32.mrb[0].mxu0
      %v2114 = vpop.f32.mrb[0].mxu0
      %v2115 = vadd.f32 %v1810, %v2114
      %v2116 = vpop.f32.mrb[0].mxu0
      %2117 = vdwg.mxu0
      %2118 = vmatprep.subr.bf16.mxu0 0
      %2119 = vmatpush1.bf16.msra.mxu0 %v1925
      %2120 = vmatprep.subr.bf16.mxu0 0
      %2121 = vmatpush1.bf16.msra.mxu0 %v1926
      %2122 = vmatprep.subr.bf16.mxu0 0
      %2123 = vmatpush1.bf16.msra.mxu0 %v1927
      %2124 = vmatprep.subr.bf16.mxu0 0
      %2125 = vmatpush1.bf16.msra.mxu0 %v1928
      %2126 = vmatprep.subr.bf16.mxu0 0
      %2127 = vmatpush1.bf16.msra.mxu0 %v1929
      %2128 = vmatprep.subr.bf16.mxu0 0
      %2129 = vmatpush1.bf16.msra.mxu0 %v1930
      %2130 = vmatprep.subr.bf16.mxu0 0
      %2131 = vmatpush1.bf16.msra.mxu0 %v1931
      %2132 = vmatprep.subr.bf16.mxu0 0
      %2133 = vmatpush1.bf16.msra.mxu0 %v1932
      %2134 = vmatprep.subr.bf16.mxu0 0
      %2135 = vmatpush1.bf16.msra.mxu0 0
      %2136 = vmatprep.subr.bf16.mxu0 0
      %2137 = vmatpush1.bf16.msra.mxu0 0
      %2138 = vmatprep.subr.bf16.mxu0 0
      %2139 = vmatpush1.bf16.msra.mxu0 0
      %2140 = vmatprep.subr.bf16.mxu0 0
      %2141 = vmatpush1.bf16.msra.mxu0 0
      %2142 = vmatprep.subr.bf16.mxu0 0
      %2143 = vmatpush1.bf16.msra.mxu0 0
      %2144 = vmatprep.subr.bf16.mxu0 0
      %2145 = vmatpush1.bf16.msra.mxu0 0
      %2146 = vmatprep.subr.bf16.mxu0 0
      %2147 = vmatpush1.bf16.msra.mxu0 0
      %2148 = vmatprep.subr.bf16.mxu0 0
      %2149 = vmatpush1.bf16.msra.mxu0 0
      %2150 = vmatprep.mubr.bf16.mxu0 0
      %2151 = vmatmul.mubr.bf16.gmra.mrb[0].mxu0 %v1198
      %v2152 = vpop.f32.mrb[0].mxu0
      %v2153 = vadd.f32 %v1992, %v2152
      %v2154 = vpop.f32.mrb[0].mxu0
      %v2155 = vpop.f32.mrb[0].mxu0
      %v2156 = vadd.f32 %v1995, %v2155
      %v2157 = vpop.f32.mrb[0].mxu0
      %2158 = vmatprep.mubr.bf16.mxu0 0
      %2159 = vmatmul.mubr.bf16.gmra.mrb[0].mxu0 %v1201
      %v2160 = vpop.f32.mrb[0].mxu0
      %v2161 = vadd.f32 %v2000, %v2160
      %v2162 = vpop.f32.mrb[0].mxu0
      %v2163 = vpop.f32.mrb[0].mxu0
      %v2164 = vadd.f32 %v2003, %v2163
      %v2165 = vpop.f32.mrb[0].mxu0
      %2166 = vmatprep.mubr.bf16.mxu0 0
      %2167 = vmatmul.mubr.bf16.gmra.mrb[0].mxu0 %v1204
      %v2168 = vpop.f32.mrb[0].mxu0
      %v2169 = vadd.f32 %v2008, %v2168
      %v2170 = vpop.f32.mrb[0].mxu0
      %v2171 = vpop.f32.mrb[0].mxu0
      %v2172 = vadd.f32 %v2011, %v2171
      %v2173 = vpop.f32.mrb[0].mxu0
      %2174 = vmatprep.mubr.bf16.mxu0 0
      %2175 = vmatmul.mubr.bf16.gmra.mrb[0].mxu0 %v1207
      %v2176 = vpop.f32.mrb[0].mxu0
      %v2177 = vadd.f32 %v2016, %v2176
      %v2178 = vpop.f32.mrb[0].mxu0
      %v2179 = vpop.f32.mrb[0].mxu0
      %v2180 = vadd.f32 %v2019, %v2179
      %v2181 = vpop.f32.mrb[0].mxu0
      %2182 = vmatprep.mubr.bf16.mxu0 0
      %2183 = vmatmul.mubr.bf16.gmra.mrb[0].mxu0 %v1210
      %v2184 = vpop.f32.mrb[0].mxu0
      %v2185 = vadd.f32 %v2024, %v2184
      %v2186 = vpop.f32.mrb[0].mxu0
      %v2187 = vpop.f32.mrb[0].mxu0
      %v2188 = vadd.f32 %v2027, %v2187
      %v2189 = vpop.f32.mrb[0].mxu0
      %2190 = vmatprep.mubr.bf16.mxu0 0
      %2191 = vmatmul.mubr.bf16.gmra.mrb[0].mxu0 %v1213
      %v2192 = vpop.f32.mrb[0].mxu0
      %v2193 = vadd.f32 %v2032, %v2192
      %v2194 = vpop.f32.mrb[0].mxu0
      %v2195 = vpop.f32.mrb[0].mxu0
      %v2196 = vadd.f32 %v2035, %v2195
      %v2197 = vpop.f32.mrb[0].mxu0
      %2198 = vmatprep.mubr.bf16.mxu0 0
      %2199 = vmatmul.mubr.bf16.gmra.mrb[0].mxu0 %v1216
      %v2200 = vpop.f32.mrb[0].mxu0
      %v2201 = vadd.f32 %v2040, %v2200
      %v2202 = vpop.f32.mrb[0].mxu0
      %v2203 = vpop.f32.mrb[0].mxu0
      %v2204 = vadd.f32 %v2043, %v2203
      %v2205 = vpop.f32.mrb[0].mxu0
      %2206 = vmatprep.mubr.bf16.mxu0 0
      %2207 = vmatmul.mubr.bf16.gmra.mrb[0].mxu0 %v1219
      %v2208 = vpop.f32.mrb[0].mxu0
      %v2209 = vadd.f32 %v2048, %v2208
      %v2210 = vpop.f32.mrb[0].mxu0
      %v2211 = vpop.f32.mrb[0].mxu0
      %v2212 = vadd.f32 %v2051, %v2211
      %v2213 = vpop.f32.mrb[0].mxu0
      %2214 = vmatprep.mubr.bf16.mxu0 0
      %2215 = vmatmul.mubr.bf16.gmra.mrb[0].mxu0 %v1222
      %v2216 = vpop.f32.mrb[0].mxu0
      %v2217 = vadd.f32 %v2056, %v2216
      %v2218 = vpop.f32.mrb[0].mxu0
      %v2219 = vpop.f32.mrb[0].mxu0
      %v2220 = vadd.f32 %v2059, %v2219
      %v2221 = vpop.f32.mrb[0].mxu0
      %2222 = vmatprep.mubr.bf16.mxu0 0
      %2223 = vmatmul.mubr.bf16.gmra.mrb[0].mxu0 %v1225
      %v2224 = vpop.f32.mrb[0].mxu0
      %v2225 = vadd.f32 %v2064, %v2224
      %v2226 = vpop.f32.mrb[0].mxu0
      %v2227 = vpop.f32.mrb[0].mxu0
      %v2228 = vadd.f32 %v2067, %v2227
      %v2229 = vpop.f32.mrb[0].mxu0
      %2230 = vmatprep.mubr.bf16.mxu0 0
      %2231 = vmatmul.mubr.bf16.gmra.mrb[0].mxu0 %v1228
      %v2232 = vpop.f32.mrb[0].mxu0
      %v2233 = vadd.f32 %v2072, %v2232
      %v2234 = vpop.f32.mrb[0].mxu0
      %v2235 = vpop.f32.mrb[0].mxu0
      %v2236 = vadd.f32 %v2075, %v2235
      %v2237 = vpop.f32.mrb[0].mxu0
      %2238 = vmatprep.mubr.bf16.mxu0 0
      %2239 = vmatmul.mubr.bf16.gmra.mrb[0].mxu0 %v1231
      %v2240 = vpop.f32.mrb[0].mxu0
      %v2241 = vadd.f32 %v2080, %v2240
      %v2242 = vpop.f32.mrb[0].mxu0
      %v2243 = vpop.f32.mrb[0].mxu0
      %v2244 = vadd.f32 %v2083, %v2243
      %v2245 = vpop.f32.mrb[0].mxu0
      %2246 = vmatprep.mubr.bf16.mxu0 0
      %2247 = vmatmul.mubr.bf16.gmra.mrb[0].mxu0 %v1234
      %v2248 = vpop.f32.mrb[0].mxu0
      %v2249 = vadd.f32 %v2088, %v2248
      %v2250 = vpop.f32.mrb[0].mxu0
      %v2251 = vpop.f32.mrb[0].mxu0
      %v2252 = vadd.f32 %v2091, %v2251
      %v2253 = vpop.f32.mrb[0].mxu0
      %2254 = vmatprep.mubr.bf16.mxu0 0
      %2255 = vmatmul.mubr.bf16.gmra.mrb[0].mxu0 %v1237
      %v2256 = vpop.f32.mrb[0].mxu0
      %v2257 = vadd.f32 %v2096, %v2256
      %v2258 = vpop.f32.mrb[0].mxu0
      %v2259 = vpop.f32.mrb[0].mxu0
      %v2260 = vadd.f32 %v2099, %v2259
      %v2261 = vpop.f32.mrb[0].mxu0
      %2262 = vmatprep.mubr.bf16.mxu0 0
      %2263 = vmatmul.mubr.bf16.gmra.mrb[0].mxu0 %v1240
      %v2264 = vpop.f32.mrb[0].mxu0
      %v2265 = vadd.f32 %v2104, %v2264
      %v2266 = vpop.f32.mrb[0].mxu0
      %v2267 = vpop.f32.mrb[0].mxu0
      %v2268 = vadd.f32 %v2107, %v2267
      %v2269 = vpop.f32.mrb[0].mxu0
      %2270 = vmatprep.mubr.bf16.mxu0 0
      %2271 = vmatmul.mubr.bf16.gmra.mrb[0].mxu0 %v1243
      %v2272 = vpop.f32.mrb[0].mxu0
      %v2273 = vadd.f32 %v2112, %v2272
      %v2274 = vpop.f32.mrb[0].mxu0
      %v2275 = vpop.f32.mrb[0].mxu0
      %v2276 = vadd.f32 %v2115, %v2275
      %v2277 = vpop.f32.mrb[0].mxu0
      %2278 = vdwg.mxu0
      %s2279 = scalar_lea.vmem %s4, 384
      %v2280 = vld [vmem:[%s2279] sm:$0xf]
      %v2281 = vld [vmem:[%s2279 + $0x4] sm:$0xf]
      %v2282 = vld [vmem:[%s2279 + $0x8] sm:$0xf]
      %v2283 = vld [vmem:[%s2279 + $0xc] sm:$0xf]
      %v2284 = vld [vmem:[%s2279 + $0x10] sm:$0xf]
      %v2285 = vld [vmem:[%s2279 + $0x14] sm:$0xf]
      %v2286 = vld [vmem:[%s2279 + $0x18] sm:$0xf]
      %v2287 = vld [vmem:[%s2279 + $0x1c] sm:$0xf]
      %v2288 = vld [vmem:[%s2279 + $0x20] sm:$0xf]
      %v2289 = vld [vmem:[%s2279 + $0x24] sm:$0xf]
      %v2290 = vld [vmem:[%s2279 + $0x28] sm:$0xf]
      %v2291 = vld [vmem:[%s2279 + $0x2c] sm:$0xf]
      %v2292 = vld [vmem:[%s2279 + $0x30] sm:$0xf]
      %v2293 = vld [vmem:[%s2279 + $0x34] sm:$0xf]
      %v2294 = vld [vmem:[%s2279 + $0x38] sm:$0xf]
      %v2295 = vld [vmem:[%s2279 + $0x3c] sm:$0xf]
      %v2296 = vld [vmem:[%s2279 + $0x40] sm:$0xf]
      %v2297 = vld [vmem:[%s2279 + $0x44] sm:$0xf]
      %v2298 = vld [vmem:[%s2279 + $0x48] sm:$0xf]
      %v2299 = vld [vmem:[%s2279 + $0x4c] sm:$0xf]
      %v2300 = vld [vmem:[%s2279 + $0x50] sm:$0xf]
      %v2301 = vld [vmem:[%s2279 + $0x54] sm:$0xf]
      %v2302 = vld [vmem:[%s2279 + $0x58] sm:$0xf]
      %v2303 = vld [vmem:[%s2279 + $0x5c] sm:$0xf]
      %v2304 = vld [vmem:[%s2279 + $0x60] sm:$0xf]
      %v2305 = vld [vmem:[%s2279 + $0x64] sm:$0xf]
      %v2306 = vld [vmem:[%s2279 + $0x68] sm:$0xf]
      %v2307 = vld [vmem:[%s2279 + $0x6c] sm:$0xf]
      %v2308 = vld [vmem:[%s2279 + $0x70] sm:$0xf]
      %v2309 = vld [vmem:[%s2279 + $0x74] sm:$0xf]
      %v2310 = vld [vmem:[%s2279 + $0x78] sm:$0xf]
      %v2311 = vld [vmem:[%s2279 + $0x7c] sm:$0xf]
      %v2312 = vld [vmem:[%s2279 + $0x80] sm:$0xf]
      %v2313 = vld [vmem:[%s2279 + $0x84] sm:$0xf]
      %v2314 = vld [vmem:[%s2279 + $0x88] sm:$0xf]
      %v2315 = vld [vmem:[%s2279 + $0x8c] sm:$0xf]
      %v2316 = vld [vmem:[%s2279 + $0x90] sm:$0xf]
      %v2317 = vld [vmem:[%s2279 + $0x94] sm:$0xf]
      %v2318 = vld [vmem:[%s2279 + $0x98] sm:$0xf]
      %v2319 = vld [vmem:[%s2279 + $0x9c] sm:$0xf]
      %v2320 = vld [vmem:[%s2279 + $0xa0] sm:$0xf]
      %v2321 = vld [vmem:[%s2279 + $0xa4] sm:$0xf]
      %v2322 = vld [vmem:[%s2279 + $0xa8] sm:$0xf]
      %v2323 = vld [vmem:[%s2279 + $0xac] sm:$0xf]
      %v2324 = vld [vmem:[%s2279 + $0xb0] sm:$0xf]
      %v2325 = vld [vmem:[%s2279 + $0xb4] sm:$0xf]
      %v2326 = vld [vmem:[%s2279 + $0xb8] sm:$0xf]
      %v2327 = vld [vmem:[%s2279 + $0xbc] sm:$0xf]
      %v2376 = vunpack.c.l.b16 %v2280
      %v2377 = vunpack.c.l.b16 %v2281
      %v2378 = vunpack.c.l.b16 %v2282
      %v2379 = vunpack.c.l.b16 %v2283
      %v2380 = vunpack.c.l.b16 %v2284
      %v2381 = vunpack.c.l.b16 %v2285
      %v2382 = vunpack.c.l.b16 %v2286
      %v2383 = vunpack.c.l.b16 %v2287
      %v2384 = vunpack.c.l.b16 %v2288
      %v2385 = vunpack.c.l.b16 %v2289
      %v2386 = vunpack.c.l.b16 %v2290
      %v2387 = vunpack.c.l.b16 %v2291
      %v2388 = vunpack.c.l.b16 %v2292
      %v2389 = vunpack.c.l.b16 %v2293
      %v2390 = vunpack.c.l.b16 %v2294
      %v2391 = vunpack.c.l.b16 %v2295
      %v2392 = vunpack.c.l.b16 %v2296
      %v2393 = vunpack.c.l.b16 %v2297
      %v2394 = vunpack.c.l.b16 %v2298
      %v2395 = vunpack.c.l.b16 %v2299
      %v2396 = vunpack.c.l.b16 %v2300
      %v2397 = vunpack.c.l.b16 %v2301
      %v2398 = vunpack.c.l.b16 %v2302
      %v2399 = vunpack.c.l.b16 %v2303
      %v2400 = vunpack.c.l.b16 %v2304
      %v2401 = vunpack.c.l.b16 %v2305
      %v2402 = vunpack.c.l.b16 %v2306
      %v2403 = vunpack.c.l.b16 %v2307
      %v2404 = vunpack.c.l.b16 %v2308
      %v2405 = vunpack.c.l.b16 %v2309
      %v2406 = vunpack.c.l.b16 %v2310
      %v2407 = vunpack.c.l.b16 %v2311
      %v2408 = vunpack.c.l.b16 %v2312
      %v2409 = vunpack.c.l.b16 %v2313
      %v2410 = vunpack.c.l.b16 %v2314
      %v2411 = vunpack.c.l.b16 %v2315
      %v2412 = vunpack.c.l.b16 %v2316
      %v2413 = vunpack.c.l.b16 %v2317
      %v2414 = vunpack.c.l.b16 %v2318
      %v2415 = vunpack.c.l.b16 %v2319
      %v2416 = vunpack.c.l.b16 %v2320
      %v2417 = vunpack.c.l.b16 %v2321
      %v2418 = vunpack.c.l.b16 %v2322
      %v2419 = vunpack.c.l.b16 %v2323
      %v2420 = vunpack.c.l.b16 %v2324
      %v2421 = vunpack.c.l.b16 %v2325
      %v2422 = vunpack.c.l.b16 %v2326
      %v2423 = vunpack.c.l.b16 %v2327
      %v2424 = vpack.c.b16 %v2377, %v2376
      %v2425 = vpack.c.b16 %v2379, %v2378
      %v2426 = vpack.c.b16 %v2381, %v2380
      %v2427 = vpack.c.b16 %v2383, %v2382
      %v2428 = vpack.c.b16 %v2385, %v2384
      %v2429 = vpack.c.b16 %v2387, %v2386
      %v2430 = vpack.c.b16 %v2389, %v2388
      %v2431 = vpack.c.b16 %v2391, %v2390
      %v2432 = vpack.c.b16 %v2393, %v2392
      %v2433 = vpack.c.b16 %v2395, %v2394
      %v2434 = vpack.c.b16 %v2397, %v2396
      %v2435 = vpack.c.b16 %v2399, %v2398
      %v2436 = vpack.c.b16 %v2401, %v2400
      %v2437 = vpack.c.b16 %v2403, %v2402
      %v2438 = vpack.c.b16 %v2405, %v2404
      %v2439 = vpack.c.b16 %v2407, %v2406
      %v2440 = vpack.c.b16 %v2409, %v2408
      %v2441 = vpack.c.b16 %v2411, %v2410
      %v2442 = vpack.c.b16 %v2413, %v2412
      %v2443 = vpack.c.b16 %v2415, %v2414
      %v2444 = vpack.c.b16 %v2417, %v2416
      %v2445 = vpack.c.b16 %v2419, %v2418
      %v2446 = vpack.c.b16 %v2421, %v2420
      %v2447 = vpack.c.b16 %v2423, %v2422
      %2472 = vmatprep.subr.bf16.mxu0 0
      %2473 = vmatpush1.bf16.msra.mxu0 %v2424
      %2474 = vmatprep.subr.bf16.mxu0 0
      %2475 = vmatpush1.bf16.msra.mxu0 %v2425
      %2476 = vmatprep.subr.bf16.mxu0 0
      %2477 = vmatpush1.bf16.msra.mxu0 %v2426
      %2478 = vmatprep.subr.bf16.mxu0 0
      %2479 = vmatpush1.bf16.msra.mxu0 %v2427
      %2480 = vmatprep.subr.bf16.mxu0 0
      %2481 = vmatpush1.bf16.msra.mxu0 %v2428
      %2482 = vmatprep.subr.bf16.mxu0 0
      %2483 = vmatpush1.bf16.msra.mxu0 %v2429
      %2484 = vmatprep.subr.bf16.mxu0 0
      %2485 = vmatpush1.bf16.msra.mxu0 %v2430
      %2486 = vmatprep.subr.bf16.mxu0 0
      %2487 = vmatpush1.bf16.msra.mxu0 %v2431
      %2488 = vmatprep.subr.bf16.mxu0 0
      %2489 = vmatpush1.bf16.msra.mxu0 %v2432
      %2490 = vmatprep.subr.bf16.mxu0 0
      %2491 = vmatpush1.bf16.msra.mxu0 %v2433
      %2492 = vmatprep.subr.bf16.mxu0 0
      %2493 = vmatpush1.bf16.msra.mxu0 %v2434
      %2494 = vmatprep.subr.bf16.mxu0 0
      %2495 = vmatpush1.bf16.msra.mxu0 %v2435
      %2496 = vmatprep.subr.bf16.mxu0 0
      %2497 = vmatpush1.bf16.msra.mxu0 %v2436
      %2498 = vmatprep.subr.bf16.mxu0 0
      %2499 = vmatpush1.bf16.msra.mxu0 %v2437
      %2500 = vmatprep.subr.bf16.mxu0 0
      %2501 = vmatpush1.bf16.msra.mxu0 %v2438
      %2502 = vmatprep.subr.bf16.mxu0 0
      %2503 = vmatpush1.bf16.msra.mxu0 %v2439
      %2504 = vmatprep.mubr.bf16.mxu0 %v1203
      %2505 = vmatmul.mubr.bf16.gmra.mrb[0].mxu0 %v1202
      %v2506 = vpop.f32.mrb[0].mxu0
      %v2507 = vadd.f32 0.0, %v2506
      %v2508 = vpop.f32.mrb[0].mxu0
      %v2509 = vpop.f32.mrb[0].mxu0
      %v2510 = vadd.f32 0.0, %v2509
      %v2511 = vpop.f32.mrb[0].mxu0
      %2512 = vmatprep.mubr.bf16.mxu0 %v1206
      %2513 = vmatmul.mubr.bf16.gmra.mrb[0].mxu0 %v1205
      %v2514 = vpop.f32.mrb[0].mxu0
      %v2515 = vadd.f32 0.0, %v2514
      %v2516 = vpop.f32.mrb[0].mxu0
      %v2517 = vpop.f32.mrb[0].mxu0
      %v2518 = vadd.f32 0.0, %v2517
      %v2519 = vpop.f32.mrb[0].mxu0
      %2520 = vmatprep.mubr.bf16.mxu0 %v1209
      %2521 = vmatmul.mubr.bf16.gmra.mrb[0].mxu0 %v1208
      %v2522 = vpop.f32.mrb[0].mxu0
      %v2523 = vadd.f32 0.0, %v2522
      %v2524 = vpop.f32.mrb[0].mxu0
      %v2525 = vpop.f32.mrb[0].mxu0
      %v2526 = vadd.f32 0.0, %v2525
      %v2527 = vpop.f32.mrb[0].mxu0
      %2528 = vmatprep.mubr.bf16.mxu0 %v1212
      %2529 = vmatmul.mubr.bf16.gmra.mrb[0].mxu0 %v1211
      %v2530 = vpop.f32.mrb[0].mxu0
      %v2531 = vadd.f32 0.0, %v2530
      %v2532 = vpop.f32.mrb[0].mxu0
      %v2533 = vpop.f32.mrb[0].mxu0
      %v2534 = vadd.f32 0.0, %v2533
      %v2535 = vpop.f32.mrb[0].mxu0
      %2536 = vmatprep.mubr.bf16.mxu0 %v1215
      %2537 = vmatmul.mubr.bf16.gmra.mrb[0].mxu0 %v1214
      %v2538 = vpop.f32.mrb[0].mxu0
      %v2539 = vadd.f32 0.0, %v2538
      %v2540 = vpop.f32.mrb[0].mxu0
      %v2541 = vpop.f32.mrb[0].mxu0
      %v2542 = vadd.f32 0.0, %v2541
      %v2543 = vpop.f32.mrb[0].mxu0
      %2544 = vmatprep.mubr.bf16.mxu0 %v1218
      %2545 = vmatmul.mubr.bf16.gmra.mrb[0].mxu0 %v1217
      %v2546 = vpop.f32.mrb[0].mxu0
      %v2547 = vadd.f32 0.0, %v2546
      %v2548 = vpop.f32.mrb[0].mxu0
      %v2549 = vpop.f32.mrb[0].mxu0
      %v2550 = vadd.f32 0.0, %v2549
      %v2551 = vpop.f32.mrb[0].mxu0
      %2552 = vmatprep.mubr.bf16.mxu0 %v1221
      %2553 = vmatmul.mubr.bf16.gmra.mrb[0].mxu0 %v1220
      %v2554 = vpop.f32.mrb[0].mxu0
      %v2555 = vadd.f32 0.0, %v2554
      %v2556 = vpop.f32.mrb[0].mxu0
      %v2557 = vpop.f32.mrb[0].mxu0
      %v2558 = vadd.f32 0.0, %v2557
      %v2559 = vpop.f32.mrb[0].mxu0
      %2560 = vmatprep.mubr.bf16.mxu0 %v1224
      %2561 = vmatmul.mubr.bf16.gmra.mrb[0].mxu0 %v1223
      %v2562 = vpop.f32.mrb[0].mxu0
      %v2563 = vadd.f32 0.0, %v2562
      %v2564 = vpop.f32.mrb[0].mxu0
      %v2565 = vpop.f32.mrb[0].mxu0
      %v2566 = vadd.f32 0.0, %v2565
      %v2567 = vpop.f32.mrb[0].mxu0
      %2568 = vmatprep.mubr.bf16.mxu0 %v1227
      %2569 = vmatmul.mubr.bf16.gmra.mrb[0].mxu0 %v1226
      %v2570 = vpop.f32.mrb[0].mxu0
      %v2571 = vadd.f32 0.0, %v2570
      %v2572 = vpop.f32.mrb[0].mxu0
      %v2573 = vpop.f32.mrb[0].mxu0
      %v2574 = vadd.f32 0.0, %v2573
      %v2575 = vpop.f32.mrb[0].mxu0
      %2576 = vmatprep.mubr.bf16.mxu0 %v1230
      %2577 = vmatmul.mubr.bf16.gmra.mrb[0].mxu0 %v1229
      %v2578 = vpop.f32.mrb[0].mxu0
      %v2579 = vadd.f32 0.0, %v2578
      %v2580 = vpop.f32.mrb[0].mxu0
      %v2581 = vpop.f32.mrb[0].mxu0
      %v2582 = vadd.f32 0.0, %v2581
      %v2583 = vpop.f32.mrb[0].mxu0
      %2584 = vmatprep.mubr.bf16.mxu0 %v1233
      %2585 = vmatmul.mubr.bf16.gmra.mrb[0].mxu0 %v1232
      %v2586 = vpop.f32.mrb[0].mxu0
      %v2587 = vadd.f32 0.0, %v2586
      %v2588 = vpop.f32.mrb[0].mxu0
      %v2589 = vpop.f32.mrb[0].mxu0
      %v2590 = vadd.f32 0.0, %v2589
      %v2591 = vpop.f32.mrb[0].mxu0
      %2592 = vmatprep.mubr.bf16.mxu0 %v1236
      %2593 = vmatmul.mubr.bf16.gmra.mrb[0].mxu0 %v1235
      %v2594 = vpop.f32.mrb[0].mxu0
      %v2595 = vadd.f32 0.0, %v2594
      %v2596 = vpop.f32.mrb[0].mxu0
      %v2597 = vpop.f32.mrb[0].mxu0
      %v2598 = vadd.f32 0.0, %v2597
      %v2599 = vpop.f32.mrb[0].mxu0
      %2600 = vmatprep.mubr.bf16.mxu0 %v1239
      %2601 = vmatmul.mubr.bf16.gmra.mrb[0].mxu0 %v1238
      %v2602 = vpop.f32.mrb[0].mxu0
      %v2603 = vadd.f32 0.0, %v2602
      %v2604 = vpop.f32.mrb[0].mxu0
      %v2605 = vpop.f32.mrb[0].mxu0
      %v2606 = vadd.f32 0.0, %v2605
      %v2607 = vpop.f32.mrb[0].mxu0
      %2608 = vmatprep.mubr.bf16.mxu0 %v1242
      %2609 = vmatmul.mubr.bf16.gmra.mrb[0].mxu0 %v1241
      %v2610 = vpop.f32.mrb[0].mxu0
      %v2611 = vadd.f32 0.0, %v2610
      %v2612 = vpop.f32.mrb[0].mxu0
      %v2613 = vpop.f32.mrb[0].mxu0
      %v2614 = vadd.f32 0.0, %v2613
      %v2615 = vpop.f32.mrb[0].mxu0
      %2616 = vmatprep.mubr.bf16.mxu0 %v1245
      %2617 = vmatmul.mubr.bf16.gmra.mrb[0].mxu0 %v1244
      %v2618 = vpop.f32.mrb[0].mxu0
      %v2619 = vadd.f32 0.0, %v2618
      %v2620 = vpop.f32.mrb[0].mxu0
      %v2621 = vpop.f32.mrb[0].mxu0
      %v2622 = vadd.f32 0.0, %v2621
      %v2623 = vpop.f32.mrb[0].mxu0
      %2624 = vmatprep.mubr.bf16.mxu0 %v1248
      %2625 = vmatmul.mubr.bf16.gmra.mrb[0].mxu0 %v1247
      %v2626 = vpop.f32.mrb[0].mxu0
      %v2627 = vadd.f32 0.0, %v2626
      %v2628 = vpop.f32.mrb[0].mxu0
      %v2629 = vpop.f32.mrb[0].mxu0
      %v2630 = vadd.f32 0.0, %v2629
      %v2631 = vpop.f32.mrb[0].mxu0
      %2632 = vdwg.mxu0
      %2633 = vmatprep.subr.bf16.mxu0 0
      %2634 = vmatpush1.bf16.msra.mxu0 %v2440
      %2635 = vmatprep.subr.bf16.mxu0 0
      %2636 = vmatpush1.bf16.msra.mxu0 %v2441
      %2637 = vmatprep.subr.bf16.mxu0 0
      %2638 = vmatpush1.bf16.msra.mxu0 %v2442
      %2639 = vmatprep.subr.bf16.mxu0 0
      %2640 = vmatpush1.bf16.msra.mxu0 %v2443
      %2641 = vmatprep.subr.bf16.mxu0 0
      %2642 = vmatpush1.bf16.msra.mxu0 %v2444
      %2643 = vmatprep.subr.bf16.mxu0 0
      %2644 = vmatpush1.bf16.msra.mxu0 %v2445
      %2645 = vmatprep.subr.bf16.mxu0 0
      %2646 = vmatpush1.bf16.msra.mxu0 %v2446
      %2647 = vmatprep.subr.bf16.mxu0 0
      %2648 = vmatpush1.bf16.msra.mxu0 %v2447
      %2649 = vmatprep.subr.bf16.mxu0 0
      %2650 = vmatpush1.bf16.msra.mxu0 0
      %2651 = vmatprep.subr.bf16.mxu0 0
      %2652 = vmatpush1.bf16.msra.mxu0 0
      %2653 = vmatprep.subr.bf16.mxu0 0
      %2654 = vmatpush1.bf16.msra.mxu0 0
      %2655 = vmatprep.subr.bf16.mxu0 0
      %2656 = vmatpush1.bf16.msra.mxu0 0
      %2657 = vmatprep.subr.bf16.mxu0 0
      %2658 = vmatpush1.bf16.msra.mxu0 0
      %2659 = vmatprep.subr.bf16.mxu0 0
      %2660 = vmatpush1.bf16.msra.mxu0 0
      %2661 = vmatprep.subr.bf16.mxu0 0
      %2662 = vmatpush1.bf16.msra.mxu0 0
      %2663 = vmatprep.subr.bf16.mxu0 0
      %2664 = vmatpush1.bf16.msra.mxu0 0
      %2665 = vmatprep.mubr.bf16.mxu0 0
      %2666 = vmatmul.mubr.bf16.gmra.mrb[0].mxu0 %v1204
      %v2667 = vpop.f32.mrb[0].mxu0
      %v2668 = vadd.f32 %v2507, %v2667
      %v2669 = vpop.f32.mrb[0].mxu0
      %v2670 = vpop.f32.mrb[0].mxu0
      %v2671 = vadd.f32 %v2510, %v2670
      %v2672 = vpop.f32.mrb[0].mxu0
      %2673 = vmatprep.mubr.bf16.mxu0 0
      %2674 = vmatmul.mubr.bf16.gmra.mrb[0].mxu0 %v1207
      %v2675 = vpop.f32.mrb[0].mxu0
      %v2676 = vadd.f32 %v2515, %v2675
      %v2677 = vpop.f32.mrb[0].mxu0
      %v2678 = vpop.f32.mrb[0].mxu0
      %v2679 = vadd.f32 %v2518, %v2678
      %v2680 = vpop.f32.mrb[0].mxu0
      %2681 = vmatprep.mubr.bf16.mxu0 0
      %2682 = vmatmul.mubr.bf16.gmra.mrb[0].mxu0 %v1210
      %v2683 = vpop.f32.mrb[0].mxu0
      %v2684 = vadd.f32 %v2523, %v2683
      %v2685 = vpop.f32.mrb[0].mxu0
      %v2686 = vpop.f32.mrb[0].mxu0
      %v2687 = vadd.f32 %v2526, %v2686
      %v2688 = vpop.f32.mrb[0].mxu0
      %2689 = vmatprep.mubr.bf16.mxu0 0
      %2690 = vmatmul.mubr.bf16.gmra.mrb[0].mxu0 %v1213
      %v2691 = vpop.f32.mrb[0].mxu0
      %v2692 = vadd.f32 %v2531, %v2691
      %v2693 = vpop.f32.mrb[0].mxu0
      %v2694 = vpop.f32.mrb[0].mxu0
      %v2695 = vadd.f32 %v2534, %v2694
      %v2696 = vpop.f32.mrb[0].mxu0
      %2697 = vmatprep.mubr.bf16.mxu0 0
      %2698 = vmatmul.mubr.bf16.gmra.mrb[0].mxu0 %v1216
      %v2699 = vpop.f32.mrb[0].mxu0
      %v2700 = vadd.f32 %v2539, %v2699
      %v2701 = vpop.f32.mrb[0].mxu0
      %v2702 = vpop.f32.mrb[0].mxu0
      %v2703 = vadd.f32 %v2542, %v2702
      %v2704 = vpop.f32.mrb[0].mxu0
      %2705 = vmatprep.mubr.bf16.mxu0 0
      %2706 = vmatmul.mubr.bf16.gmra.mrb[0].mxu0 %v1219
      %v2707 = vpop.f32.mrb[0].mxu0
      %v2708 = vadd.f32 %v2547, %v2707
      %v2709 = vpop.f32.mrb[0].mxu0
      %v2710 = vpop.f32.mrb[0].mxu0
      %v2711 = vadd.f32 %v2550, %v2710
      %v2712 = vpop.f32.mrb[0].mxu0
      %2713 = vmatprep.mubr.bf16.mxu0 0
      %2714 = vmatmul.mubr.bf16.gmra.mrb[0].mxu0 %v1222
      %v2715 = vpop.f32.mrb[0].mxu0
      %v2716 = vadd.f32 %v2555, %v2715
      %v2717 = vpop.f32.mrb[0].mxu0
      %v2718 = vpop.f32.mrb[0].mxu0
      %v2719 = vadd.f32 %v2558, %v2718
      %v2720 = vpop.f32.mrb[0].mxu0
      %2721 = vmatprep.mubr.bf16.mxu0 0
      %2722 = vmatmul.mubr.bf16.gmra.mrb[0].mxu0 %v1225
      %v2723 = vpop.f32.mrb[0].mxu0
      %v2724 = vadd.f32 %v2563, %v2723
      %v2725 = vpop.f32.mrb[0].mxu0
      %v2726 = vpop.f32.mrb[0].mxu0
      %v2727 = vadd.f32 %v2566, %v2726
      %v2728 = vpop.f32.mrb[0].mxu0
      %2729 = vmatprep.mubr.bf16.mxu0 0
      %2730 = vmatmul.mubr.bf16.gmra.mrb[0].mxu0 %v1228
      %v2731 = vpop.f32.mrb[0].mxu0
      %v2732 = vadd.f32 %v2571, %v2731
      %v2733 = vpop.f32.mrb[0].mxu0
      %v2734 = vpop.f32.mrb[0].mxu0
      %v2735 = vadd.f32 %v2574, %v2734
      %v2736 = vpop.f32.mrb[0].mxu0
      %2737 = vmatprep.mubr.bf16.mxu0 0
      %2738 = vmatmul.mubr.bf16.gmra.mrb[0].mxu0 %v1231
      %v2739 = vpop.f32.mrb[0].mxu0
      %v2740 = vadd.f32 %v2579, %v2739
      %v2741 = vpop.f32.mrb[0].mxu0
      %v2742 = vpop.f32.mrb[0].mxu0
      %v2743 = vadd.f32 %v2582, %v2742
      %v2744 = vpop.f32.mrb[0].mxu0
      %2745 = vmatprep.mubr.bf16.mxu0 0
      %2746 = vmatmul.mubr.bf16.gmra.mrb[0].mxu0 %v1234
      %v2747 = vpop.f32.mrb[0].mxu0
      %v2748 = vadd.f32 %v2587, %v2747
      %v2749 = vpop.f32.mrb[0].mxu0
      %v2750 = vpop.f32.mrb[0].mxu0
      %v2751 = vadd.f32 %v2590, %v2750
      %v2752 = vpop.f32.mrb[0].mxu0
      %2753 = vmatprep.mubr.bf16.mxu0 0
      %2754 = vmatmul.mubr.bf16.gmra.mrb[0].mxu0 %v1237
      %v2755 = vpop.f32.mrb[0].mxu0
      %v2756 = vadd.f32 %v2595, %v2755
      %v2757 = vpop.f32.mrb[0].mxu0
      %v2758 = vpop.f32.mrb[0].mxu0
      %v2759 = vadd.f32 %v2598, %v2758
      %v2760 = vpop.f32.mrb[0].mxu0
      %2761 = vmatprep.mubr.bf16.mxu0 0
      %2762 = vmatmul.mubr.bf16.gmra.mrb[0].mxu0 %v1240
      %v2763 = vpop.f32.mrb[0].mxu0
      %v2764 = vadd.f32 %v2603, %v2763
      %v2765 = vpop.f32.mrb[0].mxu0
      %v2766 = vpop.f32.mrb[0].mxu0
      %v2767 = vadd.f32 %v2606, %v2766
      %v2768 = vpop.f32.mrb[0].mxu0
      %2769 = vmatprep.mubr.bf16.mxu0 0
      %2770 = vmatmul.mubr.bf16.gmra.mrb[0].mxu0 %v1243
      %v2771 = vpop.f32.mrb[0].mxu0
      %v2772 = vadd.f32 %v2611, %v2771
      %v2773 = vpop.f32.mrb[0].mxu0
      %v2774 = vpop.f32.mrb[0].mxu0
      %v2775 = vadd.f32 %v2614, %v2774
      %v2776 = vpop.f32.mrb[0].mxu0
      %2777 = vmatprep.mubr.bf16.mxu0 0
      %2778 = vmatmul.mubr.bf16.gmra.mrb[0].mxu0 %v1246
      %v2779 = vpop.f32.mrb[0].mxu0
      %v2780 = vadd.f32 %v2619, %v2779
      %v2781 = vpop.f32.mrb[0].mxu0
      %v2782 = vpop.f32.mrb[0].mxu0
      %v2783 = vadd.f32 %v2622, %v2782
      %v2784 = vpop.f32.mrb[0].mxu0
      %2785 = vmatprep.mubr.bf16.mxu0 0
      %2786 = vmatmul.mubr.bf16.gmra.mrb[0].mxu0 %v1249
      %v2787 = vpop.f32.mrb[0].mxu0
      %v2788 = vadd.f32 %v2627, %v2787
      %v2789 = vpop.f32.mrb[0].mxu0
      %v2790 = vpop.f32.mrb[0].mxu0
      %v2791 = vadd.f32 %v2630, %v2790
      %v2792 = vpop.f32.mrb[0].mxu0
      %2793 = vdwg.mxu0
      %v2794 = vadd.f32 %v2153, %v2668
      %v2795 = vadd.f32 %v2156, %v2671
      %v2796 = vadd.f32 %v2161, %v2676
      %v2797 = vadd.f32 %v2164, %v2679
      %v2798 = vadd.f32 %v2169, %v2684
      %v2799 = vadd.f32 %v2172, %v2687
      %v2800 = vadd.f32 %v2177, %v2692
      %v2801 = vadd.f32 %v2180, %v2695
      %v2802 = vadd.f32 %v2185, %v2700
      %v2803 = vadd.f32 %v2188, %v2703
      %v2804 = vadd.f32 %v2193, %v2708
      %v2805 = vadd.f32 %v2196, %v2711
      %v2806 = vadd.f32 %v2201, %v2716
      %v2807 = vadd.f32 %v2204, %v2719
      %v2808 = vadd.f32 %v2209, %v2724
      %v2809 = vadd.f32 %v2212, %v2727
      %v2810 = vadd.f32 %v2217, %v2732
      %v2811 = vadd.f32 %v2220, %v2735
      %v2812 = vadd.f32 %v2225, %v2740
      %v2813 = vadd.f32 %v2228, %v2743
      %v2814 = vadd.f32 %v2233, %v2748
      %v2815 = vadd.f32 %v2236, %v2751
      %v2816 = vadd.f32 %v2241, %v2756
      %v2817 = vadd.f32 %v2244, %v2759
      %v2818 = vadd.f32 %v2249, %v2764
      %v2819 = vadd.f32 %v2252, %v2767
      %v2820 = vadd.f32 %v2257, %v2772
      %v2821 = vadd.f32 %v2260, %v2775
      %v2822 = vadd.f32 %v2265, %v2780
      %v2823 = vadd.f32 %v2268, %v2783
      %v2824 = vadd.f32 %v2273, %v2788
      %v2825 = vadd.f32 %v2276, %v2791
      %v2826 = vld [vmem:[%s7] sm:$0x1]
      %v2828 = vlaneseq
      %v2829 = vshrl.u32 %v2828, 7
      %v2830 = vsub.s32 0, %v2829
      %v2831 = vrot.slane %v2826, %v2830
      %v2833 = vadd.f32 %v2794, %v2831
      %v2834 = vadd.f32 %v2795, %v2831
      %v2835 = vadd.f32 %v2796, %v2831
      %v2836 = vadd.f32 %v2797, %v2831
      %v2837 = vadd.f32 %v2798, %v2831
      %v2838 = vadd.f32 %v2799, %v2831
      %v2839 = vadd.f32 %v2800, %v2831
      %v2840 = vadd.f32 %v2801, %v2831
      %v2841 = vadd.f32 %v2802, %v2831
      %v2842 = vadd.f32 %v2803, %v2831
      %v2843 = vadd.f32 %v2804, %v2831
      %v2844 = vadd.f32 %v2805, %v2831
      %v2845 = vadd.f32 %v2806, %v2831
      %v2846 = vadd.f32 %v2807, %v2831
      %v2847 = vadd.f32 %v2808, %v2831
      %v2848 = vadd.f32 %v2809, %v2831
      %v2849 = vadd.f32 %v2810, %v2831
      %v2850 = vadd.f32 %v2811, %v2831
      %v2851 = vadd.f32 %v2812, %v2831
      %v2852 = vadd.f32 %v2813, %v2831
      %v2853 = vadd.f32 %v2814, %v2831
      %v2854 = vadd.f32 %v2815, %v2831
      %v2855 = vadd.f32 %v2816, %v2831
      %v2856 = vadd.f32 %v2817, %v2831
      %v2857 = vadd.f32 %v2818, %v2831
      %v2858 = vadd.f32 %v2819, %v2831
      %v2859 = vadd.f32 %v2820, %v2831
      %v2860 = vadd.f32 %v2821, %v2831
      %v2861 = vadd.f32 %v2822, %v2831
      %v2862 = vadd.f32 %v2823, %v2831
      %v2863 = vadd.f32 %v2824, %v2831
      %v2864 = vadd.f32 %v2825, %v2831
      %v2865 = vmax.f32 %v2833, 0.0
      %v2866 = vmax.f32 %v2834, 0.0
      %v2867 = vmax.f32 %v2835, 0.0
      %v2868 = vmax.f32 %v2836, 0.0
      %v2869 = vmax.f32 %v2837, 0.0
      %v2870 = vmax.f32 %v2838, 0.0
      %v2871 = vmax.f32 %v2839, 0.0
      %v2872 = vmax.f32 %v2840, 0.0
      %v2873 = vmax.f32 %v2841, 0.0
      %v2874 = vmax.f32 %v2842, 0.0
      %v2875 = vmax.f32 %v2843, 0.0
      %v2876 = vmax.f32 %v2844, 0.0
      %v2877 = vmax.f32 %v2845, 0.0
      %v2878 = vmax.f32 %v2846, 0.0
      %v2879 = vmax.f32 %v2847, 0.0
      %v2880 = vmax.f32 %v2848, 0.0
      %v2881 = vmax.f32 %v2849, 0.0
      %v2882 = vmax.f32 %v2850, 0.0
      %v2883 = vmax.f32 %v2851, 0.0
      %v2884 = vmax.f32 %v2852, 0.0
      %v2885 = vmax.f32 %v2853, 0.0
      %v2886 = vmax.f32 %v2854, 0.0
      %v2887 = vmax.f32 %v2855, 0.0
      %v2888 = vmax.f32 %v2856, 0.0
      %v2889 = vmax.f32 %v2857, 0.0
      %v2890 = vmax.f32 %v2858, 0.0
      %v2891 = vmax.f32 %v2859, 0.0
      %v2892 = vmax.f32 %v2860, 0.0
      %v2893 = vmax.f32 %v2861, 0.0
      %v2894 = vmax.f32 %v2862, 0.0
      %v2895 = vmax.f32 %v2863, 0.0
      %v2896 = vmax.f32 %v2864, 0.0
      %v2897 = vpack.c.bf16 %v2866, %v2865
      %v2898 = vpack.c.bf16 %v2868, %v2867
      %v2899 = vpack.c.bf16 %v2870, %v2869
      %v2900 = vpack.c.bf16 %v2872, %v2871
      %v2901 = vpack.c.bf16 %v2874, %v2873
      %v2902 = vpack.c.bf16 %v2876, %v2875
      %v2903 = vpack.c.bf16 %v2878, %v2877
      %v2904 = vpack.c.bf16 %v2880, %v2879
      %v2905 = vpack.c.bf16 %v2882, %v2881
      %v2906 = vpack.c.bf16 %v2884, %v2883
      %v2907 = vpack.c.bf16 %v2886, %v2885
      %v2908 = vpack.c.bf16 %v2888, %v2887
      %v2909 = vpack.c.bf16 %v2890, %v2889
      %v2910 = vpack.c.bf16 %v2892, %v2891
      %v2911 = vpack.c.bf16 %v2894, %v2893
      %v2912 = vpack.c.bf16 %v2896, %v2895
      %v2913 = vld [vmem:[%s5] sm:$0xf]
      %v2914 = vld [vmem:[%s5 + $0x4] sm:$0xf]
      %v2915 = vld [vmem:[%s5 + $0x8] sm:$0xf]
      %v2916 = vld [vmem:[%s5 + $0xc] sm:$0xf]
      %v2917 = vld [vmem:[%s5 + $0x10] sm:$0xf]
      %v2918 = vld [vmem:[%s5 + $0x14] sm:$0xf]
      %v2919 = vld [vmem:[%s5 + $0x18] sm:$0xf]
      %v2920 = vld [vmem:[%s5 + $0x1c] sm:$0xf]
      %v2921 = vld [vmem:[%s5 + $0x20] sm:$0xf]
      %v2922 = vld [vmem:[%s5 + $0x24] sm:$0xf]
      %v2923 = vld [vmem:[%s5 + $0x28] sm:$0xf]
      %v2924 = vld [vmem:[%s5 + $0x2c] sm:$0xf]
      %v2925 = vld [vmem:[%s5 + $0x30] sm:$0xf]
      %v2926 = vld [vmem:[%s5 + $0x34] sm:$0xf]
      %v2927 = vld [vmem:[%s5 + $0x38] sm:$0xf]
      %v2928 = vld [vmem:[%s5 + $0x3c] sm:$0xf]
      %v2929 = vunpack.c.l.bf16 %v502
      %v2930 = vunpack.c.l.bf16 %v503
      %v2931 = vunpack.c.l.bf16 %v504
      %v2932 = vunpack.c.l.bf16 %v505
      %v2933 = vunpack.c.l.bf16 %v506
      %v2934 = vunpack.c.l.bf16 %v507
      %v2935 = vunpack.c.l.bf16 %v508
      %v2936 = vunpack.c.l.bf16 %v509
      %v2937 = vunpack.c.l.bf16 %v510
      %v2938 = vunpack.c.l.bf16 %v511
      %v2939 = vunpack.c.l.bf16 %v512
      %v2940 = vunpack.c.l.bf16 %v513
      %v2941 = vunpack.c.l.bf16 %v514
      %v2942 = vunpack.c.l.bf16 %v515
      %v2943 = vunpack.c.l.bf16 %v516
      %v2944 = vunpack.c.l.bf16 %v517
      %v2945 = vunpack.c.l.bf16 %v518
      %v2946 = vunpack.c.l.bf16 %v519
      %v2947 = vunpack.c.l.bf16 %v520
      %v2948 = vunpack.c.l.bf16 %v521
      %v2949 = vunpack.c.l.bf16 %v522
      %v2950 = vunpack.c.l.bf16 %v523
      %v2951 = vunpack.c.l.bf16 %v524
      %v2952 = vunpack.c.l.bf16 %v525
      %v2953 = vunpack.c.l.bf16 %v526
      %v2954 = vunpack.c.l.bf16 %v527
      %v2955 = vunpack.c.l.bf16 %v528
      %v2956 = vunpack.c.l.bf16 %v529
      %v2957 = vunpack.c.l.bf16 %v530
      %v2958 = vunpack.c.l.bf16 %v531
      %v2959 = vunpack.c.l.bf16 %v532
      %v2960 = vunpack.c.l.bf16 %v533
      %v2961 = vld [vmem:[%s8] sm:$0x1]
      %v2963 = vlaneseq
      %v2964 = vshrl.u32 %v2963, 7
      %v2965 = vsub.s32 0, %v2964
      %v2966 = vrot.slane %v2961, %v2965
      %v2984 = vunpack.c.l.b16 %v2913
      %v2985 = vunpack.c.l.b16 %v2914
      %v2986 = vunpack.c.l.b16 %v2915
      %v2987 = vunpack.c.l.b16 %v2916
      %v2988 = vunpack.c.l.b16 %v2917
      %v2989 = vunpack.c.l.b16 %v2918
      %v2990 = vunpack.c.l.b16 %v2919
      %v2991 = vunpack.c.l.b16 %v2920
      %v2992 = vunpack.c.l.b16 %v2921
      %v2993 = vunpack.c.l.b16 %v2922
      %v2994 = vunpack.c.l.b16 %v2923
      %v2995 = vunpack.c.l.b16 %v2924
      %v2996 = vunpack.c.l.b16 %v2925
      %v2997 = vunpack.c.l.b16 %v2926
      %v2998 = vunpack.c.l.b16 %v2927
      %v2999 = vunpack.c.l.b16 %v2928
      %v3000 = vpack.c.b16 %v2985, %v2984
      %v3001 = vpack.c.b16 %v2987, %v2986
      %v3002 = vpack.c.b16 %v2989, %v2988
      %v3003 = vpack.c.b16 %v2991, %v2990
      %v3004 = vpack.c.b16 %v2993, %v2992
      %v3005 = vpack.c.b16 %v2995, %v2994
      %v3006 = vpack.c.b16 %v2997, %v2996
      %v3007 = vpack.c.b16 %v2999, %v2998
      %3016 = vmatprep.subr.bf16.mxu0 0
      %3017 = vmatpush1.bf16.msra.mxu0 %v3000
      %3018 = vmatprep.subr.bf16.mxu0 0
      %3019 = vmatpush1.bf16.msra.mxu0 %v3001
      %3020 = vmatprep.subr.bf16.mxu0 0
      %3021 = vmatpush1.bf16.msra.mxu0 %v3002
      %3022 = vmatprep.subr.bf16.mxu0 0
      %3023 = vmatpush1.bf16.msra.mxu0 %v3003
      %3024 = vmatprep.subr.bf16.mxu0 0
      %3025 = vmatpush1.bf16.msra.mxu0 %v3004
      %3026 = vmatprep.subr.bf16.mxu0 0
      %3027 = vmatpush1.bf16.msra.mxu0 %v3005
      %3028 = vmatprep.subr.bf16.mxu0 0
      %3029 = vmatpush1.bf16.msra.mxu0 %v3006
      %3030 = vmatprep.subr.bf16.mxu0 0
      %3031 = vmatpush1.bf16.msra.mxu0 %v3007
      %3032 = vmatprep.subr.bf16.mxu0 0
      %3033 = vmatpush1.bf16.msra.mxu0 0
      %3034 = vmatprep.subr.bf16.mxu0 0
      %3035 = vmatpush1.bf16.msra.mxu0 0
      %3036 = vmatprep.subr.bf16.mxu0 0
      %3037 = vmatpush1.bf16.msra.mxu0 0
      %3038 = vmatprep.subr.bf16.mxu0 0
      %3039 = vmatpush1.bf16.msra.mxu0 0
      %3040 = vmatprep.subr.bf16.mxu0 0
      %3041 = vmatpush1.bf16.msra.mxu0 0
      %3042 = vmatprep.subr.bf16.mxu0 0
      %3043 = vmatpush1.bf16.msra.mxu0 0
      %3044 = vmatprep.subr.bf16.mxu0 0
      %3045 = vmatpush1.bf16.msra.mxu0 0
      %3046 = vmatprep.subr.bf16.mxu0 0
      %3047 = vmatpush1.bf16.msra.mxu0 0
      %3048 = vmatprep.mubr.bf16.mxu0 0
      %3049 = vmatmul.mubr.bf16.gmra.mrb[0].mxu0 %v2897
      %v3050 = vpop.f32.mrb[0].mxu0
      %v3051 = vadd.f32 %v2966, %v3050
      %v3052 = vpop.f32.mrb[0].mxu0
      %v3053 = vpop.f32.mrb[0].mxu0
      %v3054 = vadd.f32 %v2966, %v3053
      %v3055 = vpop.f32.mrb[0].mxu0
      %3056 = vmatprep.mubr.bf16.mxu0 0
      %3057 = vmatmul.mubr.bf16.gmra.mrb[0].mxu0 %v2898
      %v3058 = vpop.f32.mrb[0].mxu0
      %v3059 = vadd.f32 %v2966, %v3058
      %v3060 = vpop.f32.mrb[0].mxu0
      %v3061 = vpop.f32.mrb[0].mxu0
      %v3062 = vadd.f32 %v2966, %v3061
      %v3063 = vpop.f32.mrb[0].mxu0
      %3064 = vmatprep.mubr.bf16.mxu0 0
      %3065 = vmatmul.mubr.bf16.gmra.mrb[0].mxu0 %v2899
      %v3066 = vpop.f32.mrb[0].mxu0
      %v3067 = vadd.f32 %v2966, %v3066
      %v3068 = vpop.f32.mrb[0].mxu0
      %v3069 = vpop.f32.mrb[0].mxu0
      %v3070 = vadd.f32 %v2966, %v3069
      %v3071 = vpop.f32.mrb[0].mxu0
      %3072 = vmatprep.mubr.bf16.mxu0 0
      %3073 = vmatmul.mubr.bf16.gmra.mrb[0].mxu0 %v2900
      %v3074 = vpop.f32.mrb[0].mxu0
      %v3075 = vadd.f32 %v2966, %v3074
      %v3076 = vpop.f32.mrb[0].mxu0
      %v3077 = vpop.f32.mrb[0].mxu0
      %v3078 = vadd.f32 %v2966, %v3077
      %v3079 = vpop.f32.mrb[0].mxu0
      %3080 = vmatprep.mubr.bf16.mxu0 0
      %3081 = vmatmul.mubr.bf16.gmra.mrb[0].mxu0 %v2901
      %v3082 = vpop.f32.mrb[0].mxu0
      %v3083 = vadd.f32 %v2966, %v3082
      %v3084 = vpop.f32.mrb[0].mxu0
      %v3085 = vpop.f32.mrb[0].mxu0
      %v3086 = vadd.f32 %v2966, %v3085
      %v3087 = vpop.f32.mrb[0].mxu0
      %3088 = vmatprep.mubr.bf16.mxu0 0
      %3089 = vmatmul.mubr.bf16.gmra.mrb[0].mxu0 %v2902
      %v3090 = vpop.f32.mrb[0].mxu0
      %v3091 = vadd.f32 %v2966, %v3090
      %v3092 = vpop.f32.mrb[0].mxu0
      %v3093 = vpop.f32.mrb[0].mxu0
      %v3094 = vadd.f32 %v2966, %v3093
      %v3095 = vpop.f32.mrb[0].mxu0
      %3096 = vmatprep.mubr.bf16.mxu0 0
      %3097 = vmatmul.mubr.bf16.gmra.mrb[0].mxu0 %v2903
      %v3098 = vpop.f32.mrb[0].mxu0
      %v3099 = vadd.f32 %v2966, %v3098
      %v3100 = vpop.f32.mrb[0].mxu0
      %v3101 = vpop.f32.mrb[0].mxu0
      %v3102 = vadd.f32 %v2966, %v3101
      %v3103 = vpop.f32.mrb[0].mxu0
      %3104 = vmatprep.mubr.bf16.mxu0 0
      %3105 = vmatmul.mubr.bf16.gmra.mrb[0].mxu0 %v2904
      %v3106 = vpop.f32.mrb[0].mxu0
      %v3107 = vadd.f32 %v2966, %v3106
      %v3108 = vpop.f32.mrb[0].mxu0
      %v3109 = vpop.f32.mrb[0].mxu0
      %v3110 = vadd.f32 %v2966, %v3109
      %v3111 = vpop.f32.mrb[0].mxu0
      %3112 = vmatprep.mubr.bf16.mxu0 0
      %3113 = vmatmul.mubr.bf16.gmra.mrb[0].mxu0 %v2905
      %v3114 = vpop.f32.mrb[0].mxu0
      %v3115 = vadd.f32 %v2966, %v3114
      %v3116 = vpop.f32.mrb[0].mxu0
      %v3117 = vpop.f32.mrb[0].mxu0
      %v3118 = vadd.f32 %v2966, %v3117
      %v3119 = vpop.f32.mrb[0].mxu0
      %3120 = vmatprep.mubr.bf16.mxu0 0
      %3121 = vmatmul.mubr.bf16.gmra.mrb[0].mxu0 %v2906
      %v3122 = vpop.f32.mrb[0].mxu0
      %v3123 = vadd.f32 %v2966, %v3122
      %v3124 = vpop.f32.mrb[0].mxu0
      %v3125 = vpop.f32.mrb[0].mxu0
      %v3126 = vadd.f32 %v2966, %v3125
      %v3127 = vpop.f32.mrb[0].mxu0
      %3128 = vmatprep.mubr.bf16.mxu0 0
      %3129 = vmatmul.mubr.bf16.gmra.mrb[0].mxu0 %v2907
      %v3130 = vpop.f32.mrb[0].mxu0
      %v3131 = vadd.f32 %v2966, %v3130
      %v3132 = vpop.f32.mrb[0].mxu0
      %v3133 = vpop.f32.mrb[0].mxu0
      %v3134 = vadd.f32 %v2966, %v3133
      %v3135 = vpop.f32.mrb[0].mxu0
      %3136 = vmatprep.mubr.bf16.mxu0 0
      %3137 = vmatmul.mubr.bf16.gmra.mrb[0].mxu0 %v2908
      %v3138 = vpop.f32.mrb[0].mxu0
      %v3139 = vadd.f32 %v2966, %v3138
      %v3140 = vpop.f32.mrb[0].mxu0
      %v3141 = vpop.f32.mrb[0].mxu0
      %v3142 = vadd.f32 %v2966, %v3141
      %v3143 = vpop.f32.mrb[0].mxu0
      %3144 = vmatprep.mubr.bf16.mxu0 0
      %3145 = vmatmul.mubr.bf16.gmra.mrb[0].mxu0 %v2909
      %v3146 = vpop.f32.mrb[0].mxu0
      %v3147 = vadd.f32 %v2966, %v3146
      %v3148 = vpop.f32.mrb[0].mxu0
      %v3149 = vpop.f32.mrb[0].mxu0
      %v3150 = vadd.f32 %v2966, %v3149
      %v3151 = vpop.f32.mrb[0].mxu0
      %3152 = vmatprep.mubr.bf16.mxu0 0
      %3153 = vmatmul.mubr.bf16.gmra.mrb[0].mxu0 %v2910
      %v3154 = vpop.f32.mrb[0].mxu0
      %v3155 = vadd.f32 %v2966, %v3154
      %v3156 = vpop.f32.mrb[0].mxu0
      %v3157 = vpop.f32.mrb[0].mxu0
      %v3158 = vadd.f32 %v2966, %v3157
      %v3159 = vpop.f32.mrb[0].mxu0
      %3160 = vmatprep.mubr.bf16.mxu0 0
      %3161 = vmatmul.mubr.bf16.gmra.mrb[0].mxu0 %v2911
      %v3162 = vpop.f32.mrb[0].mxu0
      %v3163 = vadd.f32 %v2966, %v3162
      %v3164 = vpop.f32.mrb[0].mxu0
      %v3165 = vpop.f32.mrb[0].mxu0
      %v3166 = vadd.f32 %v2966, %v3165
      %v3167 = vpop.f32.mrb[0].mxu0
      %3168 = vmatprep.mubr.bf16.mxu0 0
      %3169 = vmatmul.mubr.bf16.gmra.mrb[0].mxu0 %v2912
      %v3170 = vpop.f32.mrb[0].mxu0
      %v3171 = vadd.f32 %v2966, %v3170
      %v3172 = vpop.f32.mrb[0].mxu0
      %v3173 = vpop.f32.mrb[0].mxu0
      %v3174 = vadd.f32 %v2966, %v3173
      %v3175 = vpop.f32.mrb[0].mxu0
      %3176 = vdwg.mxu0
      %v3177 = vadd.f32 %v3051, %v2929
      %v3178 = vadd.f32 %v3054, %v2930
      %v3179 = vadd.f32 %v3059, %v2931
      %v3180 = vadd.f32 %v3062, %v2932
      %v3181 = vadd.f32 %v3067, %v2933
      %v3182 = vadd.f32 %v3070, %v2934
      %v3183 = vadd.f32 %v3075, %v2935
      %v3184 = vadd.f32 %v3078, %v2936
      %v3185 = vadd.f32 %v3083, %v2937
      %v3186 = vadd.f32 %v3086, %v2938
      %v3187 = vadd.f32 %v3091, %v2939
      %v3188 = vadd.f32 %v3094, %v2940
      %v3189 = vadd.f32 %v3099, %v2941
      %v3190 = vadd.f32 %v3102, %v2942
      %v3191 = vadd.f32 %v3107, %v2943
      %v3192 = vadd.f32 %v3110, %v2944
      %v3193 = vadd.f32 %v3115, %v2945
      %v3194 = vadd.f32 %v3118, %v2946
      %v3195 = vadd.f32 %v3123, %v2947
      %v3196 = vadd.f32 %v3126, %v2948
      %v3197 = vadd.f32 %v3131, %v2949
      %v3198 = vadd.f32 %v3134, %v2950
      %v3199 = vadd.f32 %v3139, %v2951
      %v3200 = vadd.f32 %v3142, %v2952
      %v3201 = vadd.f32 %v3147, %v2953
      %v3202 = vadd.f32 %v3150, %v2954
      %v3203 = vadd.f32 %v3155, %v2955
      %v3204 = vadd.f32 %v3158, %v2956
      %v3205 = vadd.f32 %v3163, %v2957
      %v3206 = vadd.f32 %v3166, %v2958
      %v3207 = vadd.f32 %v3171, %v2959
      %v3208 = vadd.f32 %v3174, %v2960
      %v3209 = vmax.f32 %v3177, 0.0
      %v3210 = vmax.f32 %v3178, 0.0
      %v3211 = vmax.f32 %v3179, 0.0
      %v3212 = vmax.f32 %v3180, 0.0
      %v3213 = vmax.f32 %v3181, 0.0
      %v3214 = vmax.f32 %v3182, 0.0
      %v3215 = vmax.f32 %v3183, 0.0
      %v3216 = vmax.f32 %v3184, 0.0
      %v3217 = vmax.f32 %v3185, 0.0
      %v3218 = vmax.f32 %v3186, 0.0
      %v3219 = vmax.f32 %v3187, 0.0
      %v3220 = vmax.f32 %v3188, 0.0
      %v3221 = vmax.f32 %v3189, 0.0
      %v3222 = vmax.f32 %v3190, 0.0
      %v3223 = vmax.f32 %v3191, 0.0
      %v3224 = vmax.f32 %v3192, 0.0
      %v3225 = vmax.f32 %v3193, 0.0
      %v3226 = vmax.f32 %v3194, 0.0
      %v3227 = vmax.f32 %v3195, 0.0
      %v3228 = vmax.f32 %v3196, 0.0
      %v3229 = vmax.f32 %v3197, 0.0
      %v3230 = vmax.f32 %v3198, 0.0
      %v3231 = vmax.f32 %v3199, 0.0
      %v3232 = vmax.f32 %v3200, 0.0
      %v3233 = vmax.f32 %v3201, 0.0
      %v3234 = vmax.f32 %v3202, 0.0
      %v3235 = vmax.f32 %v3203, 0.0
      %v3236 = vmax.f32 %v3204, 0.0
      %v3237 = vmax.f32 %v3205, 0.0
      %v3238 = vmax.f32 %v3206, 0.0
      %v3239 = vmax.f32 %v3207, 0.0
      %v3240 = vmax.f32 %v3208, 0.0
      %3241 = vst [vmem:[%s499] sm:$0xff] %v3209
      %3242 = vst [vmem:[%s499 + $0x8] sm:$0xff] %v3210
      %3243 = vst [vmem:[%s499 + $0x10] sm:$0xff] %v3211
      %3244 = vst [vmem:[%s499 + $0x18] sm:$0xff] %v3212
      %3245 = vst [vmem:[%s499 + $0x20] sm:$0xff] %v3213
      %3246 = vst [vmem:[%s499 + $0x28] sm:$0xff] %v3214
      %3247 = vst [vmem:[%s499 + $0x30] sm:$0xff] %v3215
      %3248 = vst [vmem:[%s499 + $0x38] sm:$0xff] %v3216
      %3249 = vst [vmem:[%s499 + $0x40] sm:$0xff] %v3217
      %3250 = vst [vmem:[%s499 + $0x48] sm:$0xff] %v3218
      %3251 = vst [vmem:[%s499 + $0x50] sm:$0xff] %v3219
      %3252 = vst [vmem:[%s499 + $0x58] sm:$0xff] %v3220
      %3253 = vst [vmem:[%s499 + $0x60] sm:$0xff] %v3221
      %3254 = vst [vmem:[%s499 + $0x68] sm:$0xff] %v3222
      %3255 = vst [vmem:[%s499 + $0x70] sm:$0xff] %v3223
      %3256 = vst [vmem:[%s499 + $0x78] sm:$0xff] %v3224
      %3257 = vst [vmem:[%s499 + $0x80] sm:$0xff] %v3225
      %3258 = vst [vmem:[%s499 + $0x88] sm:$0xff] %v3226
      %3259 = vst [vmem:[%s499 + $0x90] sm:$0xff] %v3227
      %3260 = vst [vmem:[%s499 + $0x98] sm:$0xff] %v3228
      %3261 = vst [vmem:[%s499 + $0xa0] sm:$0xff] %v3229
      %3262 = vst [vmem:[%s499 + $0xa8] sm:$0xff] %v3230
      %3263 = vst [vmem:[%s499 + $0xb0] sm:$0xff] %v3231
      %3264 = vst [vmem:[%s499 + $0xb8] sm:$0xff] %v3232
      %3265 = vst [vmem:[%s499 + $0xc0] sm:$0xff] %v3233
      %3266 = vst [vmem:[%s499 + $0xc8] sm:$0xff] %v3234
      %3267 = vst [vmem:[%s499 + $0xd0] sm:$0xff] %v3235
      %3268 = vst [vmem:[%s499 + $0xd8] sm:$0xff] %v3236
      %3269 = vst [vmem:[%s499 + $0xe0] sm:$0xff] %v3237
      %3270 = vst [vmem:[%s499 + $0xe8] sm:$0xff] %v3238
      %3271 = vst [vmem:[%s499 + $0xf0] sm:$0xff] %v3239
      %3272 = vst [vmem:[%s499 + $0xf8] sm:$0xff] %v3240
      %s3273 = smul.u32 16, %s25
      %p3274 = scmp.lt.s32.totalorder %s24, 1
      %s3275 = scalar_select %p3274, %s24, 1
      %p3276 = scmp.lt.s32.totalorder %s3273, 15
      %s3277 = scalar_select %p3276, %s3273, 15
      %s3278 = smul.addr %s3277, 2
      %s3279 = smul.addr %s3275, 32
      %s3280 = sadd.s32 %s3278, %s3279
      %s3281 = smul.addr %s3280, 8
      %s3282 = scalar_lea.vmem %s9, %s3281
      // Predicated region
      $region57: #{bottleneck_forward.1} parent=55 // pred_check
        %p3283 = pneg %p278
      $region58: #{bottleneck_forward.1} parent=55 // pred_check_branch
        %3285 = sbr.rel (%p3283) target = $region60
      $region59: #{bottleneck_forward.1} parent=55 // pred_region
        %s3286 = smul.u32 16, %s25
      $region60: #{bottleneck_forward.1} parent=55 // pred_fallthru
        _
    $region56: #{bottleneck_forward.1} parent=5 // pred_fallthru
      _
    %p3287 = scmp.le.s32.totalorder 2, %s15
    // Predicated region
    $region61: #{bottleneck_forward.1} parent=5 // pred_check
      %p3288 = pneg %p3287
    $region62: #{bottleneck_forward.1} parent=5 // pred_check_branch
      %3290 = sbr.rel (%p3288) target = $region64
    $region63: #{bottleneck_forward.1} parent=5 // pred_region
      %s3291 = ssub.s32 %s15, 2
      // Predicated region
      $region65: #{bottleneck_forward.1} parent=63 // pred_check
        %p3292 = pneg %p284
      $region66: #{bottleneck_forward.1} parent=63 // pred_check_branch
        %3294 = sbr.rel (%p3292) target = $region68
      $region67: #{bottleneck_forward.1} parent=63 // pred_region
        %s3295 = smul.u32 16, %s27
        %p3296 = scmp.lt.s32.totalorder %s26, 1
        %s3297 = scalar_select %p3296, %s26, 1
        %p3298 = scmp.lt.s32.totalorder %s3295, 15
        %s3299 = scalar_select %p3298, %s3295, 15
        %s3300 = smul.addr %s3299, 2
        %s3301 = smul.addr %s3297, 32
        %s3302 = sadd.s32 %s3300, %s3301
        %s3303 = smul.addr %s3302, 8
        %s3304 = scalar_lea.vmem %s9, %s3303
      $region68: #{bottleneck_forward.1} parent=63 // pred_fallthru
        _
    $region64: #{bottleneck_forward.1} parent=5 // pred_fallthru
      _
  $region6: #{bottleneck_forward.1} parent=0 // loop_footer
    %s19 = sadd.s32 1, %s15
  $region7: #{bottleneck_forward.1} parent=0 // loop_footer_branch
    %14 = sbr.rel target = $region3
  $region8: #{bottleneck_forward.1} parent=0 // loop_exit
    _

</llo_original>
